<compile_context>
chip_gen: v7x
topology: tpu7x:2x2x1
jax: 0.10.0
libtpu: 0.0.40
codegen_flags: <defaults>
</compile_context>

<pallas_src>
import jax
import jax.numpy as jnp
from jax import lax
from jax.experimental import pallas as pl
from jax.experimental.pallas import tpu as pltpu

# ----------------------------- constants ------------------------------------
IMG_SCALE = 1.0 / 255.0
IMG_MEAN = jnp.array([0.485, 0.456, 0.406], jnp.float32)
IMG_STD = jnp.array([0.229, 0.224, 0.225], jnp.float32)
TAM_OS = 8
DILATE_RAD = 1          # deterministic dilation radius -> 3x3 max-pool
ATT_THRES = 0.3
LABEL_SMOOTH = 0.2
AGG_WINDOW = 3
L1_EPS = 1e-6

SUMS_ROWS = 8           # per-frame scalar sums live in an (8,128) lane-aligned tile
SUMS_LANES = 128
NSUM = 5                # [num_alpha, num_comp, num_grad, den, num_dtSSD]


def _compiler_params(dimension_semantics, block_bytes=0):
    # VMEM limit from the actual (double-buffered) block footprint + headroom,
    # clamped to the generation's physical capacity.
    try:
        cap = pltpu.get_tpu_info().vmem_capacity_bytes
    except Exception:
        cap = 64 * 1024 * 1024
    need = int(block_bytes) * 2 + (4 << 20)
    limit = max(16 << 20, min(need, int(cap) * 7 // 8))
    return pltpu.CompilerParams(dimension_semantics=dimension_semantics,
                                vmem_limit_bytes=limit)


def _strip_height(h):
    # H-strip so the double-buffered loss blocks stay well under VMEM on v7x.
    # TODO(synk): per-generation tuning (128 rows v7x, up to 256 on v5e/v6e).
    for sh in (128, 64, 32, 16, 8):
        if h % sh == 0 and sh < h:
            return sh
    return h


# ----------------------------- Pallas kernels -------------------------------
def _preprocess_kernel(a_ref, fg_ref, bg_ref, mean_ref, istd_ref, w_ref, b_ref,
                       sgt_ref, trimap_ref, tris_ref, pred_ref,
                       sfg_ref, sbg_ref, simg_ref):
    # Fused: scale, flip, composite, trimask + dilation, tris, normalize, head.
    H, W = a_ref.shape
    gt = a_ref[...] * IMG_SCALE                       # (H, W) unclipped scaled alpha
    sgt_ref[...] = gt
    gtc = jnp.clip(gt, 0.0, 1.0)                      # eps = 0 clamp (make_trimap)
    tm = jnp.logical_and(gtc > 0.0, gtc < 1.0).astype(jnp.float32)

    # 3x3 max-pool dilation (stride 1, pad rad) via XLU rolls + border masks.
    row = lax.broadcasted_iota(jnp.int32, (H, W), 0)
    col = lax.broadcasted_iota(jnp.int32, (H, W), 1)

    def shifted(x, dy, dx):
        y = x
        if dy != 0:
            y = pltpu.roll(y, shift=(-dy) % H, axis=0)
            ok = jnp.logical_and(row + dy >= 0, row + dy <= H - 1)
            y = jnp.where(ok, y, 0.0)
        if dx != 0:
            y = pltpu.roll(y, shift=(-dx) % W, axis=1)
            ok = jnp.logical_and(col + dx >= 0, col + dx <= W - 1)
            y = jnp.where(ok, y, 0.0)
        return y

    dil = tm
    for dy in range(-DILATE_RAD, DILATE_RAD + 1):
        for dx in range(-DILATE_RAD, DILATE_RAD + 1):
            if dy == 0 and dx == 0:
                continue
            dil = jnp.maximum(dil, shifted(tm, dy, dx))
    trimap_ref[...] = dil
    tris = jnp.where(dil > 0.5, jnp.float32(128.0 * IMG_SCALE), gtc)
    tris_ref[...] = tris

    # Per channel: flip, scale, composite, normalize fed straight into the head.
    C = fg_ref.shape[0]
    s = tris * w_ref[C] + b_ref[0]
    for c in range(C):                                # static unrolled, C == 3
        src = C - 1 - c                               # fg.flip([2]) fused here
        f = fg_ref[src] * IMG_SCALE
        bgc = bg_ref[src] * IMG_SCALE
        simg = f * gt + bgc * (1.0 - gt)
        sfg_ref[c] = f.astype(sfg_ref.dtype)
        sbg_ref[c] = bgc.astype(sbg_ref.dtype)
        simg_ref[c] = simg.astype(simg_ref.dtype)
        s = s + (simg - mean_ref[c]) * istd_ref[c] * w_ref[c]
    pred_ref[...] = jax.nn.sigmoid(s)                 # surrogate VMN head


def _frame_loss_kernel(pred_ref, gt_ref, m_ref, fg_ref, bg_ref, img_ref,
                       predn_ref, gtn_ref, mn_ref,
                       alpha_ref, comp_ref, sums_ref,
                       acc_ref, carry_ref):
    # Fused refine/composite + alpha/comp/grad L1 + dtSSD partial sums, over
    # an H-strip grid with a carried-row halo for the vertical gradient.
    t = pl.program_id(0)
    b = pl.program_id(1)
    s = pl.program_id(2)
    nt = pl.num_programs(0)
    nb = pl.num_programs(1)
    ns = pl.num_programs(2)
    first = jnp.logical_and(b == 0, s == 0)
    last = jnp.logical_and(b == nb - 1, s == ns - 1)
    valid = jnp.logical_and(t >= 1, t <= nt - 2).astype(jnp.float32)
    valid_dt = jnp.logical_and(t >= 1, t <= nt - 3).astype(jnp.float32)

    @pl.when(first)
    def _():
        for j in range(NSUM):
            acc_ref[j] = jnp.float32(0.0)

    gt = gt_ref[...]                                  # (SH, W) f32
    m = m_ref[...]
    refine = jnp.where(m > 0.5, pred_ref[...], gt)

    fg = fg_ref[...].astype(jnp.float32)              # (C, SH, W)
    bg = bg_ref[...].astype(jnp.float32)
    img = img_ref[...].astype(jnp.float32)
    comp = fg * refine + bg * (1.0 - refine)

    alpha_ref[...] = (jnp.clip(refine, 0.0, 1.0) * valid).astype(alpha_ref.dtype)
    comp_ref[...] = (jnp.clip(comp, 0.0, 1.0) * valid).astype(comp_ref.dtype)

    num_a = jnp.sum(jnp.abs(refine - gt) * m)
    num_c = jnp.sum(jnp.abs(comp - img) * m)

    sh, w = gt.shape
    row = lax.broadcasted_iota(jnp.int32, (sh, w), 0)
    col = lax.broadcasted_iota(jnp.int32, (sh, w), 1)
    vx = (col < w - 1).astype(jnp.float32)
    vy = (row < sh - 1).astype(jnp.float32)
    dpx = pltpu.roll(refine, shift=w - 1, axis=1) - refine
    dgx = pltpu.roll(gt, shift=w - 1, axis=1) - gt
    dpy = pltpu.roll(refine, shift=sh - 1, axis=0) - refine
    dgy = pltpu.roll(gt, shift=sh - 1, axis=0) - gt
    num_g = (jnp.sum(jnp.abs(dpx - dgx) * m * vx)
             + jnp.sum(jnp.abs(dpy - dgy) * m * vy))
    den = jnp.sum(m)

    # dtSSD temporal term: recompute next-frame refine locally (clipped, per torch).
    gtn = gtn_ref[...]
    refn = jnp.where(mn_ref[...] > 0.5, predn_ref[...], gtn)
    num_dt = jnp.sum(jnp.abs((jnp.clip(refine, 0.0, 1.0)
                              - jnp.clip(refn, 0.0, 1.0)) - (gt - gtn)) * m)

    acc_ref[0] = acc_ref[0] + num_a * valid
    acc_ref[1] = acc_ref[1] + num_c * valid
    acc_ref[2] = acc_ref[2] + num_g * valid
    acc_ref[3] = acc_ref[3] + den * valid
    acc_ref[4] = acc_ref[4] + num_dt * valid_dt

    # Vertical-gradient boundary term between strip s-1 and s (carried last row).
    @pl.when(s > 0)
    def _():
        bdy = jnp.sum(jnp.abs((refine[0:1, :] - carry_ref[0:1, :])
                              - (gt[0:1, :] - carry_ref[1:2, :]))
                      * carry_ref[2:3, :])
        acc_ref[2] = acc_ref[2] + bdy * valid

    carry_ref[0:1, :] = refine[sh - 1:sh, :]
    carry_ref[1:2, :] = gt[sh - 1:sh, :]
    carry_ref[2:3, :] = m[sh - 1:sh, :]

    @pl.when(last)
    def _():
        r8 = lax.broadcasted_iota(jnp.int32, (SUMS_ROWS, SUMS_LANES), 0)
        blk = jnp.zeros((SUMS_ROWS, SUMS_LANES), jnp.float32)
        for j in range(NSUM):
            blk = jnp.where(r8 == j, acc_ref[j], blk)
        sums_ref[...] = blk


def _att_loss_kernel(gpad_ref, m_ref, attb_ref, attf_ref, sums_ref):
    # Masked BCE-with-logits over 3x3 unfold neighborhoods of the pooled gt.
    # gpad_ref holds all T padded pooled frames and stays VMEM-resident per b.
    t = pl.program_id(1)
    Hs, Ws = m_ref.shape
    K = attb_ref.shape[0]
    win = AGG_WINDOW
    m = m_ref[...]
    bpad = gpad_ref[t]            # previous frame (Hs+2, Ws+2)
    cpad = gpad_ref[t + 1]        # center frame
    fpad = gpad_ref[t + 2]        # next frame
    cgt = cpad[1:1 + Hs, 1:1 + Ws]
    bce = jnp.zeros((Hs, Ws), jnp.float32)
    for k in range(K):            # static unrolled, K == 9
        ki, kj = k // win, k % win
        nb = bpad[ki:ki + Hs, kj:kj + Ws]
        nf = fpad[ki:ki + Hs, kj:kj + Ws]
        dcb = (jnp.abs(cgt - nb) < ATT_THRES).astype(jnp.float32) * (1.0 - LABEL_SMOOTH)
        dcf = (jnp.abs(cgt - nf) < ATT_THRES).astype(jnp.float32) * (1.0 - LABEL_SMOOTH)
        xb = attb_ref[k]
        xf = attf_ref[k]
        bce = bce + (jnp.maximum(xb, 0.0) - xb * dcb + jnp.log1p(jnp.exp(-jnp.abs(xb))))
        bce = bce + (jnp.maximum(xf, 0.0) - xf * dcf + jnp.log1p(jnp.exp(-jnp.abs(xf))))
    num = jnp.sum(bce * m)        # mask multiply hoisted out of the k-loop
    cnt = jnp.sum(m) * float(K)
    r8 = lax.broadcasted_iota(jnp.int32, (SUMS_ROWS, SUMS_LANES), 0)
    sums_ref[...] = jnp.where(r8 == 0, num, jnp.where(r8 == 1, cnt, 0.0))


# ----------------------------- kernel wrappers -------------------------------
def preprocess_and_predict(a, fg, bg):
    B, T, _, H, W = a.shape
    C = fg.shape[2]
    BT = B * T
    a4 = a.reshape(BT, 1, H, W)
    fg4 = fg.reshape(BT, C, H, W)
    bg4 = bg.reshape(BT, C, H, W)
    istd = (1.0 / IMG_STD).astype(jnp.float32)
    w = (jnp.arange(C + 1, dtype=jnp.float32) - 1.5) * 0.25   # surrogate head weights
    bias = jnp.full((1,), 0.1, jnp.float32)

    spec1 = pl.BlockSpec((None, None, H, W), lambda i: (i, 0, 0, 0))
    specC = pl.BlockSpec((None, C, H, W), lambda i: (i, 0, 0, 0))
    smem = pl.BlockSpec(memory_space=pltpu.MemorySpace.SMEM)

    # TODO(synk): strip-tile this kernel (with a 1-row dilation halo) for frames
    # much larger than ~1k x 1k so the per-frame block stays within VMEM.
    block_bytes = ((1 + 2 * C) * H * W * 4            # f32 inputs
                   + 4 * H * W * 4                    # f32 single-channel outputs
                   + 3 * C * H * W * 2)               # bf16 3-channel outputs

    outs = pl.pallas_call(
        _preprocess_kernel,
        grid=(BT,),
        in_specs=[spec1, specC, specC, smem, smem, smem, smem],
        out_specs=(spec1, spec1, spec1, spec1, specC, specC, specC),
        out_shape=(
            jax.ShapeDtypeStruct((BT, 1, H, W), jnp.float32),   # scaled_gt
            jax.ShapeDtypeStruct((BT, 1, H, W), jnp.float32),   # dilated trimask
            jax.ShapeDtypeStruct((BT, 1, H, W), jnp.float32),   # tris
            jax.ShapeDtypeStruct((BT, 1, H, W), jnp.float32),   # pred (surrogate NET)
            jax.ShapeDtypeStruct((BT, C, H, W), jnp.bfloat16),  # scaled_fg
            jax.ShapeDtypeStruct((BT, C, H, W), jnp.bfloat16),  # scaled_bg
            jax.ShapeDtypeStruct((BT, C, H, W), jnp.bfloat16),  # scaled_img
        ),
        compiler_params=_compiler_params(("parallel",), block_bytes),
    )(a4, fg4, bg4, IMG_MEAN, istd, w, bias)

    sgt, trimap, tris, pred, sfg, sbg, simg = outs
    s1 = (B, T, 1, H, W)
    sC = (B, T, C, H, W)
    return (sgt.reshape(s1), trimap.reshape(s1), tris.reshape(s1),
            pred.reshape(s1), sfg.reshape(sC), sbg.reshape(sC), simg.reshape(sC))


def fused_frame_losses(preds, trimaps, scaled_gts, scaled_fgs, scaled_bgs,
                       scaled_imgs):
    B, T, _, H, W = preds.shape
    C = scaled_fgs.shape[2]
    SH = _strip_height(H)
    S = H // SH
    tmax = T - 1

    spec1 = pl.BlockSpec((None, None, None, SH, W), lambda t, b, s: (b, t, 0, s, 0))
    spec1n = pl.BlockSpec((None, None, None, SH, W),
                          lambda t, b, s: (b, jnp.minimum(t + 1, tmax), 0, s, 0))
    specC = pl.BlockSpec((None, None, C, SH, W), lambda t, b, s: (b, t, 0, s, 0))
    sums_spec = pl.BlockSpec((None, SUMS_ROWS, SUMS_LANES), lambda t, b, s: (t, 0, 0))

    block_bytes = (6 * SH * W * 4 + 3 * C * SH * W * 2      # inputs
                   + SH * W * 4 + C * SH * W * 2            # alpha f32 + comp bf16
                   + SUMS_ROWS * SUMS_LANES * 4 + 8 * W * 4)

    alphas, comps, sums = pl.pallas_call(
        _frame_loss_kernel,
        grid=(T, B, S),
        in_specs=[spec1, spec1, spec1, specC, specC, specC, spec1n, spec1n, spec1n],
        out_specs=(spec1, specC, sums_spec),
        out_shape=(
            jax.ShapeDtypeStruct((B, T, 1, H, W), jnp.float32),
            jax.ShapeDtypeStruct((B, T, C, H, W), jnp.bfloat16),
            jax.ShapeDtypeStruct((T, SUMS_ROWS, SUMS_LANES), jnp.float32),
        ),
        scratch_shapes=[pltpu.SMEM((8,), jnp.float32),
                        pltpu.VMEM((8, W), jnp.float32)],
        compiler_params=_compiler_params(("parallel", "arbitrary", "arbitrary"),
                                         block_bytes),
    )(preds, scaled_gts, trimaps, scaled_fgs, scaled_bgs, scaled_imgs,
      preds, scaled_gts, trimaps)

    den = sums[1:T - 1, 3, 0]
    loss1 = jnp.mean(sums[1:T - 1, 0, 0] / (den + L1_EPS))
    loss2 = jnp.mean(sums[1:T - 1, 1, 0] / (float(C) * den + L1_EPS))
    loss3 = jnp.mean(sums[1:T - 1, 2, 0] / (den + L1_EPS))
    if T >= 5:
        L_dt = jnp.mean(sums[1:T - 2, 4, 0] / (sums[1:T - 2, 3, 0] + L1_EPS))
    else:
        L_dt = jnp.zeros((), jnp.float32)
    return loss1, loss2, loss3, L_dt, alphas, comps


def avg_pool_os(x, os_=TAM_OS):
    *lead, H, W = x.shape
    x = x.reshape(*lead, H // os_, os_, W // os_, os_)
    return x.mean(axis=(-3, -1))


def attention_loss(scaled_gts, trimaps, attb_all, attf_all):
    B, T, _, H, W = scaled_gts.shape
    Hs, Ws = H // TAM_OS, W // TAM_OS
    K = attb_all.shape[2]
    Tat = T - 2

    gts_small = avg_pool_os(scaled_gts[:, :, 0])                       # (B, T, Hs, Ws)
    gts_pad = jnp.pad(gts_small, ((0, 0), (0, 0), (1, 1), (1, 1)))
    mask_small = (avg_pool_os(trimaps[:, :, 0]) > 0.0).astype(jnp.float32)

    gpad_spec = pl.BlockSpec((None, T, Hs + 2, Ws + 2), lambda b, t: (b, 0, 0, 0))
    m_spec = pl.BlockSpec((None, None, Hs, Ws), lambda b, t: (b, t + 1, 0, 0))
    att_spec = pl.BlockSpec((None, None, K, Hs, Ws), lambda b, t: (b, t + 1, 0, 0, 0))
    sums_spec = pl.BlockSpec((None, None, SUMS_ROWS, SUMS_LANES),
                             lambda b, t: (b, t, 0, 0))

    block_bytes = (T * (Hs + 2) * (Ws + 2) * 4 + Hs * Ws * 4
                   + 2 * K * Hs * Ws * 4 + SUMS_ROWS * SUMS_LANES * 4)

    # TODO(synk): at very large resolutions, fold K into the lane axis of the
    # pooled attention maps for fully lane-dense loads (maps are 1/64 scale).
    sums = pl.pallas_call(
        _att_loss_kernel,
        grid=(B, Tat),
        in_specs=[gpad_spec, m_spec, att_spec, att_spec],
        out_specs=sums_spec,
        out_shape=jax.ShapeDtypeStruct((B, Tat, SUMS_ROWS, SUMS_LANES), jnp.float32),
        compiler_params=_compiler_params(("parallel", "arbitrary"), block_bytes),
    )(gts_pad, mask_small, attb_all, attf_all)

    num = jnp.sum(sums[:, :, 0, 0], axis=0)           # (Tat,) per-frame, batch-summed
    cnt = jnp.sum(sums[:, :, 1, 0], axis=0)
    # (BCE_b + BCE_f)/2 per frame, mean over frames; empty-mask frames contribute 0.
    return jnp.mean(num / (2.0 * jnp.maximum(cnt, 1.0)))


# ----------------------------- full forward ----------------------------------
def full_model_vmd_forward(a, fg, bg, key):
    B, T, _, H, W = a.shape

    # ---- fused preprocess + trimap dilation + surrogate VMN head ----
    (scaled_gts, trimaps, tris, preds, scaled_fgs, scaled_bgs,
     scaled_imgs) = preprocess_and_predict(a, fg, bg)

    # ---- stub temporal-attention logits: one RNG draw for all frames ----
    Hs, Ws = H // TAM_OS, W // TAM_OS
    K = AGG_WINDOW * AGG_WINDOW
    k1, k2 = jax.random.split(key)
    attb_all = jax.random.normal(k1, (B, T, K, Hs, Ws), jnp.float32)
    attf_all = jax.random.normal(k2, (B, T, K, Hs, Ws), jnp.float32)

    # ---- fused refine / composite / alpha-comp-grad / dtSSD losses ----
    loss1, loss2, loss3, L_dt, alphas, comps = fused_frame_losses(
        preds, trimaps, scaled_gts, scaled_fgs, scaled_bgs, scaled_imgs)
    Fs, Bs = scaled_fgs, scaled_bgs

    # ---- temporal attention BCE loss ----
    L_att = attention_loss(scaled_gts, trimaps, attb_all, attf_all)
    if T < 5:
        L_dt = jnp.zeros_like(L_att)

    tris_vis = tris   # TRIMAP_CHANNEL == 1 branch
    return [loss1, loss2, loss3, L_dt, L_att, scaled_imgs, tris_vis,
            alphas, comps, scaled_gts, Fs, Bs]


# ----------------------------- main ------------------------------------------
if __name__ == "__main__":
    key = jax.random.PRNGKey(0)
    ka, kf, kb, knet = jax.random.split(key, 4)
    B, T, H, W = 2, 5, 16, 16
    a = jax.random.uniform(ka, (B, T, 1, H, W), jnp.float32, 0.0, 255.0)
    fg = jax.random.uniform(kf, (B, T, 3, H, W), jnp.float32, 0.0, 255.0)
    bg = jax.random.uniform(kb, (B, T, 3, H, W), jnp.float32, 0.0, 255.0)

    outs = jax.jit(full_model_vmd_forward)(a, fg, bg, knet)
    jax.block_until_ready(outs)
    print("KERNEL_OK")
</pallas_src>

<mosaic_0001>
module attributes {stable_mosaic.version = 11 : i64} {
  func.func @_frame_loss_kernel(%arg0: i32, %arg1: i32, %arg2: i32, %arg3: memref<1x1x1x8x16xf32, #tpu.memory_space<vmem>>, %arg4: memref<1x1x1x8x16xf32, #tpu.memory_space<vmem>>, %arg5: memref<1x1x1x8x16xf32, #tpu.memory_space<vmem>>, %arg6: memref<1x1x3x8x16xbf16, #tpu.memory_space<vmem>>, %arg7: memref<1x1x3x8x16xbf16, #tpu.memory_space<vmem>>, %arg8: memref<1x1x3x8x16xbf16, #tpu.memory_space<vmem>>, %arg9: memref<1x1x1x8x16xf32, #tpu.memory_space<vmem>>, %arg10: memref<1x1x1x8x16xf32, #tpu.memory_space<vmem>>, %arg11: memref<1x1x1x8x16xf32, #tpu.memory_space<vmem>>, %arg12: memref<1x1x1x8x16xf32, #tpu.memory_space<vmem>>, %arg13: memref<1x1x3x8x16xbf16, #tpu.memory_space<vmem>>, %arg14: memref<1x8x128xf32, #tpu.memory_space<vmem>>, %arg15: memref<8xf32, #tpu.memory_space<smem>>, %arg16: memref<8x16xf32, #tpu.memory_space<vmem>>) attributes {dimension_semantics = [#tpu.dimension_semantics<parallel>, #tpu.dimension_semantics<arbitrary>, #tpu.dimension_semantics<arbitrary>], iteration_bounds = array<i64: 5, 2, 2>, scalar_prefetch = 0 : i64, scratch_operands = 2 : i64, tpu.core_type = #tpu.core_type<tc>, window_params = [{transform_indices = @transform_0, window_bounds = array<i64: 1, 1, 1, 8, 16>}, {transform_indices = @transform_1, window_bounds = array<i64: 1, 1, 1, 8, 16>}, {transform_indices = @transform_2, window_bounds = array<i64: 1, 1, 1, 8, 16>}, {transform_indices = @transform_3, window_bounds = array<i64: 1, 1, 3, 8, 16>}, {transform_indices = @transform_4, window_bounds = array<i64: 1, 1, 3, 8, 16>}, {transform_indices = @transform_5, window_bounds = array<i64: 1, 1, 3, 8, 16>}, {transform_indices = @transform_6, window_bounds = array<i64: 1, 1, 1, 8, 16>}, {transform_indices = @transform_7, window_bounds = array<i64: 1, 1, 1, 8, 16>}, {transform_indices = @transform_8, window_bounds = array<i64: 1, 1, 1, 8, 16>}, {transform_indices = @transform_9, window_bounds = array<i64: 1, 1, 1, 8, 16>}, {transform_indices = @transform_10, window_bounds = array<i64: 1, 1, 3, 8, 16>}, {transform_indices = @transform_11, window_bounds = array<i64: 1, 8, 128>}]} {
    %c0_i32 = arith.constant 0 : i32
    %0 = arith.cmpi eq, %arg1, %c0_i32 : i32
    %c0_i32_0 = arith.constant 0 : i32
    %1 = arith.cmpi eq, %arg2, %c0_i32_0 : i32
    %2 = arith.andi %0, %1 : i1
    %c1_i32 = arith.constant 1 : i32
    %3 = arith.cmpi eq, %arg1, %c1_i32 : i32
    %c1_i32_1 = arith.constant 1 : i32
    %4 = arith.cmpi eq, %arg2, %c1_i32_1 : i32
    %5 = arith.andi %3, %4 : i1
    %c1_i32_2 = arith.constant 1 : i32
    %6 = arith.cmpi sge, %arg0, %c1_i32_2 : i32
    %c3_i32 = arith.constant 3 : i32
    %7 = arith.cmpi sle, %arg0, %c3_i32 : i32
    %8 = arith.andi %6, %7 : i1
    %9 = arith.extui %8 : i1 to i32
    %10 = arith.sitofp %9 : i32 to f32
    %c1_i32_3 = arith.constant 1 : i32
    %11 = arith.cmpi sge, %arg0, %c1_i32_3 : i32
    %c2_i32 = arith.constant 2 : i32
    %12 = arith.cmpi sle, %arg0, %c2_i32 : i32
    %13 = arith.andi %11, %12 : i1
    %14 = arith.extui %13 : i1 to i32
    %15 = arith.sitofp %14 : i32 to f32
    %16 = arith.extui %2 : i1 to i32
    %c0_i32_4 = arith.constant 0 : i32
    %17 = arith.cmpi ne, %16, %c0_i32_4 : i32
    scf.if %17 {
      %cst_94 = arith.constant 0.000000e+00 : f32
      %c0_95 = arith.constant 0 : index
      %176 = memref.load %arg15[%c0_95] : memref<8xf32, #tpu.memory_space<smem>>
      memref.store %cst_94, %arg15[%c0_95] : memref<8xf32, #tpu.memory_space<smem>>
      %cst_96 = arith.constant 0.000000e+00 : f32
      %c1_97 = arith.constant 1 : index
      %177 = memref.load %arg15[%c1_97] : memref<8xf32, #tpu.memory_space<smem>>
      memref.store %cst_96, %arg15[%c1_97] : memref<8xf32, #tpu.memory_space<smem>>
      %cst_98 = arith.constant 0.000000e+00 : f32
      %c2_99 = arith.constant 2 : index
      %178 = memref.load %arg15[%c2_99] : memref<8xf32, #tpu.memory_space<smem>>
      memref.store %cst_98, %arg15[%c2_99] : memref<8xf32, #tpu.memory_space<smem>>
      %cst_100 = arith.constant 0.000000e+00 : f32
      %c3_101 = arith.constant 3 : index
      %179 = memref.load %arg15[%c3_101] : memref<8xf32, #tpu.memory_space<smem>>
      memref.store %cst_100, %arg15[%c3_101] : memref<8xf32, #tpu.memory_space<smem>>
      %cst_102 = arith.constant 0.000000e+00 : f32
      %c4_103 = arith.constant 4 : index
      %180 = memref.load %arg15[%c4_103] : memref<8xf32, #tpu.memory_space<smem>>
      memref.store %cst_102, %arg15[%c4_103] : memref<8xf32, #tpu.memory_space<smem>>
    } else {
    }
    %c0 = arith.constant 0 : index
    %c0_5 = arith.constant 0 : index
    %c0_6 = arith.constant 0 : index
    %c0_7 = arith.constant 0 : index
    %c0_8 = arith.constant 0 : index
    %18 = vector.load %arg4[%c0, %c0_5, %c0_6, %c0_7, %c0_8] : memref<1x1x1x8x16xf32, #tpu.memory_space<vmem>>, vector<1x1x1x8x16xf32>
    %19 = vector.shape_cast %18 : vector<1x1x1x8x16xf32> to vector<8x16xf32>
    %c0_9 = arith.constant 0 : index
    %c0_10 = arith.constant 0 : index
    %c0_11 = arith.constant 0 : index
    %c0_12 = arith.constant 0 : index
    %c0_13 = arith.constant 0 : index
    %20 = vector.load %arg5[%c0_9, %c0_10, %c0_11, %c0_12, %c0_13] : memref<1x1x1x8x16xf32, #tpu.memory_space<vmem>>, vector<1x1x1x8x16xf32>
    %21 = vector.shape_cast %20 : vector<1x1x1x8x16xf32> to vector<8x16xf32>
    %cst = arith.constant 5.000000e-01 : f32
    %22 = vector.broadcast %cst : f32 to vector<8x16xf32>
    %23 = arith.cmpf ogt, %21, %22 : vector<8x16xf32>
    %c0_14 = arith.constant 0 : index
    %c0_15 = arith.constant 0 : index
    %c0_16 = arith.constant 0 : index
    %c0_17 = arith.constant 0 : index
    %c0_18 = arith.constant 0 : index
    %24 = vector.load %arg3[%c0_14, %c0_15, %c0_16, %c0_17, %c0_18] : memref<1x1x1x8x16xf32, #tpu.memory_space<vmem>>, vector<1x1x1x8x16xf32>
    %25 = vector.shape_cast %24 : vector<1x1x1x8x16xf32> to vector<8x16xf32>
    %26 = arith.select %23, %25, %19 : vector<8x16xi1>, vector<8x16xf32>
    %c0_19 = arith.constant 0 : index
    %c0_20 = arith.constant 0 : index
    %c0_21 = arith.constant 0 : index
    %c0_22 = arith.constant 0 : index
    %c0_23 = arith.constant 0 : index
    %27 = vector.load %arg6[%c0_19, %c0_20, %c0_21, %c0_22, %c0_23] : memref<1x1x3x8x16xbf16, #tpu.memory_space<vmem>>, vector<1x1x3x8x16xbf16>
    %28 = vector.shape_cast %27 : vector<1x1x3x8x16xbf16> to vector<3x8x16xbf16>
    %29 = arith.extf %28 : vector<3x8x16xbf16> to vector<3x8x16xf32>
    %c0_24 = arith.constant 0 : index
    %c0_25 = arith.constant 0 : index
    %c0_26 = arith.constant 0 : index
    %c0_27 = arith.constant 0 : index
    %c0_28 = arith.constant 0 : index
    %30 = vector.load %arg7[%c0_24, %c0_25, %c0_26, %c0_27, %c0_28] : memref<1x1x3x8x16xbf16, #tpu.memory_space<vmem>>, vector<1x1x3x8x16xbf16>
    %31 = vector.shape_cast %30 : vector<1x1x3x8x16xbf16> to vector<3x8x16xbf16>
    %32 = arith.extf %31 : vector<3x8x16xbf16> to vector<3x8x16xf32>
    %c0_29 = arith.constant 0 : index
    %c0_30 = arith.constant 0 : index
    %c0_31 = arith.constant 0 : index
    %c0_32 = arith.constant 0 : index
    %c0_33 = arith.constant 0 : index
    %33 = vector.load %arg8[%c0_29, %c0_30, %c0_31, %c0_32, %c0_33] : memref<1x1x3x8x16xbf16, #tpu.memory_space<vmem>>, vector<1x1x3x8x16xbf16>
    %34 = vector.shape_cast %33 : vector<1x1x3x8x16xbf16> to vector<3x8x16xbf16>
    %35 = arith.extf %34 : vector<3x8x16xbf16> to vector<3x8x16xf32>
    %36 = vector.shape_cast %26 : vector<8x16xf32> to vector<1x8x16xf32>
    %37 = vector.broadcast %36 : vector<1x8x16xf32> to vector<3x8x16xf32>
    %38 = arith.mulf %29, %37 : vector<3x8x16xf32>
    %cst_34 = arith.constant 1.000000e+00 : f32
    %39 = vector.broadcast %cst_34 : f32 to vector<8x16xf32>
    %40 = arith.subf %39, %26 : vector<8x16xf32>
    %41 = vector.shape_cast %40 : vector<8x16xf32> to vector<1x8x16xf32>
    %42 = vector.broadcast %41 : vector<1x8x16xf32> to vector<3x8x16xf32>
    %43 = arith.mulf %32, %42 : vector<3x8x16xf32>
    %44 = arith.addf %38, %43 : vector<3x8x16xf32>
    %cst_35 = arith.constant 0.000000e+00 : f32
    %cst_36 = arith.constant 1.000000e+00 : f32
    %45 = vector.broadcast %cst_35 : f32 to vector<8x16xf32>
    %46 = arith.maximumf %45, %26 : vector<8x16xf32>
    %47 = vector.broadcast %cst_36 : f32 to vector<8x16xf32>
    %48 = arith.minimumf %47, %46 : vector<8x16xf32>
    %49 = vector.broadcast %10 : f32 to vector<8x16xf32>
    %50 = arith.mulf %48, %49 : vector<8x16xf32>
    %c0_37 = arith.constant 0 : index
    %c0_38 = arith.constant 0 : index
    %c0_39 = arith.constant 0 : index
    %c0_40 = arith.constant 0 : index
    %c0_41 = arith.constant 0 : index
    %51 = vector.load %arg12[%c0_37, %c0_38, %c0_39, %c0_40, %c0_41] : memref<1x1x1x8x16xf32, #tpu.memory_space<vmem>>, vector<1x1x1x8x16xf32>
    %52 = vector.shape_cast %51 : vector<1x1x1x8x16xf32> to vector<8x16xf32>
    %53 = vector.shape_cast %50 : vector<8x16xf32> to vector<1x1x1x8x16xf32>
    tpu.vector_store %arg12[%c0_37, %c0_38, %c0_39, %c0_40, %c0_41], %53 {strides = array<i32>} : memref<1x1x1x8x16xf32, #tpu.memory_space<vmem>>, vector<1x1x1x8x16xf32>,
    %cst_42 = arith.constant 0.000000e+00 : f32
    %cst_43 = arith.constant 1.000000e+00 : f32
    %54 = vector.broadcast %cst_42 : f32 to vector<3x8x16xf32>
    %55 = arith.maximumf %54, %44 : vector<3x8x16xf32>
    %56 = vector.broadcast %cst_43 : f32 to vector<3x8x16xf32>
    %57 = arith.minimumf %56, %55 : vector<3x8x16xf32>
    %58 = vector.broadcast %10 : f32 to vector<3x8x16xf32>
    %59 = arith.mulf %57, %58 : vector<3x8x16xf32>
    %60 = arith.truncf %59 : vector<3x8x16xf32> to vector<3x8x16xbf16>
    %c0_44 = arith.constant 0 : index
    %c0_45 = arith.constant 0 : index
    %c0_46 = arith.constant 0 : index
    %c0_47 = arith.constant 0 : index
    %c0_48 = arith.constant 0 : index
    %61 = vector.load %arg13[%c0_44, %c0_45, %c0_46, %c0_47, %c0_48] : memref<1x1x3x8x16xbf16, #tpu.memory_space<vmem>>, vector<1x1x3x8x16xbf16>
    %62 = vector.shape_cast %61 : vector<1x1x3x8x16xbf16> to vector<3x8x16xbf16>
    %63 = vector.shape_cast %60 : vector<3x8x16xbf16> to vector<1x1x3x8x16xbf16>
    tpu.vector_store %arg13[%c0_44, %c0_45, %c0_46, %c0_47, %c0_48], %63 {strides = array<i32>} : memref<1x1x3x8x16xbf16, #tpu.memory_space<vmem>>, vector<1x1x3x8x16xbf16>,
    %64 = arith.subf %26, %19 : vector<8x16xf32>
    %65 = math.absf %64 : vector<8x16xf32>
    %66 = arith.mulf %65, %21 : vector<8x16xf32>
    %67 = vector.shape_cast %66 : vector<8x16xf32> to vector<1x8x16xf32>
    %cst_49 = arith.constant dense<0.000000e+00> : vector<1xf32>
    %68 = vector.multi_reduction <add>, %67, %cst_49 [1, 2] : vector<1x8x16xf32> to vector<1xf32>
    %69 = vector.shape_cast %68 : vector<1xf32> to vector<1x1x1xf32>
    %70 = vector.extract %69[0, 0, 0] : f32 from vector<1x1x1xf32>
    %71 = arith.subf %44, %35 : vector<3x8x16xf32>
    %72 = math.absf %71 : vector<3x8x16xf32>
    %73 = vector.shape_cast %21 : vector<8x16xf32> to vector<1x8x16xf32>
    %74 = vector.broadcast %73 : vector<1x8x16xf32> to vector<3x8x16xf32>
    %75 = arith.mulf %72, %74 : vector<3x8x16xf32>
    %76 = vector.shape_cast %75 : vector<3x8x16xf32> to vector<1x3x8x16xf32>
    %cst_50 = arith.constant dense<0.000000e+00> : vector<1xf32>
    %77 = vector.multi_reduction <add>, %76, %cst_50 [1, 2, 3] : vector<1x3x8x16xf32> to vector<1xf32>
    %78 = vector.shape_cast %77 : vector<1xf32> to vector<1x1x1x1xf32>
    %79 = vector.extract %78[0, 0, 0, 0] : f32 from vector<1x1x1x1xf32>
    %80 = tpu.iota {dimensions = array<i32: 0>} : vector<8x16xi32>
    %81 = tpu.iota {dimensions = array<i32: 1>} : vector<8x16xi32>
    %c15_i32 = arith.constant 15 : i32
    %82 = vector.broadcast %c15_i32 : i32 to vector<8x16xi32>
    %83 = arith.cmpi slt, %81, %82 : vector<8x16xi32>
    %84 = arith.extui %83 : vector<8x16xi1> to vector<8x16xi32>
    %85 = arith.sitofp %84 : vector<8x16xi32> to vector<8x16xf32>
    %c7_i32 = arith.constant 7 : i32
    %86 = vector.broadcast %c7_i32 : i32 to vector<8x16xi32>
    %87 = arith.cmpi slt, %80, %86 : vector<8x16xi32>
    %88 = arith.extui %87 : vector<8x16xi1> to vector<8x16xi32>
    %89 = arith.sitofp %88 : vector<8x16xi32> to vector<8x16xf32>
    %c15_i32_51 = arith.constant 15 : i32
    %90 = tpu.dynamic_rotate %26 by %c15_i32_51 dim 1 : vector<8x16xf32>, i32 -> vector<8x16xf32>
    %91 = arith.subf %90, %26 : vector<8x16xf32>
    %c15_i32_52 = arith.constant 15 : i32
    %92 = tpu.dynamic_rotate %19 by %c15_i32_52 dim 1 : vector<8x16xf32>, i32 -> vector<8x16xf32>
    %93 = arith.subf %92, %19 : vector<8x16xf32>
    %c7_i32_53 = arith.constant 7 : i32
    %94 = tpu.dynamic_rotate %26 by %c7_i32_53 dim 0 : vector<8x16xf32>, i32 -> vector<8x16xf32>
    %95 = arith.subf %94, %26 : vector<8x16xf32>
    %c7_i32_54 = arith.constant 7 : i32
    %96 = tpu.dynamic_rotate %19 by %c7_i32_54 dim 0 : vector<8x16xf32>, i32 -> vector<8x16xf32>
    %97 = arith.subf %96, %19 : vector<8x16xf32>
    %98 = arith.subf %91, %93 : vector<8x16xf32>
    %99 = math.absf %98 : vector<8x16xf32>
    %100 = arith.mulf %99, %21 : vector<8x16xf32>
    %101 = arith.mulf %100, %85 : vector<8x16xf32>
    %102 = vector.shape_cast %101 : vector<8x16xf32> to vector<1x8x16xf32>
    %cst_55 = arith.constant dense<0.000000e+00> : vector<1xf32>
    %103 = vector.multi_reduction <add>, %102, %cst_55 [1, 2] : vector<1x8x16xf32> to vector<1xf32>
    %104 = vector.shape_cast %103 : vector<1xf32> to vector<1x1x1xf32>
    %105 = vector.extract %104[0, 0, 0] : f32 from vector<1x1x1xf32>
    %106 = arith.subf %95, %97 : vector<8x16xf32>
    %107 = math.absf %106 : vector<8x16xf32>
    %108 = arith.mulf %107, %21 : vector<8x16xf32>
    %109 = arith.mulf %108, %89 : vector<8x16xf32>
    %110 = vector.shape_cast %109 : vector<8x16xf32> to vector<1x8x16xf32>
    %cst_56 = arith.constant dense<0.000000e+00> : vector<1xf32>
    %111 = vector.multi_reduction <add>, %110, %cst_56 [1, 2] : vector<1x8x16xf32> to vector<1xf32>
    %112 = vector.shape_cast %111 : vector<1xf32> to vector<1x1x1xf32>
    %113 = vector.extract %112[0, 0, 0] : f32 from vector<1x1x1xf32>
    %114 = arith.addf %105, %113 : f32
    %115 = vector.shape_cast %21 : vector<8x16xf32> to vector<1x8x16xf32>
    %cst_57 = arith.constant dense<0.000000e+00> : vector<1xf32>
    %116 = vector.multi_reduction <add>, %115, %cst_57 [1, 2] : vector<1x8x16xf32> to vector<1xf32>
    %117 = vector.shape_cast %116 : vector<1xf32> to vector<1x1x1xf32>
    %118 = vector.extract %117[0, 0, 0] : f32 from vector<1x1x1xf32>
    %c0_58 = arith.constant 0 : index
    %c0_59 = arith.constant 0 : index
    %c0_60 = arith.constant 0 : index
    %c0_61 = arith.constant 0 : index
    %c0_62 = arith.constant 0 : index
    %119 = vector.load %arg10[%c0_58, %c0_59, %c0_60, %c0_61, %c0_62] : memref<1x1x1x8x16xf32, #tpu.memory_space<vmem>>, vector<1x1x1x8x16xf32>
    %120 = vector.shape_cast %119 : vector<1x1x1x8x16xf32> to vector<8x16xf32>
    %c0_63 = arith.constant 0 : index
    %c0_64 = arith.constant 0 : index
    %c0_65 = arith.constant 0 : index
    %c0_66 = arith.constant 0 : index
    %c0_67 = arith.constant 0 : index
    %121 = vector.load %arg11[%c0_63, %c0_64, %c0_65, %c0_66, %c0_67] : memref<1x1x1x8x16xf32, #tpu.memory_space<vmem>>, vector<1x1x1x8x16xf32>
    %122 = vector.shape_cast %121 : vector<1x1x1x8x16xf32> to vector<8x16xf32>
    %cst_68 = arith.constant 5.000000e-01 : f32
    %123 = vector.broadcast %cst_68 : f32 to vector<8x16xf32>
    %124 = arith.cmpf ogt, %122, %123 : vector<8x16xf32>
    %c0_69 = arith.constant 0 : index
    %c0_70 = arith.constant 0 : index
    %c0_71 = arith.constant 0 : index
    %c0_72 = arith.constant 0 : index
    %c0_73 = arith.constant 0 : index
    %125 = vector.load %arg9[%c0_69, %c0_70, %c0_71, %c0_72, %c0_73] : memref<1x1x1x8x16xf32, #tpu.memory_space<vmem>>, vector<1x1x1x8x16xf32>
    %126 = vector.shape_cast %125 : vector<1x1x1x8x16xf32> to vector<8x16xf32>
    %127 = arith.select %124, %126, %120 : vector<8x16xi1>, vector<8x16xf32>
    %cst_74 = arith.constant 0.000000e+00 : f32
    %cst_75 = arith.constant 1.000000e+00 : f32
    %128 = vector.broadcast %cst_74 : f32 to vector<8x16xf32>
    %129 = arith.maximumf %128, %26 : vector<8x16xf32>
    %130 = vector.broadcast %cst_75 : f32 to vector<8x16xf32>
    %131 = arith.minimumf %130, %129 : vector<8x16xf32>
    %cst_76 = arith.constant 0.000000e+00 : f32
    %cst_77 = arith.constant 1.000000e+00 : f32
    %132 = vector.broadcast %cst_76 : f32 to vector<8x16xf32>
    %133 = arith.maximumf %132, %127 : vector<8x16xf32>
    %134 = vector.broadcast %cst_77 : f32 to vector<8x16xf32>
    %135 = arith.minimumf %134, %133 : vector<8x16xf32>
    %136 = arith.subf %131, %135 : vector<8x16xf32>
    %137 = arith.subf %19, %120 : vector<8x16xf32>
    %138 = arith.subf %136, %137 : vector<8x16xf32>
    %139 = math.absf %138 : vector<8x16xf32>
    %140 = arith.mulf %139, %21 : vector<8x16xf32>
    %141 = vector.shape_cast %140 : vector<8x16xf32> to vector<1x8x16xf32>
    %cst_78 = arith.constant dense<0.000000e+00> : vector<1xf32>
    %142 = vector.multi_reduction <add>, %141, %cst_78 [1, 2] : vector<1x8x16xf32> to vector<1xf32>
    %143 = vector.shape_cast %142 : vector<1xf32> to vector<1x1x1xf32>
    %144 = vector.extract %143[0, 0, 0] : f32 from vector<1x1x1xf32>
    %c0_79 = arith.constant 0 : index
    %145 = memref.load %arg15[%c0_79] : memref<8xf32, #tpu.memory_space<smem>>
    %146 = arith.mulf %70, %10 : f32
    %147 = arith.addf %145, %146 : f32
    %c0_80 = arith.constant 0 : index
    %148 = memref.load %arg15[%c0_80] : memref<8xf32, #tpu.memory_space<smem>>
    memref.store %147, %arg15[%c0_80] : memref<8xf32, #tpu.memory_space<smem>>
    %c1 = arith.constant 1 : index
    %149 = memref.load %arg15[%c1] : memref<8xf32, #tpu.memory_space<smem>>
    %150 = arith.mulf %79, %10 : f32
    %151 = arith.addf %149, %150 : f32
    %c1_81 = arith.constant 1 : index
    %152 = memref.load %arg15[%c1_81] : memref<8xf32, #tpu.memory_space<smem>>
    memref.store %151, %arg15[%c1_81] : memref<8xf32, #tpu.memory_space<smem>>
    %c2 = arith.constant 2 : index
    %153 = memref.load %arg15[%c2] : memref<8xf32, #tpu.memory_space<smem>>
    %154 = arith.mulf %114, %10 : f32
    %155 = arith.addf %153, %154 : f32
    %c2_82 = arith.constant 2 : index
    %156 = memref.load %arg15[%c2_82] : memref<8xf32, #tpu.memory_space<smem>>
    memref.store %155, %arg15[%c2_82] : memref<8xf32, #tpu.memory_space<smem>>
    %c3 = arith.constant 3 : index
    %157 = memref.load %arg15[%c3] : memref<8xf32, #tpu.memory_space<smem>>
    %158 = arith.mulf %118, %10 : f32
    %159 = arith.addf %157, %158 : f32
    %c3_83 = arith.constant 3 : index
    %160 = memref.load %arg15[%c3_83] : memref<8xf32, #tpu.memory_space<smem>>
    memref.store %159, %arg15[%c3_83] : memref<8xf32, #tpu.memory_space<smem>>
    %c4 = arith.constant 4 : index
    %161 = memref.load %arg15[%c4] : memref<8xf32, #tpu.memory_space<smem>>
    %162 = arith.mulf %144, %15 : f32
    %163 = arith.addf %161, %162 : f32
    %c4_84 = arith.constant 4 : index
    %164 = memref.load %arg15[%c4_84] : memref<8xf32, #tpu.memory_space<smem>>
    memref.store %163, %arg15[%c4_84] : memref<8xf32, #tpu.memory_space<smem>>
    %c0_i32_85 = arith.constant 0 : i32
    %165 = arith.cmpi sgt, %arg2, %c0_i32_85 : i32
    %166 = arith.extui %165 : i1 to i32
    %c0_i32_86 = arith.constant 0 : i32
    %167 = arith.cmpi ne, %166, %c0_i32_86 : i32
    scf.if %167 {
      %176 = vector.extract_strided_slice %26 {offsets = [0, 0], sizes = [1, 16], strides = [1, 1]} : vector<8x16xf32> to vector<1x16xf32>
      %c0_94 = arith.constant 0 : index
      %c0_95 = arith.constant 0 : index
      %177 = vector.load %arg16[%c0_94, %c0_95] : memref<8x16xf32, #tpu.memory_space<vmem>>, vector<1x16xf32>
      %178 = arith.subf %176, %177 : vector<1x16xf32>
      %179 = vector.extract_strided_slice %19 {offsets = [0, 0], sizes = [1, 16], strides = [1, 1]} : vector<8x16xf32> to vector<1x16xf32>
      %c1_96 = arith.constant 1 : index
      %c0_97 = arith.constant 0 : index
      %180 = vector.load %arg16[%c1_96, %c0_97] : memref<8x16xf32, #tpu.memory_space<vmem>>, vector<1x16xf32>
      %181 = arith.subf %179, %180 : vector<1x16xf32>
      %182 = arith.subf %178, %181 : vector<1x16xf32>
      %183 = math.absf %182 : vector<1x16xf32>
      %c2_98 = arith.constant 2 : index
      %c0_99 = arith.constant 0 : index
      %184 = vector.load %arg16[%c2_98, %c0_99] : memref<8x16xf32, #tpu.memory_space<vmem>>, vector<1x16xf32>
      %185 = arith.mulf %183, %184 : vector<1x16xf32>
      %186 = vector.shape_cast %185 : vector<1x16xf32> to vector<1x1x16xf32>
      %cst_100 = arith.constant dense<0.000000e+00> : vector<1xf32>
      %187 = vector.multi_reduction <add>, %186, %cst_100 [1, 2] : vector<1x1x16xf32> to vector<1xf32>
      %188 = vector.shape_cast %187 : vector<1xf32> to vector<1x1x1xf32>
      %189 = vector.extract %188[0, 0, 0] : f32 from vector<1x1x1xf32>
      %c2_101 = arith.constant 2 : index
      %190 = memref.load %arg15[%c2_101] : memref<8xf32, #tpu.memory_space<smem>>
      %191 = arith.mulf %189, %10 : f32
      %192 = arith.addf %190, %191 : f32
      %c2_102 = arith.constant 2 : index
      %193 = memref.load %arg15[%c2_102] : memref<8xf32, #tpu.memory_space<smem>>
      memref.store %192, %arg15[%c2_102] : memref<8xf32, #tpu.memory_space<smem>>
    } else {
    }
    %168 = vector.extract_strided_slice %26 {offsets = [7, 0], sizes = [1, 16], strides = [1, 1]} : vector<8x16xf32> to vector<1x16xf32>
    %c0_87 = arith.constant 0 : index
    %c0_88 = arith.constant 0 : index
    %169 = vector.load %arg16[%c0_87, %c0_88] : memref<8x16xf32, #tpu.memory_space<vmem>>, vector<1x16xf32>
    tpu.vector_store %arg16[%c0_87, %c0_88], %168 {strides = array<i32>} : memref<8x16xf32, #tpu.memory_space<vmem>>, vector<1x16xf32>,
    %170 = vector.extract_strided_slice %19 {offsets = [7, 0], sizes = [1, 16], strides = [1, 1]} : vector<8x16xf32> to vector<1x16xf32>
    %c1_89 = arith.constant 1 : index
    %c0_90 = arith.constant 0 : index
    %171 = vector.load %arg16[%c1_89, %c0_90] : memref<8x16xf32, #tpu.memory_space<vmem>>, vector<1x16xf32>
    tpu.vector_store %arg16[%c1_89, %c0_90], %170 {strides = array<i32>} : memref<8x16xf32, #tpu.memory_space<vmem>>, vector<1x16xf32>,
    %172 = vector.extract_strided_slice %21 {offsets = [7, 0], sizes = [1, 16], strides = [1, 1]} : vector<8x16xf32> to vector<1x16xf32>
    %c2_91 = arith.constant 2 : index
    %c0_92 = arith.constant 0 : index
    %173 = vector.load %arg16[%c2_91, %c0_92] : memref<8x16xf32, #tpu.memory_space<vmem>>, vector<1x16xf32>
    tpu.vector_store %arg16[%c2_91, %c0_92], %172 {strides = array<i32>} : memref<8x16xf32, #tpu.memory_space<vmem>>, vector<1x16xf32>,
    %174 = arith.extui %5 : i1 to i32
    %c0_i32_93 = arith.constant 0 : i32
    %175 = arith.cmpi ne, %174, %c0_i32_93 : i32
    scf.if %175 {
      %176 = tpu.iota {dimensions = array<i32: 0>} : vector<8x128xi32>
      %cst_94 = arith.constant 0.000000e+00 : f32
      %177 = vector.broadcast %cst_94 : f32 to vector<8x128xf32>
      %c0_i32_95 = arith.constant 0 : i32
      %178 = vector.broadcast %c0_i32_95 : i32 to vector<8x128xi32>
      %179 = arith.cmpi eq, %176, %178 : vector<8x128xi32>
      %c0_96 = arith.constant 0 : index
      %180 = memref.load %arg15[%c0_96] : memref<8xf32, #tpu.memory_space<smem>>
      %181 = vector.broadcast %180 : f32 to vector<8x128xf32>
      %182 = arith.select %179, %181, %177 : vector<8x128xi1>, vector<8x128xf32>
      %c1_i32_97 = arith.constant 1 : i32
      %183 = vector.broadcast %c1_i32_97 : i32 to vector<8x128xi32>
      %184 = arith.cmpi eq, %176, %183 : vector<8x128xi32>
      %c1_98 = arith.constant 1 : index
      %185 = memref.load %arg15[%c1_98] : memref<8xf32, #tpu.memory_space<smem>>
      %186 = vector.broadcast %185 : f32 to vector<8x128xf32>
      %187 = arith.select %184, %186, %182 : vector<8x128xi1>, vector<8x128xf32>
      %c2_i32_99 = arith.constant 2 : i32
      %188 = vector.broadcast %c2_i32_99 : i32 to vector<8x128xi32>
      %189 = arith.cmpi eq, %176, %188 : vector<8x128xi32>
      %c2_100 = arith.constant 2 : index
      %190 = memref.load %arg15[%c2_100] : memref<8xf32, #tpu.memory_space<smem>>
      %191 = vector.broadcast %190 : f32 to vector<8x128xf32>
      %192 = arith.select %189, %191, %187 : vector<8x128xi1>, vector<8x128xf32>
      %c3_i32_101 = arith.constant 3 : i32
      %193 = vector.broadcast %c3_i32_101 : i32 to vector<8x128xi32>
      %194 = arith.cmpi eq, %176, %193 : vector<8x128xi32>
      %c3_102 = arith.constant 3 : index
      %195 = memref.load %arg15[%c3_102] : memref<8xf32, #tpu.memory_space<smem>>
      %196 = vector.broadcast %195 : f32 to vector<8x128xf32>
      %197 = arith.select %194, %196, %192 : vector<8x128xi1>, vector<8x128xf32>
      %c4_i32 = arith.constant 4 : i32
      %198 = vector.broadcast %c4_i32 : i32 to vector<8x128xi32>
      %199 = arith.cmpi eq, %176, %198 : vector<8x128xi32>
      %c4_103 = arith.constant 4 : index
      %200 = memref.load %arg15[%c4_103] : memref<8xf32, #tpu.memory_space<smem>>
      %201 = vector.broadcast %200 : f32 to vector<8x128xf32>
      %202 = arith.select %199, %201, %197 : vector<8x128xi1>, vector<8x128xf32>
      %c0_104 = arith.constant 0 : index
      %c0_105 = arith.constant 0 : index
      %c0_106 = arith.constant 0 : index
      %203 = vector.load %arg14[%c0_104, %c0_105, %c0_106] : memref<1x8x128xf32, #tpu.memory_space<vmem>>, vector<1x8x128xf32>
      %204 = vector.shape_cast %203 : vector<1x8x128xf32> to vector<8x128xf32>
      %205 = vector.shape_cast %202 : vector<8x128xf32> to vector<1x8x128xf32>
      tpu.vector_store %arg14[%c0_104, %c0_105, %c0_106], %205 {strides = array<i32>} : memref<1x8x128xf32, #tpu.memory_space<vmem>>, vector<1x8x128xf32>,
    } else {
    }
    return
  }
  func.func @transform_0(%arg0: i32, %arg1: i32, %arg2: i32) -> (i32, i32, i32, i32, i32) {
    %c0_i32 = arith.constant 0 : i32
    %c0_i32_0 = arith.constant 0 : i32
    %c0_i32_1 = arith.constant 0 : i32
    return %arg1, %arg0, %c0_i32, %arg2, %c0_i32_0 : i32, i32, i32, i32, i32
  }
  func.func @transform_1(%arg0: i32, %arg1: i32, %arg2: i32) -> (i32, i32, i32, i32, i32) {
    %c0_i32 = arith.constant 0 : i32
    %c0_i32_0 = arith.constant 0 : i32
    %c0_i32_1 = arith.constant 0 : i32
    return %arg1, %arg0, %c0_i32, %arg2, %c0_i32_0 : i32, i32, i32, i32, i32
  }
  func.func @transform_2(%arg0: i32, %arg1: i32, %arg2: i32) -> (i32, i32, i32, i32, i32) {
    %c0_i32 = arith.constant 0 : i32
    %c0_i32_0 = arith.constant 0 : i32
    %c0_i32_1 = arith.constant 0 : i32
    return %arg1, %arg0, %c0_i32, %arg2, %c0_i32_0 : i32, i32, i32, i32, i32
  }
  func.func @transform_3(%arg0: i32, %arg1: i32, %arg2: i32) -> (i32, i32, i32, i32, i32) {
    %c0_i32 = arith.constant 0 : i32
    %c0_i32_0 = arith.constant 0 : i32
    %c0_i32_1 = arith.constant 0 : i32
    return %arg1, %arg0, %c0_i32, %arg2, %c0_i32_0 : i32, i32, i32, i32, i32
  }
  func.func @transform_4(%arg0: i32, %arg1: i32, %arg2: i32) -> (i32, i32, i32, i32, i32) {
    %c0_i32 = arith.constant 0 : i32
    %c0_i32_0 = arith.constant 0 : i32
    %c0_i32_1 = arith.constant 0 : i32
    return %arg1, %arg0, %c0_i32, %arg2, %c0_i32_0 : i32, i32, i32, i32, i32
  }
  func.func @transform_5(%arg0: i32, %arg1: i32, %arg2: i32) -> (i32, i32, i32, i32, i32) {
    %c0_i32 = arith.constant 0 : i32
    %c0_i32_0 = arith.constant 0 : i32
    %c0_i32_1 = arith.constant 0 : i32
    return %arg1, %arg0, %c0_i32, %arg2, %c0_i32_0 : i32, i32, i32, i32, i32
  }
  func.func @transform_6(%arg0: i32, %arg1: i32, %arg2: i32) -> (i32, i32, i32, i32, i32) {
    %c1_i32 = arith.constant 1 : i32
    %0 = arith.addi %arg0, %c1_i32 : i32
    %c4_i32 = arith.constant 4 : i32
    %1 = arith.minsi %0, %c4_i32 : i32
    %c0_i32 = arith.constant 0 : i32
    %c0_i32_0 = arith.constant 0 : i32
    %c0_i32_1 = arith.constant 0 : i32
    return %arg1, %1, %c0_i32, %arg2, %c0_i32_0 : i32, i32, i32, i32, i32
  }
  func.func @transform_7(%arg0: i32, %arg1: i32, %arg2: i32) -> (i32, i32, i32, i32, i32) {
    %c1_i32 = arith.constant 1 : i32
    %0 = arith.addi %arg0, %c1_i32 : i32
    %c4_i32 = arith.constant 4 : i32
    %1 = arith.minsi %0, %c4_i32 : i32
    %c0_i32 = arith.constant 0 : i32
    %c0_i32_0 = arith.constant 0 : i32
    %c0_i32_1 = arith.constant 0 : i32
    return %arg1, %1, %c0_i32, %arg2, %c0_i32_0 : i32, i32, i32, i32, i32
  }
  func.func @transform_8(%arg0: i32, %arg1: i32, %arg2: i32) -> (i32, i32, i32, i32, i32) {
    %c1_i32 = arith.constant 1 : i32
    %0 = arith.addi %arg0, %c1_i32 : i32
    %c4_i32 = arith.constant 4 : i32
    %1 = arith.minsi %0, %c4_i32 : i32
    %c0_i32 = arith.constant 0 : i32
    %c0_i32_0 = arith.constant 0 : i32
    %c0_i32_1 = arith.constant 0 : i32
    return %arg1, %1, %c0_i32, %arg2, %c0_i32_0 : i32, i32, i32, i32, i32
  }
  func.func @transform_9(%arg0: i32, %arg1: i32, %arg2: i32) -> (i32, i32, i32, i32, i32) {
    %c0_i32 = arith.constant 0 : i32
    %c0_i32_0 = arith.constant 0 : i32
    %c0_i32_1 = arith.constant 0 : i32
    return %arg1, %arg0, %c0_i32, %arg2, %c0_i32_0 : i32, i32, i32, i32, i32
  }
  func.func @transform_10(%arg0: i32, %arg1: i32, %arg2: i32) -> (i32, i32, i32, i32, i32) {
    %c0_i32 = arith.constant 0 : i32
    %c0_i32_0 = arith.constant 0 : i32
    %c0_i32_1 = arith.constant 0 : i32
    return %arg1, %arg0, %c0_i32, %arg2, %c0_i32_0 : i32, i32, i32, i32, i32
  }
  func.func @transform_11(%arg0: i32, %arg1: i32, %arg2: i32) -> (i32, i32, i32) {
    %c0_i32 = arith.constant 0 : i32
    %c0_i32_0 = arith.constant 0 : i32
    %c0_i32_1 = arith.constant 0 : i32
    return %arg0, %c0_i32, %c0_i32_0 : i32, i32, i32
  }
}

module attributes {stable_mosaic.version = 11 : i64} {
  func.func @_preprocess_kernel(%arg0: i32, %arg1: memref<1x1x16x16xf32, #tpu.memory_space<vmem>>, %arg2: memref<1x3x16x16xf32, #tpu.memory_space<vmem>>, %arg3: memref<1x3x16x16xf32, #tpu.memory_space<vmem>>, %arg4: memref<3xf32, #tpu.memory_space<smem>>, %arg5: memref<3xf32, #tpu.memory_space<smem>>, %arg6: memref<4xf32, #tpu.memory_space<smem>>, %arg7: memref<1xf32, #tpu.memory_space<smem>>, %arg8: memref<1x1x16x16xf32, #tpu.memory_space<vmem>>, %arg9: memref<1x1x16x16xf32, #tpu.memory_space<vmem>>, %arg10: memref<1x1x16x16xf32, #tpu.memory_space<vmem>>, %arg11: memref<1x1x16x16xf32, #tpu.memory_space<vmem>>, %arg12: memref<1x3x16x16xbf16, #tpu.memory_space<vmem>>, %arg13: memref<1x3x16x16xbf16, #tpu.memory_space<vmem>>, %arg14: memref<1x3x16x16xbf16, #tpu.memory_space<vmem>>) attributes {dimension_semantics = [#tpu.dimension_semantics<parallel>], iteration_bounds = array<i64: 10>, scalar_prefetch = 0 : i64, scratch_operands = 0 : i64, tpu.core_type = #tpu.core_type<tc>, window_params = [{transform_indices = @transform_0, window_bounds = array<i64: 1, 1, 16, 16>}, {transform_indices = @transform_1, window_bounds = array<i64: 1, 3, 16, 16>}, {transform_indices = @transform_2, window_bounds = array<i64: 1, 3, 16, 16>}, {transform_indices = @transform_3, window_bounds = array<i64: 3>}, {transform_indices = @transform_4, window_bounds = array<i64: 3>}, {transform_indices = @transform_5, window_bounds = array<i64: 4>}, {transform_indices = @transform_6, window_bounds = array<i64: 1>}, {transform_indices = @transform_7, window_bounds = array<i64: 1, 1, 16, 16>}, {transform_indices = @transform_8, window_bounds = array<i64: 1, 1, 16, 16>}, {transform_indices = @transform_9, window_bounds = array<i64: 1, 1, 16, 16>}, {transform_indices = @transform_10, window_bounds = array<i64: 1, 1, 16, 16>}, {transform_indices = @transform_11, window_bounds = array<i64: 1, 3, 16, 16>}, {transform_indices = @transform_12, window_bounds = array<i64: 1, 3, 16, 16>}, {transform_indices = @transform_13, window_bounds = array<i64: 1, 3, 16, 16>}]} {
    %c0 = arith.constant 0 : index
    %c0_0 = arith.constant 0 : index
    %c0_1 = arith.constant 0 : index
    %c0_2 = arith.constant 0 : index
    %0 = vector.load %arg1[%c0, %c0_0, %c0_1, %c0_2] : memref<1x1x16x16xf32, #tpu.memory_space<vmem>>, vector<1x1x16x16xf32>
    %1 = vector.shape_cast %0 : vector<1x1x16x16xf32> to vector<16x16xf32>
    %cst = arith.constant 0.00392156886 : f32
    %2 = vector.broadcast %cst : f32 to vector<16x16xf32>
    %3 = arith.mulf %1, %2 : vector<16x16xf32>
    %c0_3 = arith.constant 0 : index
    %c0_4 = arith.constant 0 : index
    %c0_5 = arith.constant 0 : index
    %c0_6 = arith.constant 0 : index
    %4 = vector.load %arg8[%c0_3, %c0_4, %c0_5, %c0_6] : memref<1x1x16x16xf32, #tpu.memory_space<vmem>>, vector<1x1x16x16xf32>
    %5 = vector.shape_cast %4 : vector<1x1x16x16xf32> to vector<16x16xf32>
    %6 = vector.shape_cast %3 : vector<16x16xf32> to vector<1x1x16x16xf32>
    tpu.vector_store %arg8[%c0_3, %c0_4, %c0_5, %c0_6], %6 {strides = array<i32>} : memref<1x1x16x16xf32, #tpu.memory_space<vmem>>, vector<1x1x16x16xf32>,
    %cst_7 = arith.constant 0.000000e+00 : f32
    %cst_8 = arith.constant 1.000000e+00 : f32
    %7 = vector.broadcast %cst_7 : f32 to vector<16x16xf32>
    %8 = arith.maximumf %7, %3 : vector<16x16xf32>
    %9 = vector.broadcast %cst_8 : f32 to vector<16x16xf32>
    %10 = arith.minimumf %9, %8 : vector<16x16xf32>
    %cst_9 = arith.constant 0.000000e+00 : f32
    %11 = vector.broadcast %cst_9 : f32 to vector<16x16xf32>
    %12 = arith.cmpf ogt, %10, %11 : vector<16x16xf32>
    %cst_10 = arith.constant 1.000000e+00 : f32
    %13 = vector.broadcast %cst_10 : f32 to vector<16x16xf32>
    %14 = arith.cmpf olt, %10, %13 : vector<16x16xf32>
    %15 = arith.andi %12, %14 : vector<16x16xi1>
    %16 = arith.extui %15 : vector<16x16xi1> to vector<16x16xi32>
    %17 = arith.sitofp %16 : vector<16x16xi32> to vector<16x16xf32>
    %18 = tpu.iota {dimensions = array<i32: 0>} : vector<16x16xi32>
    %19 = tpu.iota {dimensions = array<i32: 1>} : vector<16x16xi32>
    %c1_i32 = arith.constant 1 : i32
    %20 = tpu.dynamic_rotate %17 by %c1_i32 dim 0 : vector<16x16xf32>, i32 -> vector<16x16xf32>
    %c-1_i32 = arith.constant -1 : i32
    %21 = vector.broadcast %c-1_i32 : i32 to vector<16x16xi32>
    %22 = arith.addi %18, %21 : vector<16x16xi32>
    %c0_i32 = arith.constant 0 : i32
    %23 = vector.broadcast %c0_i32 : i32 to vector<16x16xi32>
    %24 = arith.cmpi sge, %22, %23 : vector<16x16xi32>
    %c-1_i32_11 = arith.constant -1 : i32
    %25 = vector.broadcast %c-1_i32_11 : i32 to vector<16x16xi32>
    %26 = arith.addi %18, %25 : vector<16x16xi32>
    %c15_i32 = arith.constant 15 : i32
    %27 = vector.broadcast %c15_i32 : i32 to vector<16x16xi32>
    %28 = arith.cmpi sle, %26, %27 : vector<16x16xi32>
    %29 = arith.andi %24, %28 : vector<16x16xi1>
    %cst_12 = arith.constant 0.000000e+00 : f32
    %30 = vector.broadcast %cst_12 : f32 to vector<16x16xf32>
    %31 = arith.select %29, %20, %30 : vector<16x16xi1>, vector<16x16xf32>
    %c1_i32_13 = arith.constant 1 : i32
    %32 = tpu.dynamic_rotate %31 by %c1_i32_13 dim 1 : vector<16x16xf32>, i32 -> vector<16x16xf32>
    %c-1_i32_14 = arith.constant -1 : i32
    %33 = vector.broadcast %c-1_i32_14 : i32 to vector<16x16xi32>
    %34 = arith.addi %19, %33 : vector<16x16xi32>
    %c0_i32_15 = arith.constant 0 : i32
    %35 = vector.broadcast %c0_i32_15 : i32 to vector<16x16xi32>
    %36 = arith.cmpi sge, %34, %35 : vector<16x16xi32>
    %c-1_i32_16 = arith.constant -1 : i32
    %37 = vector.broadcast %c-1_i32_16 : i32 to vector<16x16xi32>
    %38 = arith.addi %19, %37 : vector<16x16xi32>
    %c15_i32_17 = arith.constant 15 : i32
    %39 = vector.broadcast %c15_i32_17 : i32 to vector<16x16xi32>
    %40 = arith.cmpi sle, %38, %39 : vector<16x16xi32>
    %41 = arith.andi %36, %40 : vector<16x16xi1>
    %cst_18 = arith.constant 0.000000e+00 : f32
    %42 = vector.broadcast %cst_18 : f32 to vector<16x16xf32>
    %43 = arith.select %41, %32, %42 : vector<16x16xi1>, vector<16x16xf32>
    %44 = arith.maximumf %17, %43 : vector<16x16xf32>
    %c1_i32_19 = arith.constant 1 : i32
    %45 = tpu.dynamic_rotate %17 by %c1_i32_19 dim 0 : vector<16x16xf32>, i32 -> vector<16x16xf32>
    %c-1_i32_20 = arith.constant -1 : i32
    %46 = vector.broadcast %c-1_i32_20 : i32 to vector<16x16xi32>
    %47 = arith.addi %18, %46 : vector<16x16xi32>
    %c0_i32_21 = arith.constant 0 : i32
    %48 = vector.broadcast %c0_i32_21 : i32 to vector<16x16xi32>
    %49 = arith.cmpi sge, %47, %48 : vector<16x16xi32>
    %c-1_i32_22 = arith.constant -1 : i32
    %50 = vector.broadcast %c-1_i32_22 : i32 to vector<16x16xi32>
    %51 = arith.addi %18, %50 : vector<16x16xi32>
    %c15_i32_23 = arith.constant 15 : i32
    %52 = vector.broadcast %c15_i32_23 : i32 to vector<16x16xi32>
    %53 = arith.cmpi sle, %51, %52 : vector<16x16xi32>
    %54 = arith.andi %49, %53 : vector<16x16xi1>
    %cst_24 = arith.constant 0.000000e+00 : f32
    %55 = vector.broadcast %cst_24 : f32 to vector<16x16xf32>
    %56 = arith.select %54, %45, %55 : vector<16x16xi1>, vector<16x16xf32>
    %57 = arith.maximumf %44, %56 : vector<16x16xf32>
    %c1_i32_25 = arith.constant 1 : i32
    %58 = tpu.dynamic_rotate %17 by %c1_i32_25 dim 0 : vector<16x16xf32>, i32 -> vector<16x16xf32>
    %c-1_i32_26 = arith.constant -1 : i32
    %59 = vector.broadcast %c-1_i32_26 : i32 to vector<16x16xi32>
    %60 = arith.addi %18, %59 : vector<16x16xi32>
    %c0_i32_27 = arith.constant 0 : i32
    %61 = vector.broadcast %c0_i32_27 : i32 to vector<16x16xi32>
    %62 = arith.cmpi sge, %60, %61 : vector<16x16xi32>
    %c-1_i32_28 = arith.constant -1 : i32
    %63 = vector.broadcast %c-1_i32_28 : i32 to vector<16x16xi32>
    %64 = arith.addi %18, %63 : vector<16x16xi32>
    %c15_i32_29 = arith.constant 15 : i32
    %65 = vector.broadcast %c15_i32_29 : i32 to vector<16x16xi32>
    %66 = arith.cmpi sle, %64, %65 : vector<16x16xi32>
    %67 = arith.andi %62, %66 : vector<16x16xi1>
    %cst_30 = arith.constant 0.000000e+00 : f32
    %68 = vector.broadcast %cst_30 : f32 to vector<16x16xf32>
    %69 = arith.select %67, %58, %68 : vector<16x16xi1>, vector<16x16xf32>
    %c15_i32_31 = arith.constant 15 : i32
    %70 = tpu.dynamic_rotate %69 by %c15_i32_31 dim 1 : vector<16x16xf32>, i32 -> vector<16x16xf32>
    %c1_i32_32 = arith.constant 1 : i32
    %71 = vector.broadcast %c1_i32_32 : i32 to vector<16x16xi32>
    %72 = arith.addi %19, %71 : vector<16x16xi32>
    %c0_i32_33 = arith.constant 0 : i32
    %73 = vector.broadcast %c0_i32_33 : i32 to vector<16x16xi32>
    %74 = arith.cmpi sge, %72, %73 : vector<16x16xi32>
    %c1_i32_34 = arith.constant 1 : i32
    %75 = vector.broadcast %c1_i32_34 : i32 to vector<16x16xi32>
    %76 = arith.addi %19, %75 : vector<16x16xi32>
    %c15_i32_35 = arith.constant 15 : i32
    %77 = vector.broadcast %c15_i32_35 : i32 to vector<16x16xi32>
    %78 = arith.cmpi sle, %76, %77 : vector<16x16xi32>
    %79 = arith.andi %74, %78 : vector<16x16xi1>
    %cst_36 = arith.constant 0.000000e+00 : f32
    %80 = vector.broadcast %cst_36 : f32 to vector<16x16xf32>
    %81 = arith.select %79, %70, %80 : vector<16x16xi1>, vector<16x16xf32>
    %82 = arith.maximumf %57, %81 : vector<16x16xf32>
    %c1_i32_37 = arith.constant 1 : i32
    %83 = tpu.dynamic_rotate %17 by %c1_i32_37 dim 1 : vector<16x16xf32>, i32 -> vector<16x16xf32>
    %c-1_i32_38 = arith.constant -1 : i32
    %84 = vector.broadcast %c-1_i32_38 : i32 to vector<16x16xi32>
    %85 = arith.addi %19, %84 : vector<16x16xi32>
    %c0_i32_39 = arith.constant 0 : i32
    %86 = vector.broadcast %c0_i32_39 : i32 to vector<16x16xi32>
    %87 = arith.cmpi sge, %85, %86 : vector<16x16xi32>
    %c-1_i32_40 = arith.constant -1 : i32
    %88 = vector.broadcast %c-1_i32_40 : i32 to vector<16x16xi32>
    %89 = arith.addi %19, %88 : vector<16x16xi32>
    %c15_i32_41 = arith.constant 15 : i32
    %90 = vector.broadcast %c15_i32_41 : i32 to vector<16x16xi32>
    %91 = arith.cmpi sle, %89, %90 : vector<16x16xi32>
    %92 = arith.andi %87, %91 : vector<16x16xi1>
    %cst_42 = arith.constant 0.000000e+00 : f32
    %93 = vector.broadcast %cst_42 : f32 to vector<16x16xf32>
    %94 = arith.select %92, %83, %93 : vector<16x16xi1>, vector<16x16xf32>
    %95 = arith.maximumf %82, %94 : vector<16x16xf32>
    %c15_i32_43 = arith.constant 15 : i32
    %96 = tpu.dynamic_rotate %17 by %c15_i32_43 dim 1 : vector<16x16xf32>, i32 -> vector<16x16xf32>
    %c1_i32_44 = arith.constant 1 : i32
    %97 = vector.broadcast %c1_i32_44 : i32 to vector<16x16xi32>
    %98 = arith.addi %19, %97 : vector<16x16xi32>
    %c0_i32_45 = arith.constant 0 : i32
    %99 = vector.broadcast %c0_i32_45 : i32 to vector<16x16xi32>
    %100 = arith.cmpi sge, %98, %99 : vector<16x16xi32>
    %c1_i32_46 = arith.constant 1 : i32
    %101 = vector.broadcast %c1_i32_46 : i32 to vector<16x16xi32>
    %102 = arith.addi %19, %101 : vector<16x16xi32>
    %c15_i32_47 = arith.constant 15 : i32
    %103 = vector.broadcast %c15_i32_47 : i32 to vector<16x16xi32>
    %104 = arith.cmpi sle, %102, %103 : vector<16x16xi32>
    %105 = arith.andi %100, %104 : vector<16x16xi1>
    %cst_48 = arith.constant 0.000000e+00 : f32
    %106 = vector.broadcast %cst_48 : f32 to vector<16x16xf32>
    %107 = arith.select %105, %96, %106 : vector<16x16xi1>, vector<16x16xf32>
    %108 = arith.maximumf %95, %107 : vector<16x16xf32>
    %c15_i32_49 = arith.constant 15 : i32
    %109 = tpu.dynamic_rotate %17 by %c15_i32_49 dim 0 : vector<16x16xf32>, i32 -> vector<16x16xf32>
    %c1_i32_50 = arith.constant 1 : i32
    %110 = vector.broadcast %c1_i32_50 : i32 to vector<16x16xi32>
    %111 = arith.addi %18, %110 : vector<16x16xi32>
    %c0_i32_51 = arith.constant 0 : i32
    %112 = vector.broadcast %c0_i32_51 : i32 to vector<16x16xi32>
    %113 = arith.cmpi sge, %111, %112 : vector<16x16xi32>
    %c1_i32_52 = arith.constant 1 : i32
    %114 = vector.broadcast %c1_i32_52 : i32 to vector<16x16xi32>
    %115 = arith.addi %18, %114 : vector<16x16xi32>
    %c15_i32_53 = arith.constant 15 : i32
    %116 = vector.broadcast %c15_i32_53 : i32 to vector<16x16xi32>
    %117 = arith.cmpi sle, %115, %116 : vector<16x16xi32>
    %118 = arith.andi %113, %117 : vector<16x16xi1>
    %cst_54 = arith.constant 0.000000e+00 : f32
    %119 = vector.broadcast %cst_54 : f32 to vector<16x16xf32>
    %120 = arith.select %118, %109, %119 : vector<16x16xi1>, vector<16x16xf32>
    %c1_i32_55 = arith.constant 1 : i32
    %121 = tpu.dynamic_rotate %120 by %c1_i32_55 dim 1 : vector<16x16xf32>, i32 -> vector<16x16xf32>
    %c-1_i32_56 = arith.constant -1 : i32
    %122 = vector.broadcast %c-1_i32_56 : i32 to vector<16x16xi32>
    %123 = arith.addi %19, %122 : vector<16x16xi32>
    %c0_i32_57 = arith.constant 0 : i32
    %124 = vector.broadcast %c0_i32_57 : i32 to vector<16x16xi32>
    %125 = arith.cmpi sge, %123, %124 : vector<16x16xi32>
    %c-1_i32_58 = arith.constant -1 : i32
    %126 = vector.broadcast %c-1_i32_58 : i32 to vector<16x16xi32>
    %127 = arith.addi %19, %126 : vector<16x16xi32>
    %c15_i32_59 = arith.constant 15 : i32
    %128 = vector.broadcast %c15_i32_59 : i32 to vector<16x16xi32>
    %129 = arith.cmpi sle, %127, %128 : vector<16x16xi32>
    %130 = arith.andi %125, %129 : vector<16x16xi1>
    %cst_60 = arith.constant 0.000000e+00 : f32
    %131 = vector.broadcast %cst_60 : f32 to vector<16x16xf32>
    %132 = arith.select %130, %121, %131 : vector<16x16xi1>, vector<16x16xf32>
    %133 = arith.maximumf %108, %132 : vector<16x16xf32>
    %c15_i32_61 = arith.constant 15 : i32
    %134 = tpu.dynamic_rotate %17 by %c15_i32_61 dim 0 : vector<16x16xf32>, i32 -> vector<16x16xf32>
    %c1_i32_62 = arith.constant 1 : i32
    %135 = vector.broadcast %c1_i32_62 : i32 to vector<16x16xi32>
    %136 = arith.addi %18, %135 : vector<16x16xi32>
    %c0_i32_63 = arith.constant 0 : i32
    %137 = vector.broadcast %c0_i32_63 : i32 to vector<16x16xi32>
    %138 = arith.cmpi sge, %136, %137 : vector<16x16xi32>
    %c1_i32_64 = arith.constant 1 : i32
    %139 = vector.broadcast %c1_i32_64 : i32 to vector<16x16xi32>
    %140 = arith.addi %18, %139 : vector<16x16xi32>
    %c15_i32_65 = arith.constant 15 : i32
    %141 = vector.broadcast %c15_i32_65 : i32 to vector<16x16xi32>
    %142 = arith.cmpi sle, %140, %141 : vector<16x16xi32>
    %143 = arith.andi %138, %142 : vector<16x16xi1>
    %cst_66 = arith.constant 0.000000e+00 : f32
    %144 = vector.broadcast %cst_66 : f32 to vector<16x16xf32>
    %145 = arith.select %143, %134, %144 : vector<16x16xi1>, vector<16x16xf32>
    %146 = arith.maximumf %133, %145 : vector<16x16xf32>
    %c15_i32_67 = arith.constant 15 : i32
    %147 = tpu.dynamic_rotate %17 by %c15_i32_67 dim 0 : vector<16x16xf32>, i32 -> vector<16x16xf32>
    %c1_i32_68 = arith.constant 1 : i32
    %148 = vector.broadcast %c1_i32_68 : i32 to vector<16x16xi32>
    %149 = arith.addi %18, %148 : vector<16x16xi32>
    %c0_i32_69 = arith.constant 0 : i32
    %150 = vector.broadcast %c0_i32_69 : i32 to vector<16x16xi32>
    %151 = arith.cmpi sge, %149, %150 : vector<16x16xi32>
    %c1_i32_70 = arith.constant 1 : i32
    %152 = vector.broadcast %c1_i32_70 : i32 to vector<16x16xi32>
    %153 = arith.addi %18, %152 : vector<16x16xi32>
    %c15_i32_71 = arith.constant 15 : i32
    %154 = vector.broadcast %c15_i32_71 : i32 to vector<16x16xi32>
    %155 = arith.cmpi sle, %153, %154 : vector<16x16xi32>
    %156 = arith.andi %151, %155 : vector<16x16xi1>
    %cst_72 = arith.constant 0.000000e+00 : f32
    %157 = vector.broadcast %cst_72 : f32 to vector<16x16xf32>
    %158 = arith.select %156, %147, %157 : vector<16x16xi1>, vector<16x16xf32>
    %c15_i32_73 = arith.constant 15 : i32
    %159 = tpu.dynamic_rotate %158 by %c15_i32_73 dim 1 : vector<16x16xf32>, i32 -> vector<16x16xf32>
    %c1_i32_74 = arith.constant 1 : i32
    %160 = vector.broadcast %c1_i32_74 : i32 to vector<16x16xi32>
    %161 = arith.addi %19, %160 : vector<16x16xi32>
    %c0_i32_75 = arith.constant 0 : i32
    %162 = vector.broadcast %c0_i32_75 : i32 to vector<16x16xi32>
    %163 = arith.cmpi sge, %161, %162 : vector<16x16xi32>
    %c1_i32_76 = arith.constant 1 : i32
    %164 = vector.broadcast %c1_i32_76 : i32 to vector<16x16xi32>
    %165 = arith.addi %19, %164 : vector<16x16xi32>
    %c15_i32_77 = arith.constant 15 : i32
    %166 = vector.broadcast %c15_i32_77 : i32 to vector<16x16xi32>
    %167 = arith.cmpi sle, %165, %166 : vector<16x16xi32>
    %168 = arith.andi %163, %167 : vector<16x16xi1>
    %cst_78 = arith.constant 0.000000e+00 : f32
    %169 = vector.broadcast %cst_78 : f32 to vector<16x16xf32>
    %170 = arith.select %168, %159, %169 : vector<16x16xi1>, vector<16x16xf32>
    %171 = arith.maximumf %146, %170 : vector<16x16xf32>
    %c0_79 = arith.constant 0 : index
    %c0_80 = arith.constant 0 : index
    %c0_81 = arith.constant 0 : index
    %c0_82 = arith.constant 0 : index
    %172 = vector.load %arg9[%c0_79, %c0_80, %c0_81, %c0_82] : memref<1x1x16x16xf32, #tpu.memory_space<vmem>>, vector<1x1x16x16xf32>
    %173 = vector.shape_cast %172 : vector<1x1x16x16xf32> to vector<16x16xf32>
    %174 = vector.shape_cast %171 : vector<16x16xf32> to vector<1x1x16x16xf32>
    tpu.vector_store %arg9[%c0_79, %c0_80, %c0_81, %c0_82], %174 {strides = array<i32>} : memref<1x1x16x16xf32, #tpu.memory_space<vmem>>, vector<1x1x16x16xf32>,
    %cst_83 = arith.constant 5.000000e-01 : f32
    %175 = vector.broadcast %cst_83 : f32 to vector<16x16xf32>
    %176 = arith.cmpf ogt, %171, %175 : vector<16x16xf32>
    %cst_84 = arith.constant 0.501960814 : f32
    %177 = vector.broadcast %cst_84 : f32 to vector<16x16xf32>
    %178 = arith.select %176, %177, %10 : vector<16x16xi1>, vector<16x16xf32>
    %c0_85 = arith.constant 0 : index
    %c0_86 = arith.constant 0 : index
    %c0_87 = arith.constant 0 : index
    %c0_88 = arith.constant 0 : index
    %179 = vector.load %arg10[%c0_85, %c0_86, %c0_87, %c0_88] : memref<1x1x16x16xf32, #tpu.memory_space<vmem>>, vector<1x1x16x16xf32>
    %180 = vector.shape_cast %179 : vector<1x1x16x16xf32> to vector<16x16xf32>
    %181 = vector.shape_cast %178 : vector<16x16xf32> to vector<1x1x16x16xf32>
    tpu.vector_store %arg10[%c0_85, %c0_86, %c0_87, %c0_88], %181 {strides = array<i32>} : memref<1x1x16x16xf32, #tpu.memory_space<vmem>>, vector<1x1x16x16xf32>,
    %c3 = arith.constant 3 : index
    %182 = memref.load %arg6[%c3] : memref<4xf32, #tpu.memory_space<smem>>
    %183 = vector.broadcast %182 : f32 to vector<16x16xf32>
    %184 = arith.mulf %178, %183 : vector<16x16xf32>
    %c0_89 = arith.constant 0 : index
    %185 = memref.load %arg7[%c0_89] : memref<1xf32, #tpu.memory_space<smem>>
    %186 = vector.broadcast %185 : f32 to vector<16x16xf32>
    %187 = arith.addf %184, %186 : vector<16x16xf32>
    %c0_90 = arith.constant 0 : index
    %c2 = arith.constant 2 : index
    %c0_91 = arith.constant 0 : index
    %c0_92 = arith.constant 0 : index
    %188 = vector.load %arg2[%c0_90, %c2, %c0_91, %c0_92] : memref<1x3x16x16xf32, #tpu.memory_space<vmem>>, vector<1x1x16x16xf32>
    %189 = vector.shape_cast %188 : vector<1x1x16x16xf32> to vector<16x16xf32>
    %cst_93 = arith.constant 0.00392156886 : f32
    %190 = vector.broadcast %cst_93 : f32 to vector<16x16xf32>
    %191 = arith.mulf %189, %190 : vector<16x16xf32>
    %c0_94 = arith.constant 0 : index
    %c2_95 = arith.constant 2 : index
    %c0_96 = arith.constant 0 : index
    %c0_97 = arith.constant 0 : index
    %192 = vector.load %arg3[%c0_94, %c2_95, %c0_96, %c0_97] : memref<1x3x16x16xf32, #tpu.memory_space<vmem>>, vector<1x1x16x16xf32>
    %193 = vector.shape_cast %192 : vector<1x1x16x16xf32> to vector<16x16xf32>
    %cst_98 = arith.constant 0.00392156886 : f32
    %194 = vector.broadcast %cst_98 : f32 to vector<16x16xf32>
    %195 = arith.mulf %193, %194 : vector<16x16xf32>
    %196 = arith.mulf %191, %3 : vector<16x16xf32>
    %cst_99 = arith.constant 1.000000e+00 : f32
    %197 = vector.broadcast %cst_99 : f32 to vector<16x16xf32>
    %198 = arith.subf %197, %3 : vector<16x16xf32>
    %199 = arith.mulf %195, %198 : vector<16x16xf32>
    %200 = arith.addf %196, %199 : vector<16x16xf32>
    %201 = arith.truncf %191 : vector<16x16xf32> to vector<16x16xbf16>
    %c0_100 = arith.constant 0 : index
    %c0_101 = arith.constant 0 : index
    %c0_102 = arith.constant 0 : index
    %c0_103 = arith.constant 0 : index
    %202 = vector.load %arg12[%c0_100, %c0_101, %c0_102, %c0_103] : memref<1x3x16x16xbf16, #tpu.memory_space<vmem>>, vector<1x1x16x16xbf16>
    %203 = vector.shape_cast %202 : vector<1x1x16x16xbf16> to vector<16x16xbf16>
    %204 = vector.shape_cast %201 : vector<16x16xbf16> to vector<1x1x16x16xbf16>
    tpu.vector_store %arg12[%c0_100, %c0_101, %c0_102, %c0_103], %204 {strides = array<i32>} : memref<1x3x16x16xbf16, #tpu.memory_space<vmem>>, vector<1x1x16x16xbf16>,
    %205 = arith.truncf %195 : vector<16x16xf32> to vector<16x16xbf16>
    %c0_104 = arith.constant 0 : index
    %c0_105 = arith.constant 0 : index
    %c0_106 = arith.constant 0 : index
    %c0_107 = arith.constant 0 : index
    %206 = vector.load %arg13[%c0_104, %c0_105, %c0_106, %c0_107] : memref<1x3x16x16xbf16, #tpu.memory_space<vmem>>, vector<1x1x16x16xbf16>
    %207 = vector.shape_cast %206 : vector<1x1x16x16xbf16> to vector<16x16xbf16>
    %208 = vector.shape_cast %205 : vector<16x16xbf16> to vector<1x1x16x16xbf16>
    tpu.vector_store %arg13[%c0_104, %c0_105, %c0_106, %c0_107], %208 {strides = array<i32>} : memref<1x3x16x16xbf16, #tpu.memory_space<vmem>>, vector<1x1x16x16xbf16>,
    %209 = arith.truncf %200 : vector<16x16xf32> to vector<16x16xbf16>
    %c0_108 = arith.constant 0 : index
    %c0_109 = arith.constant 0 : index
    %c0_110 = arith.constant 0 : index
    %c0_111 = arith.constant 0 : index
    %210 = vector.load %arg14[%c0_108, %c0_109, %c0_110, %c0_111] : memref<1x3x16x16xbf16, #tpu.memory_space<vmem>>, vector<1x1x16x16xbf16>
    %211 = vector.shape_cast %210 : vector<1x1x16x16xbf16> to vector<16x16xbf16>
    %212 = vector.shape_cast %209 : vector<16x16xbf16> to vector<1x1x16x16xbf16>
    tpu.vector_store %arg14[%c0_108, %c0_109, %c0_110, %c0_111], %212 {strides = array<i32>} : memref<1x3x16x16xbf16, #tpu.memory_space<vmem>>, vector<1x1x16x16xbf16>,
    %c0_112 = arith.constant 0 : index
    %213 = memref.load %arg4[%c0_112] : memref<3xf32, #tpu.memory_space<smem>>
    %214 = vector.broadcast %213 : f32 to vector<16x16xf32>
    %215 = arith.subf %200, %214 : vector<16x16xf32>
    %c0_113 = arith.constant 0 : index
    %216 = memref.load %arg5[%c0_113] : memref<3xf32, #tpu.memory_space<smem>>
    %217 = vector.broadcast %216 : f32 to vector<16x16xf32>
    %218 = arith.mulf %215, %217 : vector<16x16xf32>
    %c0_114 = arith.constant 0 : index
    %219 = memref.load %arg6[%c0_114] : memref<4xf32, #tpu.memory_space<smem>>
    %220 = vector.broadcast %219 : f32 to vector<16x16xf32>
    %221 = arith.mulf %218, %220 : vector<16x16xf32>
    %222 = arith.addf %187, %221 : vector<16x16xf32>
    %c0_115 = arith.constant 0 : index
    %c1 = arith.constant 1 : index
    %c0_116 = arith.constant 0 : index
    %c0_117 = arith.constant 0 : index
    %223 = vector.load %arg2[%c0_115, %c1, %c0_116, %c0_117] : memref<1x3x16x16xf32, #tpu.memory_space<vmem>>, vector<1x1x16x16xf32>
    %224 = vector.shape_cast %223 : vector<1x1x16x16xf32> to vector<16x16xf32>
    %cst_118 = arith.constant 0.00392156886 : f32
    %225 = vector.broadcast %cst_118 : f32 to vector<16x16xf32>
    %226 = arith.mulf %224, %225 : vector<16x16xf32>
    %c0_119 = arith.constant 0 : index
    %c1_120 = arith.constant 1 : index
    %c0_121 = arith.constant 0 : index
    %c0_122 = arith.constant 0 : index
    %227 = vector.load %arg3[%c0_119, %c1_120, %c0_121, %c0_122] : memref<1x3x16x16xf32, #tpu.memory_space<vmem>>, vector<1x1x16x16xf32>
    %228 = vector.shape_cast %227 : vector<1x1x16x16xf32> to vector<16x16xf32>
    %cst_123 = arith.constant 0.00392156886 : f32
    %229 = vector.broadcast %cst_123 : f32 to vector<16x16xf32>
    %230 = arith.mulf %228, %229 : vector<16x16xf32>
    %231 = arith.mulf %226, %3 : vector<16x16xf32>
    %cst_124 = arith.constant 1.000000e+00 : f32
    %232 = vector.broadcast %cst_124 : f32 to vector<16x16xf32>
    %233 = arith.subf %232, %3 : vector<16x16xf32>
    %234 = arith.mulf %230, %233 : vector<16x16xf32>
    %235 = arith.addf %231, %234 : vector<16x16xf32>
    %236 = arith.truncf %226 : vector<16x16xf32> to vector<16x16xbf16>
    %c0_125 = arith.constant 0 : index
    %c1_126 = arith.constant 1 : index
    %c0_127 = arith.constant 0 : index
    %c0_128 = arith.constant 0 : index
    %237 = vector.load %arg12[%c0_125, %c1_126, %c0_127, %c0_128] : memref<1x3x16x16xbf16, #tpu.memory_space<vmem>>, vector<1x1x16x16xbf16>
    %238 = vector.shape_cast %237 : vector<1x1x16x16xbf16> to vector<16x16xbf16>
    %239 = vector.shape_cast %236 : vector<16x16xbf16> to vector<1x1x16x16xbf16>
    tpu.vector_store %arg12[%c0_125, %c1_126, %c0_127, %c0_128], %239 {strides = array<i32>} : memref<1x3x16x16xbf16, #tpu.memory_space<vmem>>, vector<1x1x16x16xbf16>,
    %240 = arith.truncf %230 : vector<16x16xf32> to vector<16x16xbf16>
    %c0_129 = arith.constant 0 : index
    %c1_130 = arith.constant 1 : index
    %c0_131 = arith.constant 0 : index
    %c0_132 = arith.constant 0 : index
    %241 = vector.load %arg13[%c0_129, %c1_130, %c0_131, %c0_132] : memref<1x3x16x16xbf16, #tpu.memory_space<vmem>>, vector<1x1x16x16xbf16>
    %242 = vector.shape_cast %241 : vector<1x1x16x16xbf16> to vector<16x16xbf16>
    %243 = vector.shape_cast %240 : vector<16x16xbf16> to vector<1x1x16x16xbf16>
    tpu.vector_store %arg13[%c0_129, %c1_130, %c0_131, %c0_132], %243 {strides = array<i32>} : memref<1x3x16x16xbf16, #tpu.memory_space<vmem>>, vector<1x1x16x16xbf16>,
    %244 = arith.truncf %235 : vector<16x16xf32> to vector<16x16xbf16>
    %c0_133 = arith.constant 0 : index
    %c1_134 = arith.constant 1 : index
    %c0_135 = arith.constant 0 : index
    %c0_136 = arith.constant 0 : index
    %245 = vector.load %arg14[%c0_133, %c1_134, %c0_135, %c0_136] : memref<1x3x16x16xbf16, #tpu.memory_space<vmem>>, vector<1x1x16x16xbf16>
    %246 = vector.shape_cast %245 : vector<1x1x16x16xbf16> to vector<16x16xbf16>
    %247 = vector.shape_cast %244 : vector<16x16xbf16> to vector<1x1x16x16xbf16>
    tpu.vector_store %arg14[%c0_133, %c1_134, %c0_135, %c0_136], %247 {strides = array<i32>} : memref<1x3x16x16xbf16, #tpu.memory_space<vmem>>, vector<1x1x16x16xbf16>,
    %c1_137 = arith.constant 1 : index
    %248 = memref.load %arg4[%c1_137] : memref<3xf32, #tpu.memory_space<smem>>
    %249 = vector.broadcast %248 : f32 to vector<16x16xf32>
    %250 = arith.subf %235, %249 : vector<16x16xf32>
    %c1_138 = arith.constant 1 : index
    %251 = memref.load %arg5[%c1_138] : memref<3xf32, #tpu.memory_space<smem>>
    %252 = vector.broadcast %251 : f32 to vector<16x16xf32>
    %253 = arith.mulf %250, %252 : vector<16x16xf32>
    %c1_139 = arith.constant 1 : index
    %254 = memref.load %arg6[%c1_139] : memref<4xf32, #tpu.memory_space<smem>>
    %255 = vector.broadcast %254 : f32 to vector<16x16xf32>
    %256 = arith.mulf %253, %255 : vector<16x16xf32>
    %257 = arith.addf %222, %256 : vector<16x16xf32>
    %c0_140 = arith.constant 0 : index
    %c0_141 = arith.constant 0 : index
    %c0_142 = arith.constant 0 : index
    %c0_143 = arith.constant 0 : index
    %258 = vector.load %arg2[%c0_140, %c0_141, %c0_142, %c0_143] : memref<1x3x16x16xf32, #tpu.memory_space<vmem>>, vector<1x1x16x16xf32>
    %259 = vector.shape_cast %258 : vector<1x1x16x16xf32> to vector<16x16xf32>
    %cst_144 = arith.constant 0.00392156886 : f32
    %260 = vector.broadcast %cst_144 : f32 to vector<16x16xf32>
    %261 = arith.mulf %259, %260 : vector<16x16xf32>
    %c0_145 = arith.constant 0 : index
    %c0_146 = arith.constant 0 : index
    %c0_147 = arith.constant 0 : index
    %c0_148 = arith.constant 0 : index
    %262 = vector.load %arg3[%c0_145, %c0_146, %c0_147, %c0_148] : memref<1x3x16x16xf32, #tpu.memory_space<vmem>>, vector<1x1x16x16xf32>
    %263 = vector.shape_cast %262 : vector<1x1x16x16xf32> to vector<16x16xf32>
    %cst_149 = arith.constant 0.00392156886 : f32
    %264 = vector.broadcast %cst_149 : f32 to vector<16x16xf32>
    %265 = arith.mulf %263, %264 : vector<16x16xf32>
    %266 = arith.mulf %261, %3 : vector<16x16xf32>
    %cst_150 = arith.constant 1.000000e+00 : f32
    %267 = vector.broadcast %cst_150 : f32 to vector<16x16xf32>
    %268 = arith.subf %267, %3 : vector<16x16xf32>
    %269 = arith.mulf %265, %268 : vector<16x16xf32>
    %270 = arith.addf %266, %269 : vector<16x16xf32>
    %271 = arith.truncf %261 : vector<16x16xf32> to vector<16x16xbf16>
    %c0_151 = arith.constant 0 : index
    %c2_152 = arith.constant 2 : index
    %c0_153 = arith.constant 0 : index
    %c0_154 = arith.constant 0 : index
    %272 = vector.load %arg12[%c0_151, %c2_152, %c0_153, %c0_154] : memref<1x3x16x16xbf16, #tpu.memory_space<vmem>>, vector<1x1x16x16xbf16>
    %273 = vector.shape_cast %272 : vector<1x1x16x16xbf16> to vector<16x16xbf16>
    %274 = vector.shape_cast %271 : vector<16x16xbf16> to vector<1x1x16x16xbf16>
    tpu.vector_store %arg12[%c0_151, %c2_152, %c0_153, %c0_154], %274 {strides = array<i32>} : memref<1x3x16x16xbf16, #tpu.memory_space<vmem>>, vector<1x1x16x16xbf16>,
    %275 = arith.truncf %265 : vector<16x16xf32> to vector<16x16xbf16>
    %c0_155 = arith.constant 0 : index
    %c2_156 = arith.constant 2 : index
    %c0_157 = arith.constant 0 : index
    %c0_158 = arith.constant 0 : index
    %276 = vector.load %arg13[%c0_155, %c2_156, %c0_157, %c0_158] : memref<1x3x16x16xbf16, #tpu.memory_space<vmem>>, vector<1x1x16x16xbf16>
    %277 = vector.shape_cast %276 : vector<1x1x16x16xbf16> to vector<16x16xbf16>
    %278 = vector.shape_cast %275 : vector<16x16xbf16> to vector<1x1x16x16xbf16>
    tpu.vector_store %arg13[%c0_155, %c2_156, %c0_157, %c0_158], %278 {strides = array<i32>} : memref<1x3x16x16xbf16, #tpu.memory_space<vmem>>, vector<1x1x16x16xbf16>,
    %279 = arith.truncf %270 : vector<16x16xf32> to vector<16x16xbf16>
    %c0_159 = arith.constant 0 : index
    %c2_160 = arith.constant 2 : index
    %c0_161 = arith.constant 0 : index
    %c0_162 = arith.constant 0 : index
    %280 = vector.load %arg14[%c0_159, %c2_160, %c0_161, %c0_162] : memref<1x3x16x16xbf16, #tpu.memory_space<vmem>>, vector<1x1x16x16xbf16>
    %281 = vector.shape_cast %280 : vector<1x1x16x16xbf16> to vector<16x16xbf16>
    %282 = vector.shape_cast %279 : vector<16x16xbf16> to vector<1x1x16x16xbf16>
    tpu.vector_store %arg14[%c0_159, %c2_160, %c0_161, %c0_162], %282 {strides = array<i32>} : memref<1x3x16x16xbf16, #tpu.memory_space<vmem>>, vector<1x1x16x16xbf16>,
    %c2_163 = arith.constant 2 : index
    %283 = memref.load %arg4[%c2_163] : memref<3xf32, #tpu.memory_space<smem>>
    %284 = vector.broadcast %283 : f32 to vector<16x16xf32>
    %285 = arith.subf %270, %284 : vector<16x16xf32>
    %c2_164 = arith.constant 2 : index
    %286 = memref.load %arg5[%c2_164] : memref<3xf32, #tpu.memory_space<smem>>
    %287 = vector.broadcast %286 : f32 to vector<16x16xf32>
    %288 = arith.mulf %285, %287 : vector<16x16xf32>
    %c2_165 = arith.constant 2 : index
    %289 = memref.load %arg6[%c2_165] : memref<4xf32, #tpu.memory_space<smem>>
    %290 = vector.broadcast %289 : f32 to vector<16x16xf32>
    %291 = arith.mulf %288, %290 : vector<16x16xf32>
    %292 = arith.addf %257, %291 : vector<16x16xf32>
    %293 = arith.negf %292 : vector<16x16xf32>
    %294 = math.exp %293 : vector<16x16xf32>
    %cst_166 = arith.constant 1.000000e+00 : f32
    %295 = vector.broadcast %cst_166 : f32 to vector<16x16xf32>
    %296 = arith.addf %295, %294 : vector<16x16xf32>
    %297 = arith.divf %295, %296 : vector<16x16xf32>
    %c0_167 = arith.constant 0 : index
    %c0_168 = arith.constant 0 : index
    %c0_169 = arith.constant 0 : index
    %c0_170 = arith.constant 0 : index
    %298 = vector.load %arg11[%c0_167, %c0_168, %c0_169, %c0_170] : memref<1x1x16x16xf32, #tpu.memory_space<vmem>>, vector<1x1x16x16xf32>
    %299 = vector.shape_cast %298 : vector<1x1x16x16xf32> to vector<16x16xf32>
    %300 = vector.shape_cast %297 : vector<16x16xf32> to vector<1x1x16x16xf32>
    tpu.vector_store %arg11[%c0_167, %c0_168, %c0_169, %c0_170], %300 {strides = array<i32>} : memref<1x1x16x16xf32, #tpu.memory_space<vmem>>, vector<1x1x16x16xf32>,
    return
  }
  func.func @transform_0(%arg0: i32) -> (i32, i32, i32, i32) {
    %c0_i32 = arith.constant 0 : i32
    %c0_i32_0 = arith.constant 0 : i32
    %c0_i32_1 = arith.constant 0 : i32
    %c0_i32_2 = arith.constant 0 : i32
    return %arg0, %c0_i32, %c0_i32_0, %c0_i32_1 : i32, i32, i32, i32
  }
  func.func @transform_1(%arg0: i32) -> (i32, i32, i32, i32) {
    %c0_i32 = arith.constant 0 : i32
    %c0_i32_0 = arith.constant 0 : i32
    %c0_i32_1 = arith.constant 0 : i32
    %c0_i32_2 = arith.constant 0 : i32
    return %arg0, %c0_i32, %c0_i32_0, %c0_i32_1 : i32, i32, i32, i32
  }
  func.func @transform_2(%arg0: i32) -> (i32, i32, i32, i32) {
    %c0_i32 = arith.constant 0 : i32
    %c0_i32_0 = arith.constant 0 : i32
    %c0_i32_1 = arith.constant 0 : i32
    %c0_i32_2 = arith.constant 0 : i32
    return %arg0, %c0_i32, %c0_i32_0, %c0_i32_1 : i32, i32, i32, i32
  }
  func.func @transform_3(%arg0: i32) -> i32 {
    %c0_i32 = arith.constant 0 : i32
    %c0_i32_0 = arith.constant 0 : i32
    return %c0_i32 : i32
  }
  func.func @transform_4(%arg0: i32) -> i32 {
    %c0_i32 = arith.constant 0 : i32
    %c0_i32_0 = arith.constant 0 : i32
    return %c0_i32 : i32
  }
  func.func @transform_5(%arg0: i32) -> i32 {
    %c0_i32 = arith.constant 0 : i32
    %c0_i32_0 = arith.constant 0 : i32
    return %c0_i32 : i32
  }
  func.func @transform_6(%arg0: i32) -> i32 {
    %c0_i32 = arith.constant 0 : i32
    %c0_i32_0 = arith.constant 0 : i32
    return %c0_i32 : i32
  }
  func.func @transform_7(%arg0: i32) -> (i32, i32, i32, i32) {
    %c0_i32 = arith.constant 0 : i32
    %c0_i32_0 = arith.constant 0 : i32
    %c0_i32_1 = arith.constant 0 : i32
    %c0_i32_2 = arith.constant 0 : i32
    return %arg0, %c0_i32, %c0_i32_0, %c0_i32_1 : i32, i32, i32, i32
  }
  func.func @transform_8(%arg0: i32) -> (i32, i32, i32, i32) {
    %c0_i32 = arith.constant 0 : i32
    %c0_i32_0 = arith.constant 0 : i32
    %c0_i32_1 = arith.constant 0 : i32
    %c0_i32_2 = arith.constant 0 : i32
    return %arg0, %c0_i32, %c0_i32_0, %c0_i32_1 : i32, i32, i32, i32
  }
  func.func @transform_9(%arg0: i32) -> (i32, i32, i32, i32) {
    %c0_i32 = arith.constant 0 : i32
    %c0_i32_0 = arith.constant 0 : i32
    %c0_i32_1 = arith.constant 0 : i32
    %c0_i32_2 = arith.constant 0 : i32
    return %arg0, %c0_i32, %c0_i32_0, %c0_i32_1 : i32, i32, i32, i32
  }
  func.func @transform_10(%arg0: i32) -> (i32, i32, i32, i32) {
    %c0_i32 = arith.constant 0 : i32
    %c0_i32_0 = arith.constant 0 : i32
    %c0_i32_1 = arith.constant 0 : i32
    %c0_i32_2 = arith.constant 0 : i32
    return %arg0, %c0_i32, %c0_i32_0, %c0_i32_1 : i32, i32, i32, i32
  }
  func.func @transform_11(%arg0: i32) -> (i32, i32, i32, i32) {
    %c0_i32 = arith.constant 0 : i32
    %c0_i32_0 = arith.constant 0 : i32
    %c0_i32_1 = arith.constant 0 : i32
    %c0_i32_2 = arith.constant 0 : i32
    return %arg0, %c0_i32, %c0_i32_0, %c0_i32_1 : i32, i32, i32, i32
  }
  func.func @transform_12(%arg0: i32) -> (i32, i32, i32, i32) {
    %c0_i32 = arith.constant 0 : i32
    %c0_i32_0 = arith.constant 0 : i32
    %c0_i32_1 = arith.constant 0 : i32
    %c0_i32_2 = arith.constant 0 : i32
    return %arg0, %c0_i32, %c0_i32_0, %c0_i32_1 : i32, i32, i32, i32
  }
  func.func @transform_13(%arg0: i32) -> (i32, i32, i32, i32) {
    %c0_i32 = arith.constant 0 : i32
    %c0_i32_0 = arith.constant 0 : i32
    %c0_i32_1 = arith.constant 0 : i32
    %c0_i32_2 = arith.constant 0 : i32
    return %arg0, %c0_i32, %c0_i32_0, %c0_i32_1 : i32, i32, i32, i32
  }
}

module attributes {stable_mosaic.version = 11 : i64} {
  func.func @_att_loss_kernel(%arg0: i32, %arg1: i32, %arg2: memref<1x5x4x4xf32, #tpu.memory_space<vmem>>, %arg3: memref<1x1x2x2xf32, #tpu.memory_space<vmem>>, %arg4: memref<1x1x9x2x2xf32, #tpu.memory_space<vmem>>, %arg5: memref<1x1x9x2x2xf32, #tpu.memory_space<vmem>>, %arg6: memref<1x1x8x128xf32, #tpu.memory_space<vmem>>) attributes {dimension_semantics = [#tpu.dimension_semantics<parallel>, #tpu.dimension_semantics<arbitrary>], iteration_bounds = array<i64: 2, 3>, scalar_prefetch = 0 : i64, scratch_operands = 0 : i64, tpu.core_type = #tpu.core_type<tc>, window_params = [{transform_indices = @transform_0, window_bounds = array<i64: 1, 5, 4, 4>}, {transform_indices = @transform_1, window_bounds = array<i64: 1, 1, 2, 2>}, {transform_indices = @transform_2, window_bounds = array<i64: 1, 1, 9, 2, 2>}, {transform_indices = @transform_3, window_bounds = array<i64: 1, 1, 9, 2, 2>}, {transform_indices = @transform_4, window_bounds = array<i64: 1, 1, 8, 128>}]} {
    %c0 = arith.constant 0 : index
    %c0_0 = arith.constant 0 : index
    %c0_1 = arith.constant 0 : index
    %c0_2 = arith.constant 0 : index
    %0 = vector.load %arg3[%c0, %c0_0, %c0_1, %c0_2] : memref<1x1x2x2xf32, #tpu.memory_space<vmem>>, vector<1x1x2x2xf32>
    %1 = vector.shape_cast %0 : vector<1x1x2x2xf32> to vector<2x2xf32>
    %c0_3 = arith.constant 0 : index
    %2 = arith.index_cast %arg1 : i32 to index
    %c0_4 = arith.constant 0 : index
    %c0_5 = arith.constant 0 : index
    %3 = vector.load %arg2[%c0_3, %2, %c0_4, %c0_5] : memref<1x5x4x4xf32, #tpu.memory_space<vmem>>, vector<1x1x4x4xf32>
    %4 = vector.shape_cast %3 : vector<1x1x4x4xf32> to vector<4x4xf32>
    %c1_i32 = arith.constant 1 : i32
    %5 = arith.addi %arg1, %c1_i32 : i32
    %c0_6 = arith.constant 0 : index
    %6 = arith.index_cast %5 : i32 to index
    %c0_7 = arith.constant 0 : index
    %c0_8 = arith.constant 0 : index
    %7 = vector.load %arg2[%c0_6, %6, %c0_7, %c0_8] : memref<1x5x4x4xf32, #tpu.memory_space<vmem>>, vector<1x1x4x4xf32>
    %8 = vector.shape_cast %7 : vector<1x1x4x4xf32> to vector<4x4xf32>
    %c2_i32 = arith.constant 2 : i32
    %9 = arith.addi %arg1, %c2_i32 : i32
    %c0_9 = arith.constant 0 : index
    %10 = arith.index_cast %9 : i32 to index
    %c0_10 = arith.constant 0 : index
    %c0_11 = arith.constant 0 : index
    %11 = vector.load %arg2[%c0_9, %10, %c0_10, %c0_11] : memref<1x5x4x4xf32, #tpu.memory_space<vmem>>, vector<1x1x4x4xf32>
    %12 = vector.shape_cast %11 : vector<1x1x4x4xf32> to vector<4x4xf32>
    %13 = vector.extract_strided_slice %8 {offsets = [1, 1], sizes = [2, 2], strides = [1, 1]} : vector<4x4xf32> to vector<2x2xf32>
    %cst = arith.constant 0.000000e+00 : f32
    %14 = vector.broadcast %cst : f32 to vector<2x2xf32>
    %15 = vector.extract_strided_slice %4 {offsets = [0, 0], sizes = [2, 2], strides = [1, 1]} : vector<4x4xf32> to vector<2x2xf32>
    %16 = vector.extract_strided_slice %12 {offsets = [0, 0], sizes = [2, 2], strides = [1, 1]} : vector<4x4xf32> to vector<2x2xf32>
    %17 = arith.subf %13, %15 : vector<2x2xf32>
    %18 = math.absf %17 : vector<2x2xf32>
    %cst_12 = arith.constant 3.000000e-01 : f32
    %19 = vector.broadcast %cst_12 : f32 to vector<2x2xf32>
    %20 = arith.cmpf olt, %18, %19 : vector<2x2xf32>
    %21 = arith.extui %20 : vector<2x2xi1> to vector<2x2xi32>
    %22 = arith.sitofp %21 : vector<2x2xi32> to vector<2x2xf32>
    %cst_13 = arith.constant 8.000000e-01 : f32
    %23 = vector.broadcast %cst_13 : f32 to vector<2x2xf32>
    %24 = arith.mulf %22, %23 : vector<2x2xf32>
    %25 = arith.subf %13, %16 : vector<2x2xf32>
    %26 = math.absf %25 : vector<2x2xf32>
    %cst_14 = arith.constant 3.000000e-01 : f32
    %27 = vector.broadcast %cst_14 : f32 to vector<2x2xf32>
    %28 = arith.cmpf olt, %26, %27 : vector<2x2xf32>
    %29 = arith.extui %28 : vector<2x2xi1> to vector<2x2xi32>
    %30 = arith.sitofp %29 : vector<2x2xi32> to vector<2x2xf32>
    %cst_15 = arith.constant 8.000000e-01 : f32
    %31 = vector.broadcast %cst_15 : f32 to vector<2x2xf32>
    %32 = arith.mulf %30, %31 : vector<2x2xf32>
    %c0_16 = arith.constant 0 : index
    %c0_17 = arith.constant 0 : index
    %c0_18 = arith.constant 0 : index
    %c0_19 = arith.constant 0 : index
    %c0_20 = arith.constant 0 : index
    %33 = vector.load %arg4[%c0_16, %c0_17, %c0_18, %c0_19, %c0_20] : memref<1x1x9x2x2xf32, #tpu.memory_space<vmem>>, vector<1x1x1x2x2xf32>
    %34 = vector.shape_cast %33 : vector<1x1x1x2x2xf32> to vector<2x2xf32>
    %c0_21 = arith.constant 0 : index
    %c0_22 = arith.constant 0 : index
    %c0_23 = arith.constant 0 : index
    %c0_24 = arith.constant 0 : index
    %c0_25 = arith.constant 0 : index
    %35 = vector.load %arg5[%c0_21, %c0_22, %c0_23, %c0_24, %c0_25] : memref<1x1x9x2x2xf32, #tpu.memory_space<vmem>>, vector<1x1x1x2x2xf32>
    %36 = vector.shape_cast %35 : vector<1x1x1x2x2xf32> to vector<2x2xf32>
    %cst_26 = arith.constant 0.000000e+00 : f32
    %37 = vector.broadcast %cst_26 : f32 to vector<2x2xf32>
    %38 = arith.maximumf %34, %37 : vector<2x2xf32>
    %39 = arith.mulf %34, %24 : vector<2x2xf32>
    %40 = arith.subf %38, %39 : vector<2x2xf32>
    %41 = math.absf %34 : vector<2x2xf32>
    %cst_27 = arith.constant 0.000000e+00 : f32
    %42 = vector.broadcast %cst_27 : f32 to vector<2x2xf32>
    %43 = arith.subf %42, %41 : vector<2x2xf32>
    %44 = math.exp %43 : vector<2x2xf32>
    %45 = math.log1p %44 : vector<2x2xf32>
    %46 = arith.addf %40, %45 : vector<2x2xf32>
    %47 = arith.addf %14, %46 : vector<2x2xf32>
    %cst_28 = arith.constant 0.000000e+00 : f32
    %48 = vector.broadcast %cst_28 : f32 to vector<2x2xf32>
    %49 = arith.maximumf %36, %48 : vector<2x2xf32>
    %50 = arith.mulf %36, %32 : vector<2x2xf32>
    %51 = arith.subf %49, %50 : vector<2x2xf32>
    %52 = math.absf %36 : vector<2x2xf32>
    %cst_29 = arith.constant 0.000000e+00 : f32
    %53 = vector.broadcast %cst_29 : f32 to vector<2x2xf32>
    %54 = arith.subf %53, %52 : vector<2x2xf32>
    %55 = math.exp %54 : vector<2x2xf32>
    %56 = math.log1p %55 : vector<2x2xf32>
    %57 = arith.addf %51, %56 : vector<2x2xf32>
    %58 = arith.addf %47, %57 : vector<2x2xf32>
    %59 = vector.extract_strided_slice %4 {offsets = [0, 1], sizes = [2, 2], strides = [1, 1]} : vector<4x4xf32> to vector<2x2xf32>
    %60 = vector.extract_strided_slice %12 {offsets = [0, 1], sizes = [2, 2], strides = [1, 1]} : vector<4x4xf32> to vector<2x2xf32>
    %61 = arith.subf %13, %59 : vector<2x2xf32>
    %62 = math.absf %61 : vector<2x2xf32>
    %cst_30 = arith.constant 3.000000e-01 : f32
    %63 = vector.broadcast %cst_30 : f32 to vector<2x2xf32>
    %64 = arith.cmpf olt, %62, %63 : vector<2x2xf32>
    %65 = arith.extui %64 : vector<2x2xi1> to vector<2x2xi32>
    %66 = arith.sitofp %65 : vector<2x2xi32> to vector<2x2xf32>
    %cst_31 = arith.constant 8.000000e-01 : f32
    %67 = vector.broadcast %cst_31 : f32 to vector<2x2xf32>
    %68 = arith.mulf %66, %67 : vector<2x2xf32>
    %69 = arith.subf %13, %60 : vector<2x2xf32>
    %70 = math.absf %69 : vector<2x2xf32>
    %cst_32 = arith.constant 3.000000e-01 : f32
    %71 = vector.broadcast %cst_32 : f32 to vector<2x2xf32>
    %72 = arith.cmpf olt, %70, %71 : vector<2x2xf32>
    %73 = arith.extui %72 : vector<2x2xi1> to vector<2x2xi32>
    %74 = arith.sitofp %73 : vector<2x2xi32> to vector<2x2xf32>
    %cst_33 = arith.constant 8.000000e-01 : f32
    %75 = vector.broadcast %cst_33 : f32 to vector<2x2xf32>
    %76 = arith.mulf %74, %75 : vector<2x2xf32>
    %c0_34 = arith.constant 0 : index
    %c0_35 = arith.constant 0 : index
    %c1 = arith.constant 1 : index
    %c0_36 = arith.constant 0 : index
    %c0_37 = arith.constant 0 : index
    %77 = vector.load %arg4[%c0_34, %c0_35, %c1, %c0_36, %c0_37] : memref<1x1x9x2x2xf32, #tpu.memory_space<vmem>>, vector<1x1x1x2x2xf32>
    %78 = vector.shape_cast %77 : vector<1x1x1x2x2xf32> to vector<2x2xf32>
    %c0_38 = arith.constant 0 : index
    %c0_39 = arith.constant 0 : index
    %c1_40 = arith.constant 1 : index
    %c0_41 = arith.constant 0 : index
    %c0_42 = arith.constant 0 : index
    %79 = vector.load %arg5[%c0_38, %c0_39, %c1_40, %c0_41, %c0_42] : memref<1x1x9x2x2xf32, #tpu.memory_space<vmem>>, vector<1x1x1x2x2xf32>
    %80 = vector.shape_cast %79 : vector<1x1x1x2x2xf32> to vector<2x2xf32>
    %cst_43 = arith.constant 0.000000e+00 : f32
    %81 = vector.broadcast %cst_43 : f32 to vector<2x2xf32>
    %82 = arith.maximumf %78, %81 : vector<2x2xf32>
    %83 = arith.mulf %78, %68 : vector<2x2xf32>
    %84 = arith.subf %82, %83 : vector<2x2xf32>
    %85 = math.absf %78 : vector<2x2xf32>
    %cst_44 = arith.constant 0.000000e+00 : f32
    %86 = vector.broadcast %cst_44 : f32 to vector<2x2xf32>
    %87 = arith.subf %86, %85 : vector<2x2xf32>
    %88 = math.exp %87 : vector<2x2xf32>
    %89 = math.log1p %88 : vector<2x2xf32>
    %90 = arith.addf %84, %89 : vector<2x2xf32>
    %91 = arith.addf %58, %90 : vector<2x2xf32>
    %cst_45 = arith.constant 0.000000e+00 : f32
    %92 = vector.broadcast %cst_45 : f32 to vector<2x2xf32>
    %93 = arith.maximumf %80, %92 : vector<2x2xf32>
    %94 = arith.mulf %80, %76 : vector<2x2xf32>
    %95 = arith.subf %93, %94 : vector<2x2xf32>
    %96 = math.absf %80 : vector<2x2xf32>
    %cst_46 = arith.constant 0.000000e+00 : f32
    %97 = vector.broadcast %cst_46 : f32 to vector<2x2xf32>
    %98 = arith.subf %97, %96 : vector<2x2xf32>
    %99 = math.exp %98 : vector<2x2xf32>
    %100 = math.log1p %99 : vector<2x2xf32>
    %101 = arith.addf %95, %100 : vector<2x2xf32>
    %102 = arith.addf %91, %101 : vector<2x2xf32>
    %103 = vector.extract_strided_slice %4 {offsets = [0, 2], sizes = [2, 2], strides = [1, 1]} : vector<4x4xf32> to vector<2x2xf32>
    %104 = vector.extract_strided_slice %12 {offsets = [0, 2], sizes = [2, 2], strides = [1, 1]} : vector<4x4xf32> to vector<2x2xf32>
    %105 = arith.subf %13, %103 : vector<2x2xf32>
    %106 = math.absf %105 : vector<2x2xf32>
    %cst_47 = arith.constant 3.000000e-01 : f32
    %107 = vector.broadcast %cst_47 : f32 to vector<2x2xf32>
    %108 = arith.cmpf olt, %106, %107 : vector<2x2xf32>
    %109 = arith.extui %108 : vector<2x2xi1> to vector<2x2xi32>
    %110 = arith.sitofp %109 : vector<2x2xi32> to vector<2x2xf32>
    %cst_48 = arith.constant 8.000000e-01 : f32
    %111 = vector.broadcast %cst_48 : f32 to vector<2x2xf32>
    %112 = arith.mulf %110, %111 : vector<2x2xf32>
    %113 = arith.subf %13, %104 : vector<2x2xf32>
    %114 = math.absf %113 : vector<2x2xf32>
    %cst_49 = arith.constant 3.000000e-01 : f32
    %115 = vector.broadcast %cst_49 : f32 to vector<2x2xf32>
    %116 = arith.cmpf olt, %114, %115 : vector<2x2xf32>
    %117 = arith.extui %116 : vector<2x2xi1> to vector<2x2xi32>
    %118 = arith.sitofp %117 : vector<2x2xi32> to vector<2x2xf32>
    %cst_50 = arith.constant 8.000000e-01 : f32
    %119 = vector.broadcast %cst_50 : f32 to vector<2x2xf32>
    %120 = arith.mulf %118, %119 : vector<2x2xf32>
    %c0_51 = arith.constant 0 : index
    %c0_52 = arith.constant 0 : index
    %c2 = arith.constant 2 : index
    %c0_53 = arith.constant 0 : index
    %c0_54 = arith.constant 0 : index
    %121 = vector.load %arg4[%c0_51, %c0_52, %c2, %c0_53, %c0_54] : memref<1x1x9x2x2xf32, #tpu.memory_space<vmem>>, vector<1x1x1x2x2xf32>
    %122 = vector.shape_cast %121 : vector<1x1x1x2x2xf32> to vector<2x2xf32>
    %c0_55 = arith.constant 0 : index
    %c0_56 = arith.constant 0 : index
    %c2_57 = arith.constant 2 : index
    %c0_58 = arith.constant 0 : index
    %c0_59 = arith.constant 0 : index
    %123 = vector.load %arg5[%c0_55, %c0_56, %c2_57, %c0_58, %c0_59] : memref<1x1x9x2x2xf32, #tpu.memory_space<vmem>>, vector<1x1x1x2x2xf32>
    %124 = vector.shape_cast %123 : vector<1x1x1x2x2xf32> to vector<2x2xf32>
    %cst_60 = arith.constant 0.000000e+00 : f32
    %125 = vector.broadcast %cst_60 : f32 to vector<2x2xf32>
    %126 = arith.maximumf %122, %125 : vector<2x2xf32>
    %127 = arith.mulf %122, %112 : vector<2x2xf32>
    %128 = arith.subf %126, %127 : vector<2x2xf32>
    %129 = math.absf %122 : vector<2x2xf32>
    %cst_61 = arith.constant 0.000000e+00 : f32
    %130 = vector.broadcast %cst_61 : f32 to vector<2x2xf32>
    %131 = arith.subf %130, %129 : vector<2x2xf32>
    %132 = math.exp %131 : vector<2x2xf32>
    %133 = math.log1p %132 : vector<2x2xf32>
    %134 = arith.addf %128, %133 : vector<2x2xf32>
    %135 = arith.addf %102, %134 : vector<2x2xf32>
    %cst_62 = arith.constant 0.000000e+00 : f32
    %136 = vector.broadcast %cst_62 : f32 to vector<2x2xf32>
    %137 = arith.maximumf %124, %136 : vector<2x2xf32>
    %138 = arith.mulf %124, %120 : vector<2x2xf32>
    %139 = arith.subf %137, %138 : vector<2x2xf32>
    %140 = math.absf %124 : vector<2x2xf32>
    %cst_63 = arith.constant 0.000000e+00 : f32
    %141 = vector.broadcast %cst_63 : f32 to vector<2x2xf32>
    %142 = arith.subf %141, %140 : vector<2x2xf32>
    %143 = math.exp %142 : vector<2x2xf32>
    %144 = math.log1p %143 : vector<2x2xf32>
    %145 = arith.addf %139, %144 : vector<2x2xf32>
    %146 = arith.addf %135, %145 : vector<2x2xf32>
    %147 = vector.extract_strided_slice %4 {offsets = [1, 0], sizes = [2, 2], strides = [1, 1]} : vector<4x4xf32> to vector<2x2xf32>
    %148 = vector.extract_strided_slice %12 {offsets = [1, 0], sizes = [2, 2], strides = [1, 1]} : vector<4x4xf32> to vector<2x2xf32>
    %149 = arith.subf %13, %147 : vector<2x2xf32>
    %150 = math.absf %149 : vector<2x2xf32>
    %cst_64 = arith.constant 3.000000e-01 : f32
    %151 = vector.broadcast %cst_64 : f32 to vector<2x2xf32>
    %152 = arith.cmpf olt, %150, %151 : vector<2x2xf32>
    %153 = arith.extui %152 : vector<2x2xi1> to vector<2x2xi32>
    %154 = arith.sitofp %153 : vector<2x2xi32> to vector<2x2xf32>
    %cst_65 = arith.constant 8.000000e-01 : f32
    %155 = vector.broadcast %cst_65 : f32 to vector<2x2xf32>
    %156 = arith.mulf %154, %155 : vector<2x2xf32>
    %157 = arith.subf %13, %148 : vector<2x2xf32>
    %158 = math.absf %157 : vector<2x2xf32>
    %cst_66 = arith.constant 3.000000e-01 : f32
    %159 = vector.broadcast %cst_66 : f32 to vector<2x2xf32>
    %160 = arith.cmpf olt, %158, %159 : vector<2x2xf32>
    %161 = arith.extui %160 : vector<2x2xi1> to vector<2x2xi32>
    %162 = arith.sitofp %161 : vector<2x2xi32> to vector<2x2xf32>
    %cst_67 = arith.constant 8.000000e-01 : f32
    %163 = vector.broadcast %cst_67 : f32 to vector<2x2xf32>
    %164 = arith.mulf %162, %163 : vector<2x2xf32>
    %c0_68 = arith.constant 0 : index
    %c0_69 = arith.constant 0 : index
    %c3 = arith.constant 3 : index
    %c0_70 = arith.constant 0 : index
    %c0_71 = arith.constant 0 : index
    %165 = vector.load %arg4[%c0_68, %c0_69, %c3, %c0_70, %c0_71] : memref<1x1x9x2x2xf32, #tpu.memory_space<vmem>>, vector<1x1x1x2x2xf32>
    %166 = vector.shape_cast %165 : vector<1x1x1x2x2xf32> to vector<2x2xf32>
    %c0_72 = arith.constant 0 : index
    %c0_73 = arith.constant 0 : index
    %c3_74 = arith.constant 3 : index
    %c0_75 = arith.constant 0 : index
    %c0_76 = arith.constant 0 : index
    %167 = vector.load %arg5[%c0_72, %c0_73, %c3_74, %c0_75, %c0_76] : memref<1x1x9x2x2xf32, #tpu.memory_space<vmem>>, vector<1x1x1x2x2xf32>
    %168 = vector.shape_cast %167 : vector<1x1x1x2x2xf32> to vector<2x2xf32>
    %cst_77 = arith.constant 0.000000e+00 : f32
    %169 = vector.broadcast %cst_77 : f32 to vector<2x2xf32>
    %170 = arith.maximumf %166, %169 : vector<2x2xf32>
    %171 = arith.mulf %166, %156 : vector<2x2xf32>
    %172 = arith.subf %170, %171 : vector<2x2xf32>
    %173 = math.absf %166 : vector<2x2xf32>
    %cst_78 = arith.constant 0.000000e+00 : f32
    %174 = vector.broadcast %cst_78 : f32 to vector<2x2xf32>
    %175 = arith.subf %174, %173 : vector<2x2xf32>
    %176 = math.exp %175 : vector<2x2xf32>
    %177 = math.log1p %176 : vector<2x2xf32>
    %178 = arith.addf %172, %177 : vector<2x2xf32>
    %179 = arith.addf %146, %178 : vector<2x2xf32>
    %cst_79 = arith.constant 0.000000e+00 : f32
    %180 = vector.broadcast %cst_79 : f32 to vector<2x2xf32>
    %181 = arith.maximumf %168, %180 : vector<2x2xf32>
    %182 = arith.mulf %168, %164 : vector<2x2xf32>
    %183 = arith.subf %181, %182 : vector<2x2xf32>
    %184 = math.absf %168 : vector<2x2xf32>
    %cst_80 = arith.constant 0.000000e+00 : f32
    %185 = vector.broadcast %cst_80 : f32 to vector<2x2xf32>
    %186 = arith.subf %185, %184 : vector<2x2xf32>
    %187 = math.exp %186 : vector<2x2xf32>
    %188 = math.log1p %187 : vector<2x2xf32>
    %189 = arith.addf %183, %188 : vector<2x2xf32>
    %190 = arith.addf %179, %189 : vector<2x2xf32>
    %191 = vector.extract_strided_slice %4 {offsets = [1, 1], sizes = [2, 2], strides = [1, 1]} : vector<4x4xf32> to vector<2x2xf32>
    %192 = vector.extract_strided_slice %12 {offsets = [1, 1], sizes = [2, 2], strides = [1, 1]} : vector<4x4xf32> to vector<2x2xf32>
    %193 = arith.subf %13, %191 : vector<2x2xf32>
    %194 = math.absf %193 : vector<2x2xf32>
    %cst_81 = arith.constant 3.000000e-01 : f32
    %195 = vector.broadcast %cst_81 : f32 to vector<2x2xf32>
    %196 = arith.cmpf olt, %194, %195 : vector<2x2xf32>
    %197 = arith.extui %196 : vector<2x2xi1> to vector<2x2xi32>
    %198 = arith.sitofp %197 : vector<2x2xi32> to vector<2x2xf32>
    %cst_82 = arith.constant 8.000000e-01 : f32
    %199 = vector.broadcast %cst_82 : f32 to vector<2x2xf32>
    %200 = arith.mulf %198, %199 : vector<2x2xf32>
    %201 = arith.subf %13, %192 : vector<2x2xf32>
    %202 = math.absf %201 : vector<2x2xf32>
    %cst_83 = arith.constant 3.000000e-01 : f32
    %203 = vector.broadcast %cst_83 : f32 to vector<2x2xf32>
    %204 = arith.cmpf olt, %202, %203 : vector<2x2xf32>
    %205 = arith.extui %204 : vector<2x2xi1> to vector<2x2xi32>
    %206 = arith.sitofp %205 : vector<2x2xi32> to vector<2x2xf32>
    %cst_84 = arith.constant 8.000000e-01 : f32
    %207 = vector.broadcast %cst_84 : f32 to vector<2x2xf32>
    %208 = arith.mulf %206, %207 : vector<2x2xf32>
    %c0_85 = arith.constant 0 : index
    %c0_86 = arith.constant 0 : index
    %c4 = arith.constant 4 : index
    %c0_87 = arith.constant 0 : index
    %c0_88 = arith.constant 0 : index
    %209 = vector.load %arg4[%c0_85, %c0_86, %c4, %c0_87, %c0_88] : memref<1x1x9x2x2xf32, #tpu.memory_space<vmem>>, vector<1x1x1x2x2xf32>
    %210 = vector.shape_cast %209 : vector<1x1x1x2x2xf32> to vector<2x2xf32>
    %c0_89 = arith.constant 0 : index
    %c0_90 = arith.constant 0 : index
    %c4_91 = arith.constant 4 : index
    %c0_92 = arith.constant 0 : index
    %c0_93 = arith.constant 0 : index
    %211 = vector.load %arg5[%c0_89, %c0_90, %c4_91, %c0_92, %c0_93] : memref<1x1x9x2x2xf32, #tpu.memory_space<vmem>>, vector<1x1x1x2x2xf32>
    %212 = vector.shape_cast %211 : vector<1x1x1x2x2xf32> to vector<2x2xf32>
    %cst_94 = arith.constant 0.000000e+00 : f32
    %213 = vector.broadcast %cst_94 : f32 to vector<2x2xf32>
    %214 = arith.maximumf %210, %213 : vector<2x2xf32>
    %215 = arith.mulf %210, %200 : vector<2x2xf32>
    %216 = arith.subf %214, %215 : vector<2x2xf32>
    %217 = math.absf %210 : vector<2x2xf32>
    %cst_95 = arith.constant 0.000000e+00 : f32
    %218 = vector.broadcast %cst_95 : f32 to vector<2x2xf32>
    %219 = arith.subf %218, %217 : vector<2x2xf32>
    %220 = math.exp %219 : vector<2x2xf32>
    %221 = math.log1p %220 : vector<2x2xf32>
    %222 = arith.addf %216, %221 : vector<2x2xf32>
    %223 = arith.addf %190, %222 : vector<2x2xf32>
    %cst_96 = arith.constant 0.000000e+00 : f32
    %224 = vector.broadcast %cst_96 : f32 to vector<2x2xf32>
    %225 = arith.maximumf %212, %224 : vector<2x2xf32>
    %226 = arith.mulf %212, %208 : vector<2x2xf32>
    %227 = arith.subf %225, %226 : vector<2x2xf32>
    %228 = math.absf %212 : vector<2x2xf32>
    %cst_97 = arith.constant 0.000000e+00 : f32
    %229 = vector.broadcast %cst_97 : f32 to vector<2x2xf32>
    %230 = arith.subf %229, %228 : vector<2x2xf32>
    %231 = math.exp %230 : vector<2x2xf32>
    %232 = math.log1p %231 : vector<2x2xf32>
    %233 = arith.addf %227, %232 : vector<2x2xf32>
    %234 = arith.addf %223, %233 : vector<2x2xf32>
    %235 = vector.extract_strided_slice %4 {offsets = [1, 2], sizes = [2, 2], strides = [1, 1]} : vector<4x4xf32> to vector<2x2xf32>
    %236 = vector.extract_strided_slice %12 {offsets = [1, 2], sizes = [2, 2], strides = [1, 1]} : vector<4x4xf32> to vector<2x2xf32>
    %237 = arith.subf %13, %235 : vector<2x2xf32>
    %238 = math.absf %237 : vector<2x2xf32>
    %cst_98 = arith.constant 3.000000e-01 : f32
    %239 = vector.broadcast %cst_98 : f32 to vector<2x2xf32>
    %240 = arith.cmpf olt, %238, %239 : vector<2x2xf32>
    %241 = arith.extui %240 : vector<2x2xi1> to vector<2x2xi32>
    %242 = arith.sitofp %241 : vector<2x2xi32> to vector<2x2xf32>
    %cst_99 = arith.constant 8.000000e-01 : f32
    %243 = vector.broadcast %cst_99 : f32 to vector<2x2xf32>
    %244 = arith.mulf %242, %243 : vector<2x2xf32>
    %245 = arith.subf %13, %236 : vector<2x2xf32>
    %246 = math.absf %245 : vector<2x2xf32>
    %cst_100 = arith.constant 3.000000e-01 : f32
    %247 = vector.broadcast %cst_100 : f32 to vector<2x2xf32>
    %248 = arith.cmpf olt, %246, %247 : vector<2x2xf32>
    %249 = arith.extui %248 : vector<2x2xi1> to vector<2x2xi32>
    %250 = arith.sitofp %249 : vector<2x2xi32> to vector<2x2xf32>
    %cst_101 = arith.constant 8.000000e-01 : f32
    %251 = vector.broadcast %cst_101 : f32 to vector<2x2xf32>
    %252 = arith.mulf %250, %251 : vector<2x2xf32>
    %c0_102 = arith.constant 0 : index
    %c0_103 = arith.constant 0 : index
    %c5 = arith.constant 5 : index
    %c0_104 = arith.constant 0 : index
    %c0_105 = arith.constant 0 : index
    %253 = vector.load %arg4[%c0_102, %c0_103, %c5, %c0_104, %c0_105] : memref<1x1x9x2x2xf32, #tpu.memory_space<vmem>>, vector<1x1x1x2x2xf32>
    %254 = vector.shape_cast %253 : vector<1x1x1x2x2xf32> to vector<2x2xf32>
    %c0_106 = arith.constant 0 : index
    %c0_107 = arith.constant 0 : index
    %c5_108 = arith.constant 5 : index
    %c0_109 = arith.constant 0 : index
    %c0_110 = arith.constant 0 : index
    %255 = vector.load %arg5[%c0_106, %c0_107, %c5_108, %c0_109, %c0_110] : memref<1x1x9x2x2xf32, #tpu.memory_space<vmem>>, vector<1x1x1x2x2xf32>
    %256 = vector.shape_cast %255 : vector<1x1x1x2x2xf32> to vector<2x2xf32>
    %cst_111 = arith.constant 0.000000e+00 : f32
    %257 = vector.broadcast %cst_111 : f32 to vector<2x2xf32>
    %258 = arith.maximumf %254, %257 : vector<2x2xf32>
    %259 = arith.mulf %254, %244 : vector<2x2xf32>
    %260 = arith.subf %258, %259 : vector<2x2xf32>
    %261 = math.absf %254 : vector<2x2xf32>
    %cst_112 = arith.constant 0.000000e+00 : f32
    %262 = vector.broadcast %cst_112 : f32 to vector<2x2xf32>
    %263 = arith.subf %262, %261 : vector<2x2xf32>
    %264 = math.exp %263 : vector<2x2xf32>
    %265 = math.log1p %264 : vector<2x2xf32>
    %266 = arith.addf %260, %265 : vector<2x2xf32>
    %267 = arith.addf %234, %266 : vector<2x2xf32>
    %cst_113 = arith.constant 0.000000e+00 : f32
    %268 = vector.broadcast %cst_113 : f32 to vector<2x2xf32>
    %269 = arith.maximumf %256, %268 : vector<2x2xf32>
    %270 = arith.mulf %256, %252 : vector<2x2xf32>
    %271 = arith.subf %269, %270 : vector<2x2xf32>
    %272 = math.absf %256 : vector<2x2xf32>
    %cst_114 = arith.constant 0.000000e+00 : f32
    %273 = vector.broadcast %cst_114 : f32 to vector<2x2xf32>
    %274 = arith.subf %273, %272 : vector<2x2xf32>
    %275 = math.exp %274 : vector<2x2xf32>
    %276 = math.log1p %275 : vector<2x2xf32>
    %277 = arith.addf %271, %276 : vector<2x2xf32>
    %278 = arith.addf %267, %277 : vector<2x2xf32>
    %279 = vector.extract_strided_slice %4 {offsets = [2, 0], sizes = [2, 2], strides = [1, 1]} : vector<4x4xf32> to vector<2x2xf32>
    %280 = vector.extract_strided_slice %12 {offsets = [2, 0], sizes = [2, 2], strides = [1, 1]} : vector<4x4xf32> to vector<2x2xf32>
    %281 = arith.subf %13, %279 : vector<2x2xf32>
    %282 = math.absf %281 : vector<2x2xf32>
    %cst_115 = arith.constant 3.000000e-01 : f32
    %283 = vector.broadcast %cst_115 : f32 to vector<2x2xf32>
    %284 = arith.cmpf olt, %282, %283 : vector<2x2xf32>
    %285 = arith.extui %284 : vector<2x2xi1> to vector<2x2xi32>
    %286 = arith.sitofp %285 : vector<2x2xi32> to vector<2x2xf32>
    %cst_116 = arith.constant 8.000000e-01 : f32
    %287 = vector.broadcast %cst_116 : f32 to vector<2x2xf32>
    %288 = arith.mulf %286, %287 : vector<2x2xf32>
    %289 = arith.subf %13, %280 : vector<2x2xf32>
    %290 = math.absf %289 : vector<2x2xf32>
    %cst_117 = arith.constant 3.000000e-01 : f32
    %291 = vector.broadcast %cst_117 : f32 to vector<2x2xf32>
    %292 = arith.cmpf olt, %290, %291 : vector<2x2xf32>
    %293 = arith.extui %292 : vector<2x2xi1> to vector<2x2xi32>
    %294 = arith.sitofp %293 : vector<2x2xi32> to vector<2x2xf32>
    %cst_118 = arith.constant 8.000000e-01 : f32
    %295 = vector.broadcast %cst_118 : f32 to vector<2x2xf32>
    %296 = arith.mulf %294, %295 : vector<2x2xf32>
    %c0_119 = arith.constant 0 : index
    %c0_120 = arith.constant 0 : index
    %c6 = arith.constant 6 : index
    %c0_121 = arith.constant 0 : index
    %c0_122 = arith.constant 0 : index
    %297 = vector.load %arg4[%c0_119, %c0_120, %c6, %c0_121, %c0_122] : memref<1x1x9x2x2xf32, #tpu.memory_space<vmem>>, vector<1x1x1x2x2xf32>
    %298 = vector.shape_cast %297 : vector<1x1x1x2x2xf32> to vector<2x2xf32>
    %c0_123 = arith.constant 0 : index
    %c0_124 = arith.constant 0 : index
    %c6_125 = arith.constant 6 : index
    %c0_126 = arith.constant 0 : index
    %c0_127 = arith.constant 0 : index
    %299 = vector.load %arg5[%c0_123, %c0_124, %c6_125, %c0_126, %c0_127] : memref<1x1x9x2x2xf32, #tpu.memory_space<vmem>>, vector<1x1x1x2x2xf32>
    %300 = vector.shape_cast %299 : vector<1x1x1x2x2xf32> to vector<2x2xf32>
    %cst_128 = arith.constant 0.000000e+00 : f32
    %301 = vector.broadcast %cst_128 : f32 to vector<2x2xf32>
    %302 = arith.maximumf %298, %301 : vector<2x2xf32>
    %303 = arith.mulf %298, %288 : vector<2x2xf32>
    %304 = arith.subf %302, %303 : vector<2x2xf32>
    %305 = math.absf %298 : vector<2x2xf32>
    %cst_129 = arith.constant 0.000000e+00 : f32
    %306 = vector.broadcast %cst_129 : f32 to vector<2x2xf32>
    %307 = arith.subf %306, %305 : vector<2x2xf32>
    %308 = math.exp %307 : vector<2x2xf32>
    %309 = math.log1p %308 : vector<2x2xf32>
    %310 = arith.addf %304, %309 : vector<2x2xf32>
    %311 = arith.addf %278, %310 : vector<2x2xf32>
    %cst_130 = arith.constant 0.000000e+00 : f32
    %312 = vector.broadcast %cst_130 : f32 to vector<2x2xf32>
    %313 = arith.maximumf %300, %312 : vector<2x2xf32>
    %314 = arith.mulf %300, %296 : vector<2x2xf32>
    %315 = arith.subf %313, %314 : vector<2x2xf32>
    %316 = math.absf %300 : vector<2x2xf32>
    %cst_131 = arith.constant 0.000000e+00 : f32
    %317 = vector.broadcast %cst_131 : f32 to vector<2x2xf32>
    %318 = arith.subf %317, %316 : vector<2x2xf32>
    %319 = math.exp %318 : vector<2x2xf32>
    %320 = math.log1p %319 : vector<2x2xf32>
    %321 = arith.addf %315, %320 : vector<2x2xf32>
    %322 = arith.addf %311, %321 : vector<2x2xf32>
    %323 = vector.extract_strided_slice %4 {offsets = [2, 1], sizes = [2, 2], strides = [1, 1]} : vector<4x4xf32> to vector<2x2xf32>
    %324 = vector.extract_strided_slice %12 {offsets = [2, 1], sizes = [2, 2], strides = [1, 1]} : vector<4x4xf32> to vector<2x2xf32>
    %325 = arith.subf %13, %323 : vector<2x2xf32>
    %326 = math.absf %325 : vector<2x2xf32>
    %cst_132 = arith.constant 3.000000e-01 : f32
    %327 = vector.broadcast %cst_132 : f32 to vector<2x2xf32>
    %328 = arith.cmpf olt, %326, %327 : vector<2x2xf32>
    %329 = arith.extui %328 : vector<2x2xi1> to vector<2x2xi32>
    %330 = arith.sitofp %329 : vector<2x2xi32> to vector<2x2xf32>
    %cst_133 = arith.constant 8.000000e-01 : f32
    %331 = vector.broadcast %cst_133 : f32 to vector<2x2xf32>
    %332 = arith.mulf %330, %331 : vector<2x2xf32>
    %333 = arith.subf %13, %324 : vector<2x2xf32>
    %334 = math.absf %333 : vector<2x2xf32>
    %cst_134 = arith.constant 3.000000e-01 : f32
    %335 = vector.broadcast %cst_134 : f32 to vector<2x2xf32>
    %336 = arith.cmpf olt, %334, %335 : vector<2x2xf32>
    %337 = arith.extui %336 : vector<2x2xi1> to vector<2x2xi32>
    %338 = arith.sitofp %337 : vector<2x2xi32> to vector<2x2xf32>
    %cst_135 = arith.constant 8.000000e-01 : f32
    %339 = vector.broadcast %cst_135 : f32 to vector<2x2xf32>
    %340 = arith.mulf %338, %339 : vector<2x2xf32>
    %c0_136 = arith.constant 0 : index
    %c0_137 = arith.constant 0 : index
    %c7 = arith.constant 7 : index
    %c0_138 = arith.constant 0 : index
    %c0_139 = arith.constant 0 : index
    %341 = vector.load %arg4[%c0_136, %c0_137, %c7, %c0_138, %c0_139] : memref<1x1x9x2x2xf32, #tpu.memory_space<vmem>>, vector<1x1x1x2x2xf32>
    %342 = vector.shape_cast %341 : vector<1x1x1x2x2xf32> to vector<2x2xf32>
    %c0_140 = arith.constant 0 : index
    %c0_141 = arith.constant 0 : index
    %c7_142 = arith.constant 7 : index
    %c0_143 = arith.constant 0 : index
    %c0_144 = arith.constant 0 : index
    %343 = vector.load %arg5[%c0_140, %c0_141, %c7_142, %c0_143, %c0_144] : memref<1x1x9x2x2xf32, #tpu.memory_space<vmem>>, vector<1x1x1x2x2xf32>
    %344 = vector.shape_cast %343 : vector<1x1x1x2x2xf32> to vector<2x2xf32>
    %cst_145 = arith.constant 0.000000e+00 : f32
    %345 = vector.broadcast %cst_145 : f32 to vector<2x2xf32>
    %346 = arith.maximumf %342, %345 : vector<2x2xf32>
    %347 = arith.mulf %342, %332 : vector<2x2xf32>
    %348 = arith.subf %346, %347 : vector<2x2xf32>
    %349 = math.absf %342 : vector<2x2xf32>
    %cst_146 = arith.constant 0.000000e+00 : f32
    %350 = vector.broadcast %cst_146 : f32 to vector<2x2xf32>
    %351 = arith.subf %350, %349 : vector<2x2xf32>
    %352 = math.exp %351 : vector<2x2xf32>
    %353 = math.log1p %352 : vector<2x2xf32>
    %354 = arith.addf %348, %353 : vector<2x2xf32>
    %355 = arith.addf %322, %354 : vector<2x2xf32>
    %cst_147 = arith.constant 0.000000e+00 : f32
    %356 = vector.broadcast %cst_147 : f32 to vector<2x2xf32>
    %357 = arith.maximumf %344, %356 : vector<2x2xf32>
    %358 = arith.mulf %344, %340 : vector<2x2xf32>
    %359 = arith.subf %357, %358 : vector<2x2xf32>
    %360 = math.absf %344 : vector<2x2xf32>
    %cst_148 = arith.constant 0.000000e+00 : f32
    %361 = vector.broadcast %cst_148 : f32 to vector<2x2xf32>
    %362 = arith.subf %361, %360 : vector<2x2xf32>
    %363 = math.exp %362 : vector<2x2xf32>
    %364 = math.log1p %363 : vector<2x2xf32>
    %365 = arith.addf %359, %364 : vector<2x2xf32>
    %366 = arith.addf %355, %365 : vector<2x2xf32>
    %367 = vector.extract_strided_slice %4 {offsets = [2, 2], sizes = [2, 2], strides = [1, 1]} : vector<4x4xf32> to vector<2x2xf32>
    %368 = vector.extract_strided_slice %12 {offsets = [2, 2], sizes = [2, 2], strides = [1, 1]} : vector<4x4xf32> to vector<2x2xf32>
    %369 = arith.subf %13, %367 : vector<2x2xf32>
    %370 = math.absf %369 : vector<2x2xf32>
    %cst_149 = arith.constant 3.000000e-01 : f32
    %371 = vector.broadcast %cst_149 : f32 to vector<2x2xf32>
    %372 = arith.cmpf olt, %370, %371 : vector<2x2xf32>
    %373 = arith.extui %372 : vector<2x2xi1> to vector<2x2xi32>
    %374 = arith.sitofp %373 : vector<2x2xi32> to vector<2x2xf32>
    %cst_150 = arith.constant 8.000000e-01 : f32
    %375 = vector.broadcast %cst_150 : f32 to vector<2x2xf32>
    %376 = arith.mulf %374, %375 : vector<2x2xf32>
    %377 = arith.subf %13, %368 : vector<2x2xf32>
    %378 = math.absf %377 : vector<2x2xf32>
    %cst_151 = arith.constant 3.000000e-01 : f32
    %379 = vector.broadcast %cst_151 : f32 to vector<2x2xf32>
    %380 = arith.cmpf olt, %378, %379 : vector<2x2xf32>
    %381 = arith.extui %380 : vector<2x2xi1> to vector<2x2xi32>
    %382 = arith.sitofp %381 : vector<2x2xi32> to vector<2x2xf32>
    %cst_152 = arith.constant 8.000000e-01 : f32
    %383 = vector.broadcast %cst_152 : f32 to vector<2x2xf32>
    %384 = arith.mulf %382, %383 : vector<2x2xf32>
    %c0_153 = arith.constant 0 : index
    %c0_154 = arith.constant 0 : index
    %c8 = arith.constant 8 : index
    %c0_155 = arith.constant 0 : index
    %c0_156 = arith.constant 0 : index
    %385 = vector.load %arg4[%c0_153, %c0_154, %c8, %c0_155, %c0_156] : memref<1x1x9x2x2xf32, #tpu.memory_space<vmem>>, vector<1x1x1x2x2xf32>
    %386 = vector.shape_cast %385 : vector<1x1x1x2x2xf32> to vector<2x2xf32>
    %c0_157 = arith.constant 0 : index
    %c0_158 = arith.constant 0 : index
    %c8_159 = arith.constant 8 : index
    %c0_160 = arith.constant 0 : index
    %c0_161 = arith.constant 0 : index
    %387 = vector.load %arg5[%c0_157, %c0_158, %c8_159, %c0_160, %c0_161] : memref<1x1x9x2x2xf32, #tpu.memory_space<vmem>>, vector<1x1x1x2x2xf32>
    %388 = vector.shape_cast %387 : vector<1x1x1x2x2xf32> to vector<2x2xf32>
    %cst_162 = arith.constant 0.000000e+00 : f32
    %389 = vector.broadcast %cst_162 : f32 to vector<2x2xf32>
    %390 = arith.maximumf %386, %389 : vector<2x2xf32>
    %391 = arith.mulf %386, %376 : vector<2x2xf32>
    %392 = arith.subf %390, %391 : vector<2x2xf32>
    %393 = math.absf %386 : vector<2x2xf32>
    %cst_163 = arith.constant 0.000000e+00 : f32
    %394 = vector.broadcast %cst_163 : f32 to vector<2x2xf32>
    %395 = arith.subf %394, %393 : vector<2x2xf32>
    %396 = math.exp %395 : vector<2x2xf32>
    %397 = math.log1p %396 : vector<2x2xf32>
    %398 = arith.addf %392, %397 : vector<2x2xf32>
    %399 = arith.addf %366, %398 : vector<2x2xf32>
    %cst_164 = arith.constant 0.000000e+00 : f32
    %400 = vector.broadcast %cst_164 : f32 to vector<2x2xf32>
    %401 = arith.maximumf %388, %400 : vector<2x2xf32>
    %402 = arith.mulf %388, %384 : vector<2x2xf32>
    %403 = arith.subf %401, %402 : vector<2x2xf32>
    %404 = math.absf %388 : vector<2x2xf32>
    %cst_165 = arith.constant 0.000000e+00 : f32
    %405 = vector.broadcast %cst_165 : f32 to vector<2x2xf32>
    %406 = arith.subf %405, %404 : vector<2x2xf32>
    %407 = math.exp %406 : vector<2x2xf32>
    %408 = math.log1p %407 : vector<2x2xf32>
    %409 = arith.addf %403, %408 : vector<2x2xf32>
    %410 = arith.addf %399, %409 : vector<2x2xf32>
    %411 = arith.mulf %410, %1 : vector<2x2xf32>
    %412 = vector.shape_cast %411 : vector<2x2xf32> to vector<1x2x2xf32>
    %cst_166 = arith.constant dense<0.000000e+00> : vector<1xf32>
    %413 = vector.multi_reduction <add>, %412, %cst_166 [1, 2] : vector<1x2x2xf32> to vector<1xf32>
    %414 = vector.shape_cast %413 : vector<1xf32> to vector<1x1x1xf32>
    %415 = vector.extract %414[0, 0, 0] : f32 from vector<1x1x1xf32>
    %416 = vector.shape_cast %1 : vector<2x2xf32> to vector<1x2x2xf32>
    %cst_167 = arith.constant dense<0.000000e+00> : vector<1xf32>
    %417 = vector.multi_reduction <add>, %416, %cst_167 [1, 2] : vector<1x2x2xf32> to vector<1xf32>
    %418 = vector.shape_cast %417 : vector<1xf32> to vector<1x1x1xf32>
    %419 = vector.extract %418[0, 0, 0] : f32 from vector<1x1x1xf32>
    %cst_168 = arith.constant 9.000000e+00 : f32
    %420 = arith.mulf %419, %cst_168 : f32
    %421 = tpu.iota {dimensions = array<i32: 0>} : vector<8x128xi32>
    %c0_i32 = arith.constant 0 : i32
    %422 = vector.broadcast %c0_i32 : i32 to vector<8x128xi32>
    %423 = arith.cmpi eq, %421, %422 : vector<8x128xi32>
    %c1_i32_169 = arith.constant 1 : i32
    %424 = vector.broadcast %c1_i32_169 : i32 to vector<8x128xi32>
    %425 = arith.cmpi eq, %421, %424 : vector<8x128xi32>
    %cst_170 = arith.constant 0.000000e+00 : f32
    %426 = vector.broadcast %420 : f32 to vector<8x128xf32>
    %427 = vector.broadcast %cst_170 : f32 to vector<8x128xf32>
    %428 = arith.select %425, %426, %427 : vector<8x128xi1>, vector<8x128xf32>
    %429 = vector.broadcast %415 : f32 to vector<8x128xf32>
    %430 = arith.select %423, %429, %428 : vector<8x128xi1>, vector<8x128xf32>
    %c0_171 = arith.constant 0 : index
    %c0_172 = arith.constant 0 : index
    %c0_173 = arith.constant 0 : index
    %c0_174 = arith.constant 0 : index
    %431 = vector.load %arg6[%c0_171, %c0_172, %c0_173, %c0_174] : memref<1x1x8x128xf32, #tpu.memory_space<vmem>>, vector<1x1x8x128xf32>
    %432 = vector.shape_cast %431 : vector<1x1x8x128xf32> to vector<8x128xf32>
    %433 = vector.shape_cast %430 : vector<8x128xf32> to vector<1x1x8x128xf32>
    tpu.vector_store %arg6[%c0_171, %c0_172, %c0_173, %c0_174], %433 {strides = array<i32>} : memref<1x1x8x128xf32, #tpu.memory_space<vmem>>, vector<1x1x8x128xf32>,
    return
  }
  func.func @transform_0(%arg0: i32, %arg1: i32) -> (i32, i32, i32, i32) {
    %c0_i32 = arith.constant 0 : i32
    %c0_i32_0 = arith.constant 0 : i32
    %c0_i32_1 = arith.constant 0 : i32
    %c0_i32_2 = arith.constant 0 : i32
    return %arg0, %c0_i32, %c0_i32_0, %c0_i32_1 : i32, i32, i32, i32
  }
  func.func @transform_1(%arg0: i32, %arg1: i32) -> (i32, i32, i32, i32) {
    %c1_i32 = arith.constant 1 : i32
    %0 = arith.addi %arg1, %c1_i32 : i32
    %c0_i32 = arith.constant 0 : i32
    %c0_i32_0 = arith.constant 0 : i32
    %c0_i32_1 = arith.constant 0 : i32
    return %arg0, %0, %c0_i32, %c0_i32_0 : i32, i32, i32, i32
  }
  func.func @transform_2(%arg0: i32, %arg1: i32) -> (i32, i32, i32, i32, i32) {
    %c1_i32 = arith.constant 1 : i32
    %0 = arith.addi %arg1, %c1_i32 : i32
    %c0_i32 = arith.constant 0 : i32
    %c0_i32_0 = arith.constant 0 : i32
    %c0_i32_1 = arith.constant 0 : i32
    %c0_i32_2 = arith.constant 0 : i32
    return %arg0, %0, %c0_i32, %c0_i32_0, %c0_i32_1 : i32, i32, i32, i32, i32
  }
  func.func @transform_3(%arg0: i32, %arg1: i32) -> (i32, i32, i32, i32, i32) {
    %c1_i32 = arith.constant 1 : i32
    %0 = arith.addi %arg1, %c1_i32 : i32
    %c0_i32 = arith.constant 0 : i32
    %c0_i32_0 = arith.constant 0 : i32
    %c0_i32_1 = arith.constant 0 : i32
    %c0_i32_2 = arith.constant 0 : i32
    return %arg0, %0, %c0_i32, %c0_i32_0, %c0_i32_1 : i32, i32, i32, i32, i32
  }
  func.func @transform_4(%arg0: i32, %arg1: i32) -> (i32, i32, i32, i32) {
    %c0_i32 = arith.constant 0 : i32
    %c0_i32_0 = arith.constant 0 : i32
    %c0_i32_1 = arith.constant 0 : i32
    return %arg0, %arg1, %c0_i32, %c0_i32_0 : i32, i32, i32, i32
  }
}

</mosaic_0001>

<llo_original>
// kernel: full_model_vmd_forward.6
$region0: #{full_model_vmd_forward.6}
  #allocation0 [shape = 'u32[]', space=smem, size = 0x4, offset = 0x4, fixed_abs, tag = 'smem constant byte address 0x4 - core index']
  #allocation1 [shape = 'u32[144,128]{1,0:T(1,128)}', space=vmem, size = 0x12000, scoped, tag = 'internal scratch']
  #allocation2 [shape = 'f32[8]{0:T(128)}', space=smem, size = 0x200, scoped, tag = 'scratch operand']
  #allocation3 [shape = 'f32[8,16]{1,0:T(8,128)}', space=vmem, size = 0x1000, scoped, tag = 'scratch operand']
  %s0 = inlined_call_operand.vmem [shape: f32[2,5,1,16,16], index: 0, kind: input, shape index: {}, may-alias: {0,6}]
  %s1 = inlined_call_operand.vmem [shape: f32[2,5,1,16,16], index: 1, kind: input, shape index: {}, may-alias: {1,7}]
  %s2 = inlined_call_operand.vmem [shape: f32[2,5,1,16,16], index: 2, kind: input, shape index: {}, may-alias: {2,8}]
  %s3 = inlined_call_operand.vmem [shape: bf16[2,5,3,16,16], index: 3, kind: input, shape index: {}]
  %s4 = inlined_call_operand.vmem [shape: bf16[2,5,3,16,16], index: 4, kind: input, shape index: {}]
  %s5 = inlined_call_operand.vmem [shape: bf16[2,5,3,16,16], index: 5, kind: input, shape index: {}]
  %s6 = inlined_call_operand.vmem [shape: f32[2,5,1,16,16], index: 6, kind: input, shape index: {}, may-alias: {0,6}]
  %s7 = inlined_call_operand.vmem [shape: f32[2,5,1,16,16], index: 7, kind: input, shape index: {}, may-alias: {1,7}]
  %s8 = inlined_call_operand.vmem [shape: f32[2,5,1,16,16], index: 8, kind: input, shape index: {}, may-alias: {2,8}]
  %s9 = inlined_call_operand.hbm [shape: f32[2,5,1,16,16], index: 9, kind: output, shape index: {0}]
  %s10 = inlined_call_operand.hbm [shape: bf16[2,5,3,16,16], index: 10, kind: output, shape index: {1}]
  %s11 = inlined_call_operand.vmem [shape: f32[5,8,128], index: 11, kind: output, shape index: {2}]
  %12 = xla_tuple %s9, %s10, %s11
  %s13 = sld [smem:[#allocation0]]
  $region220: #{full_model_vmd_forward.6} parent=0
    _
  %s15 = ssub.s32 1, %s13
  %s16 = scalar_select 0, %s15, %s13
  $region1: #{full_model_vmd_forward.6} parent=0
    #allocation4 [shape = 'u8[12288]{0}', space=vmem, size = 0x3000, scoped, tag = 'input window, operand 3']
    #allocation5 [shape = 'u8[12288]{0}', space=vmem, size = 0x3000, scoped, tag = 'input window, operand 4']
    #allocation6 [shape = 'u8[12288]{0}', space=vmem, size = 0x3000, scoped, tag = 'input window, operand 5']
    #allocation7 [shape = 'u8[8192]{0}', space=vmem, size = 0x2000, scoped, tag = 'output window, operand 0']
    #allocation8 [shape = 's32[2]{0}', space=sflag, size = 0x8, scoped, tag = 'scoped memory for full_model_vmd_forward.6']
    #allocation9 [shape = 'u8[12288]{0}', space=vmem, size = 0x3000, scoped, tag = 'output window, operand 1']
    #allocation10 [shape = 's32[2]{0}', space=sflag, size = 0x8, scoped, tag = 'scoped memory for full_model_vmd_forward.6']
    %17 = vsyncpa [#allocation8], 0
    %s18 = scalar_lea.sflag [#allocation8], 1
    %19 = vsyncpa %s18, 0
    %20 = vsyncpa [#allocation10], 0
    %s21 = scalar_lea.sflag [#allocation10], 1
    %22 = vsyncpa %s21, 0
    loop: start=0, step=1, limit=22
    $region2: #{full_model_vmd_forward.6} parent=1 // loop_pre_header
      _
    $region3: #{full_model_vmd_forward.6} parent=1 // loop_header
      %s24 = sphi 0, %s28
      %p25 = scmp.ge.s32.totalorder %s24, 22
      %s31 = sphi 0, %s50
      %s32 = sphi 0, %s46
      %s33 = sphi 0, %s42
      %s34 = sphi 0, %s31
      %s35 = sphi 0, %s32
      %s36 = sphi 0, %s33
      %s37 = sphi 0, %s34
      %s38 = sphi 0, %s35
      %s39 = sphi 0, %s36
      %s57 = sphi 0, %s59
      %s60 = sphi 0, %s57
      %s61 = sphi 0, %s60
      %s77 = sphi 0, %s61
      %s87 = sphi 0, %s89
      %s90 = sphi 0, %s87
      %s91 = sphi 0, %s90
      %s107 = sphi 0, %s91
      %s117 = sphi 0, %s119
      %s120 = sphi 0, %s117
      %s121 = sphi 0, %s120
      %s137 = sphi 0, %s121
      %s147 = sphi 0, %s149
      %s150 = sphi 0, %s147
      %s151 = sphi 0, %s150
      %s167 = sphi 0, %s151
      %s177 = sphi 0, %s179
      %s180 = sphi 0, %s177
      %s181 = sphi 0, %s180
      %s197 = sphi 0, %s181
      %s207 = sphi 0, %s209
      %s210 = sphi 0, %s207
      %s211 = sphi 0, %s210
      %s227 = sphi 0, %s211
      %s243 = sphi 0, %s245
      %s246 = sphi 0, %s243
      %s247 = sphi 0, %s246
      %s263 = sphi 0, %s247
      %s279 = sphi 0, %s281
      %s282 = sphi 0, %s279
      %s283 = sphi 0, %s282
      %s299 = sphi 0, %s283
      %s315 = sphi 0, %s317
      %s318 = sphi 0, %s315
      %s319 = sphi 0, %s318
      %s335 = sphi 0, %s319
      %s345 = sphi 0, %s347
      %s348 = sphi 0, %s345
      %s349 = sphi 0, %s348
      %s365 = sphi 0, %s349
      %s375 = sphi 0, %s377
      %s378 = sphi 0, %s375
      %s379 = sphi 0, %s378
      %s395 = sphi 0, %s379
      %s401 = sphi 0, %s403
      %s404 = sphi 0, %s401
      %s405 = sphi 0, %s404
      %s421 = sphi 0, %s405
    $region4: #{full_model_vmd_forward.6} parent=1 // loop_header_branch
      %27 = sbr.rel (%p25) target = $region8
    $region5: #{full_model_vmd_forward.6} parent=1 // loop_body
      %s29 = ssub.s32 %s24, 1
      %s30 = ssub.s32 %s24, 2
      %s40 = sadd.s32 1, %s33
      %p41 = scmp.ge.s32.totalorder %s40, 2
      %s42 = scalar_select %p41, 0, %s40
      %s43 = sadd.s32 1, %s32
      %s44 = scalar_select %p41, %s43, %s32
      %p45 = scmp.ge.s32.totalorder %s44, 2
      %s46 = scalar_select %p45, 0, %s44
      %s47 = sadd.s32 1, %s31
      %s48 = scalar_select %p45, %s47, %s31
      %p49 = scmp.ge.s32.totalorder %s48, 5
      %s50 = scalar_select %p49, 0, %s48
      %s51 = ssub.s32 %s32, %s46
      %s52 = ssub.s32 %s31, %s50
      %s53 = sor.u32 %s51, %s52
      %s54 = ssub.s32 %s33, %s42
      %s55 = sor.u32 %s53, %s54
      %p56 = scmp.eq.s32.totalorder %s55, 0
      %s58 = sadd.s32 %s57, 1
      %s59 = scalar_select %p56, %s57, %s58
      %p62 = pneg %p56
      %p63 = scmp.eq.s32.totalorder %s24, 19
      %p64 = por %p62, %p63
      %p65 = scmp.ne.s32.totalorder %s57, %s60
      %p66 = scmp.eq.s32.totalorder %s24, 0
      %p67 = por %p65, %p66
      %p68 = scmp.ne.s32.totalorder %s57, %s60
      %p69 = scmp.eq.s32.totalorder %s29, 19
      %p70 = por %p68, %p69
      %p71 = scmp.ne.s32.totalorder %s60, %s61
      %p72 = scmp.eq.s32.totalorder %s29, 0
      %p73 = por %p71, %p72
      %p74 = scmp.ne.s32.totalorder %s60, %s61
      %p75 = scmp.eq.s32.totalorder %s30, 19
      %p76 = por %p74, %p75
      %p78 = scmp.ne.s32.totalorder %s61, %s77
      %p79 = scmp.eq.s32.totalorder %s30, 0
      %p80 = por %p78, %p79
      %s81 = ssub.s32 %s32, %s46
      %s82 = ssub.s32 %s31, %s50
      %s83 = sor.u32 %s81, %s82
      %s84 = ssub.s32 %s33, %s42
      %s85 = sor.u32 %s83, %s84
      %p86 = scmp.eq.s32.totalorder %s85, 0
      %s88 = sadd.s32 %s87, 1
      %s89 = scalar_select %p86, %s87, %s88
      %p92 = pneg %p86
      %p93 = scmp.eq.s32.totalorder %s24, 19
      %p94 = por %p92, %p93
      %p95 = scmp.ne.s32.totalorder %s87, %s90
      %p96 = scmp.eq.s32.totalorder %s24, 0
      %p97 = por %p95, %p96
      %p98 = scmp.ne.s32.totalorder %s87, %s90
      %p99 = scmp.eq.s32.totalorder %s29, 19
      %p100 = por %p98, %p99
      %p101 = scmp.ne.s32.totalorder %s90, %s91
      %p102 = scmp.eq.s32.totalorder %s29, 0
      %p103 = por %p101, %p102
      %p104 = scmp.ne.s32.totalorder %s90, %s91
      %p105 = scmp.eq.s32.totalorder %s30, 19
      %p106 = por %p104, %p105
      %p108 = scmp.ne.s32.totalorder %s91, %s107
      %p109 = scmp.eq.s32.totalorder %s30, 0
      %p110 = por %p108, %p109
      %s111 = ssub.s32 %s32, %s46
      %s112 = ssub.s32 %s31, %s50
      %s113 = sor.u32 %s111, %s112
      %s114 = ssub.s32 %s33, %s42
      %s115 = sor.u32 %s113, %s114
      %p116 = scmp.eq.s32.totalorder %s115, 0
      %s118 = sadd.s32 %s117, 1
      %s119 = scalar_select %p116, %s117, %s118
      %p122 = pneg %p116
      %p123 = scmp.eq.s32.totalorder %s24, 19
      %p124 = por %p122, %p123
      %p125 = scmp.ne.s32.totalorder %s117, %s120
      %p126 = scmp.eq.s32.totalorder %s24, 0
      %p127 = por %p125, %p126
      %p128 = scmp.ne.s32.totalorder %s117, %s120
      %p129 = scmp.eq.s32.totalorder %s29, 19
      %p130 = por %p128, %p129
      %p131 = scmp.ne.s32.totalorder %s120, %s121
      %p132 = scmp.eq.s32.totalorder %s29, 0
      %p133 = por %p131, %p132
      %p134 = scmp.ne.s32.totalorder %s120, %s121
      %p135 = scmp.eq.s32.totalorder %s30, 19
      %p136 = por %p134, %p135
      %p138 = scmp.ne.s32.totalorder %s121, %s137
      %p139 = scmp.eq.s32.totalorder %s30, 0
      %p140 = por %p138, %p139
      %s141 = ssub.s32 %s32, %s46
      %s142 = ssub.s32 %s31, %s50
      %s143 = sor.u32 %s141, %s142
      %s144 = ssub.s32 %s33, %s42
      %s145 = sor.u32 %s143, %s144
      %p146 = scmp.eq.s32.totalorder %s145, 0
      %s148 = sadd.s32 %s147, 1
      %s149 = scalar_select %p146, %s147, %s148
      %p152 = pneg %p146
      %p153 = scmp.eq.s32.totalorder %s24, 19
      %p154 = por %p152, %p153
      %p155 = scmp.ne.s32.totalorder %s147, %s150
      %p156 = scmp.eq.s32.totalorder %s24, 0
      %p157 = por %p155, %p156
      %p158 = scmp.ne.s32.totalorder %s147, %s150
      %p159 = scmp.eq.s32.totalorder %s29, 19
      %p160 = por %p158, %p159
      %p161 = scmp.ne.s32.totalorder %s150, %s151
      %p162 = scmp.eq.s32.totalorder %s29, 0
      %p163 = por %p161, %p162
      %p164 = scmp.ne.s32.totalorder %s150, %s151
      %p165 = scmp.eq.s32.totalorder %s30, 19
      %p166 = por %p164, %p165
      %p168 = scmp.ne.s32.totalorder %s151, %s167
      %p169 = scmp.eq.s32.totalorder %s30, 0
      %p170 = por %p168, %p169
      %s171 = ssub.s32 %s32, %s46
      %s172 = ssub.s32 %s31, %s50
      %s173 = sor.u32 %s171, %s172
      %s174 = ssub.s32 %s33, %s42
      %s175 = sor.u32 %s173, %s174
      %p176 = scmp.eq.s32.totalorder %s175, 0
      %s178 = sadd.s32 %s177, 1
      %s179 = scalar_select %p176, %s177, %s178
      %p182 = pneg %p176
      %p183 = scmp.eq.s32.totalorder %s24, 19
      %p184 = por %p182, %p183
      %p185 = scmp.ne.s32.totalorder %s177, %s180
      %p186 = scmp.eq.s32.totalorder %s24, 0
      %p187 = por %p185, %p186
      %p188 = scmp.ne.s32.totalorder %s177, %s180
      %p189 = scmp.eq.s32.totalorder %s29, 19
      %p190 = por %p188, %p189
      %p191 = scmp.ne.s32.totalorder %s180, %s181
      %p192 = scmp.eq.s32.totalorder %s29, 0
      %p193 = por %p191, %p192
      %p194 = scmp.ne.s32.totalorder %s180, %s181
      %p195 = scmp.eq.s32.totalorder %s30, 19
      %p196 = por %p194, %p195
      %p198 = scmp.ne.s32.totalorder %s181, %s197
      %p199 = scmp.eq.s32.totalorder %s30, 0
      %p200 = por %p198, %p199
      %s201 = ssub.s32 %s32, %s46
      %s202 = ssub.s32 %s31, %s50
      %s203 = sor.u32 %s201, %s202
      %s204 = ssub.s32 %s33, %s42
      %s205 = sor.u32 %s203, %s204
      %p206 = scmp.eq.s32.totalorder %s205, 0
      %s208 = sadd.s32 %s207, 1
      %s209 = scalar_select %p206, %s207, %s208
      %p212 = pneg %p206
      %p213 = scmp.eq.s32.totalorder %s24, 19
      %p214 = por %p212, %p213
      %p215 = scmp.ne.s32.totalorder %s207, %s210
      %p216 = scmp.eq.s32.totalorder %s24, 0
      %p217 = por %p215, %p216
      %p218 = scmp.ne.s32.totalorder %s207, %s210
      %p219 = scmp.eq.s32.totalorder %s29, 19
      %p220 = por %p218, %p219
      %p221 = scmp.ne.s32.totalorder %s210, %s211
      %p222 = scmp.eq.s32.totalorder %s29, 0
      %p223 = por %p221, %p222
      %p224 = scmp.ne.s32.totalorder %s210, %s211
      %p225 = scmp.eq.s32.totalorder %s30, 19
      %p226 = por %p224, %p225
      %p228 = scmp.ne.s32.totalorder %s211, %s227
      %p229 = scmp.eq.s32.totalorder %s30, 0
      %p230 = por %p228, %p229
      %s231 = sadd.s32 %s31, 1
      %p232 = scmp.lt.s32.totalorder %s231, 4
      %s233 = scalar_select %p232, %s231, 4
      %s234 = sadd.s32 %s50, 1
      %p235 = scmp.lt.s32.totalorder %s234, 4
      %s236 = scalar_select %p235, %s234, 4
      %s237 = ssub.s32 %s32, %s46
      %s238 = ssub.s32 %s233, %s236
      %s239 = sor.u32 %s237, %s238
      %s240 = ssub.s32 %s33, %s42
      %s241 = sor.u32 %s239, %s240
      %p242 = scmp.eq.s32.totalorder %s241, 0
      %s244 = sadd.s32 %s243, 1
      %s245 = scalar_select %p242, %s243, %s244
      %p248 = pneg %p242
      %p249 = scmp.eq.s32.totalorder %s24, 19
      %p250 = por %p248, %p249
      %p251 = scmp.ne.s32.totalorder %s243, %s246
      %p252 = scmp.eq.s32.totalorder %s24, 0
      %p253 = por %p251, %p252
      %p254 = scmp.ne.s32.totalorder %s243, %s246
      %p255 = scmp.eq.s32.totalorder %s29, 19
      %p256 = por %p254, %p255
      %p257 = scmp.ne.s32.totalorder %s246, %s247
      %p258 = scmp.eq.s32.totalorder %s29, 0
      %p259 = por %p257, %p258
      %p260 = scmp.ne.s32.totalorder %s246, %s247
      %p261 = scmp.eq.s32.totalorder %s30, 19
      %p262 = por %p260, %p261
      %p264 = scmp.ne.s32.totalorder %s247, %s263
      %p265 = scmp.eq.s32.totalorder %s30, 0
      %p266 = por %p264, %p265
      %s267 = sadd.s32 %s31, 1
      %p268 = scmp.lt.s32.totalorder %s267, 4
      %s269 = scalar_select %p268, %s267, 4
      %s270 = sadd.s32 %s50, 1
      %p271 = scmp.lt.s32.totalorder %s270, 4
      %s272 = scalar_select %p271, %s270, 4
      %s273 = ssub.s32 %s32, %s46
      %s274 = ssub.s32 %s269, %s272
      %s275 = sor.u32 %s273, %s274
      %s276 = ssub.s32 %s33, %s42
      %s277 = sor.u32 %s275, %s276
      %p278 = scmp.eq.s32.totalorder %s277, 0
      %s280 = sadd.s32 %s279, 1
      %s281 = scalar_select %p278, %s279, %s280
      %p284 = pneg %p278
      %p285 = scmp.eq.s32.totalorder %s24, 19
      %p286 = por %p284, %p285
      %p287 = scmp.ne.s32.totalorder %s279, %s282
      %p288 = scmp.eq.s32.totalorder %s24, 0
      %p289 = por %p287, %p288
      %p290 = scmp.ne.s32.totalorder %s279, %s282
      %p291 = scmp.eq.s32.totalorder %s29, 19
      %p292 = por %p290, %p291
      %p293 = scmp.ne.s32.totalorder %s282, %s283
      %p294 = scmp.eq.s32.totalorder %s29, 0
      %p295 = por %p293, %p294
      %p296 = scmp.ne.s32.totalorder %s282, %s283
      %p297 = scmp.eq.s32.totalorder %s30, 19
      %p298 = por %p296, %p297
      %p300 = scmp.ne.s32.totalorder %s283, %s299
      %p301 = scmp.eq.s32.totalorder %s30, 0
      %p302 = por %p300, %p301
      %s303 = sadd.s32 %s31, 1
      %p304 = scmp.lt.s32.totalorder %s303, 4
      %s305 = scalar_select %p304, %s303, 4
      %s306 = sadd.s32 %s50, 1
      %p307 = scmp.lt.s32.totalorder %s306, 4
      %s308 = scalar_select %p307, %s306, 4
      %s309 = ssub.s32 %s32, %s46
      %s310 = ssub.s32 %s305, %s308
      %s311 = sor.u32 %s309, %s310
      %s312 = ssub.s32 %s33, %s42
      %s313 = sor.u32 %s311, %s312
      %p314 = scmp.eq.s32.totalorder %s313, 0
      %s316 = sadd.s32 %s315, 1
      %s317 = scalar_select %p314, %s315, %s316
      %p320 = pneg %p314
      %p321 = scmp.eq.s32.totalorder %s24, 19
      %p322 = por %p320, %p321
      %p323 = scmp.ne.s32.totalorder %s315, %s318
      %p324 = scmp.eq.s32.totalorder %s24, 0
      %p325 = por %p323, %p324
      %p326 = scmp.ne.s32.totalorder %s315, %s318
      %p327 = scmp.eq.s32.totalorder %s29, 19
      %p328 = por %p326, %p327
      %p329 = scmp.ne.s32.totalorder %s318, %s319
      %p330 = scmp.eq.s32.totalorder %s29, 0
      %p331 = por %p329, %p330
      %p332 = scmp.ne.s32.totalorder %s318, %s319
      %p333 = scmp.eq.s32.totalorder %s30, 19
      %p334 = por %p332, %p333
      %p336 = scmp.ne.s32.totalorder %s319, %s335
      %p337 = scmp.eq.s32.totalorder %s30, 0
      %p338 = por %p336, %p337
      %s339 = ssub.s32 %s32, %s46
      %s340 = ssub.s32 %s31, %s50
      %s341 = sor.u32 %s339, %s340
      %s342 = ssub.s32 %s33, %s42
      %s343 = sor.u32 %s341, %s342
      %p344 = scmp.eq.s32.totalorder %s343, 0
      %s346 = sadd.s32 %s345, 1
      %s347 = scalar_select %p344, %s345, %s346
      %p350 = pneg %p344
      %p351 = scmp.eq.s32.totalorder %s24, 19
      %p352 = por %p350, %p351
      %p353 = scmp.ne.s32.totalorder %s345, %s348
      %p354 = scmp.eq.s32.totalorder %s24, 0
      %p355 = por %p353, %p354
      %p356 = scmp.ne.s32.totalorder %s345, %s348
      %p357 = scmp.eq.s32.totalorder %s29, 19
      %p358 = por %p356, %p357
      %p359 = scmp.ne.s32.totalorder %s348, %s349
      %p360 = scmp.eq.s32.totalorder %s29, 0
      %p361 = por %p359, %p360
      %p362 = scmp.ne.s32.totalorder %s348, %s349
      %p363 = scmp.eq.s32.totalorder %s30, 19
      %p364 = por %p362, %p363
      %p366 = scmp.ne.s32.totalorder %s349, %s365
      %p367 = scmp.eq.s32.totalorder %s30, 0
      %p368 = por %p366, %p367
      %s369 = ssub.s32 %s32, %s46
      %s370 = ssub.s32 %s31, %s50
      %s371 = sor.u32 %s369, %s370
      %s372 = ssub.s32 %s33, %s42
      %s373 = sor.u32 %s371, %s372
      %p374 = scmp.eq.s32.totalorder %s373, 0
      %s376 = sadd.s32 %s375, 1
      %s377 = scalar_select %p374, %s375, %s376
      %p380 = pneg %p374
      %p381 = scmp.eq.s32.totalorder %s24, 19
      %p382 = por %p380, %p381
      %p383 = scmp.ne.s32.totalorder %s375, %s378
      %p384 = scmp.eq.s32.totalorder %s24, 0
      %p385 = por %p383, %p384
      %p386 = scmp.ne.s32.totalorder %s375, %s378
      %p387 = scmp.eq.s32.totalorder %s29, 19
      %p388 = por %p386, %p387
      %p389 = scmp.ne.s32.totalorder %s378, %s379
      %p390 = scmp.eq.s32.totalorder %s29, 0
      %p391 = por %p389, %p390
      %p392 = scmp.ne.s32.totalorder %s378, %s379
      %p393 = scmp.eq.s32.totalorder %s30, 19
      %p394 = por %p392, %p393
      %p396 = scmp.ne.s32.totalorder %s379, %s395
      %p397 = scmp.eq.s32.totalorder %s30, 0
      %p398 = por %p396, %p397
      %s399 = ssub.s32 %s31, %s50
      %p400 = scmp.eq.s32.totalorder %s399, 0
      %s402 = sadd.s32 %s401, 1
      %s403 = scalar_select %p400, %s401, %s402
      %p406 = pneg %p400
      %p407 = scmp.eq.s32.totalorder %s24, 19
      %p408 = por %p406, %p407
      %p409 = scmp.ne.s32.totalorder %s401, %s404
      %p410 = scmp.eq.s32.totalorder %s24, 0
      %p411 = por %p409, %p410
      %p412 = scmp.ne.s32.totalorder %s401, %s404
      %p413 = scmp.eq.s32.totalorder %s29, 19
      %p414 = por %p412, %p413
      %p415 = scmp.ne.s32.totalorder %s404, %s405
      %p416 = scmp.eq.s32.totalorder %s29, 0
      %p417 = por %p415, %p416
      %p418 = scmp.ne.s32.totalorder %s404, %s405
      %p419 = scmp.eq.s32.totalorder %s30, 19
      %p420 = por %p418, %p419
      %p422 = scmp.ne.s32.totalorder %s405, %s421
      %p423 = scmp.eq.s32.totalorder %s30, 0
      %p424 = por %p422, %p423
      %p425 = scmp.le.s32.totalorder 1, %s24
      %p426 = scmp.lt.s32.totalorder %s24, 21
      %p427 = pnand %p425, %p426
      %p428 = pneg %p427
      // Predicated region
      $region9: #{full_model_vmd_forward.6} parent=5 // pred_check
        _
      $region10: #{full_model_vmd_forward.6} parent=5 // pred_check_branch
        %430 = sbr.rel (%p427) target = $region12
      $region11: #{full_model_vmd_forward.6} parent=5 // pred_region
        %s431 = ssub.s32 %s24, 1
      $region12: #{full_model_vmd_forward.6} parent=5 // pred_fallthru
        _
      %p432 = scmp.lt.s32.totalorder %s24, 20
      // Predicated region
      $region13: #{full_model_vmd_forward.6} parent=5 // pred_check
        %p433 = pneg %p432
      $region14: #{full_model_vmd_forward.6} parent=5 // pred_check_branch
        %435 = sbr.rel (%p433) target = $region16
      $region15: #{full_model_vmd_forward.6} parent=5 // pred_region
        // Predicated region
        $region17: #{full_model_vmd_forward.6} parent=15 // pred_check
          %p436 = pneg %p67
        $region18: #{full_model_vmd_forward.6} parent=15 // pred_check_branch
          %438 = sbr.rel (%p436) target = $region20
        $region19: #{full_model_vmd_forward.6} parent=15 // pred_region
          %p439 = scmp.lt.s32.totalorder %s32, 1
          %s440 = scalar_select %p439, %s32, 1
          %p441 = scmp.lt.s32.totalorder %s31, 4
          %s442 = scalar_select %p441, %s31, 4
          %p443 = scmp.lt.s32.totalorder %s33, 1
          %s444 = scalar_select %p443, %s33, 1
          %s445 = smul.addr %s442, 2
          %s446 = sadd.s32 %s444, %s445
          %s447 = smul.addr %s440, 10
          %s448 = sadd.s32 %s446, %s447
          %s449 = smul.addr %s448, 8
          %s450 = scalar_lea.vmem %s0, %s449
        $region20: #{full_model_vmd_forward.6} parent=15 // pred_fallthru
          _
        // Predicated region
        $region21: #{full_model_vmd_forward.6} parent=15 // pred_check
          %p451 = pneg %p97
        $region22: #{full_model_vmd_forward.6} parent=15 // pred_check_branch
          %453 = sbr.rel (%p451) target = $region24
        $region23: #{full_model_vmd_forward.6} parent=15 // pred_region
          %p454 = scmp.lt.s32.totalorder %s32, 1
          %s455 = scalar_select %p454, %s32, 1
          %p456 = scmp.lt.s32.totalorder %s31, 4
          %s457 = scalar_select %p456, %s31, 4
          %p458 = scmp.lt.s32.totalorder %s33, 1
          %s459 = scalar_select %p458, %s33, 1
          %s460 = smul.addr %s457, 2
          %s461 = sadd.s32 %s459, %s460
          %s462 = smul.addr %s455, 10
          %s463 = sadd.s32 %s461, %s462
          %s464 = smul.addr %s463, 8
          %s465 = scalar_lea.vmem %s1, %s464
        $region24: #{full_model_vmd_forward.6} parent=15 // pred_fallthru
          _
        // Predicated region
        $region25: #{full_model_vmd_forward.6} parent=15 // pred_check
          %p466 = pneg %p127
        $region26: #{full_model_vmd_forward.6} parent=15 // pred_check_branch
          %468 = sbr.rel (%p466) target = $region28
        $region27: #{full_model_vmd_forward.6} parent=15 // pred_region
          %p469 = scmp.lt.s32.totalorder %s32, 1
          %s470 = scalar_select %p469, %s32, 1
          %p471 = scmp.lt.s32.totalorder %s31, 4
          %s472 = scalar_select %p471, %s31, 4
          %p473 = scmp.lt.s32.totalorder %s33, 1
          %s474 = scalar_select %p473, %s33, 1
          %s475 = smul.addr %s472, 2
          %s476 = sadd.s32 %s474, %s475
          %s477 = smul.addr %s470, 10
          %s478 = sadd.s32 %s476, %s477
          %s479 = smul.addr %s478, 8
          %s480 = scalar_lea.vmem %s2, %s479
        $region28: #{full_model_vmd_forward.6} parent=15 // pred_fallthru
          _
        // Predicated region
        $region29: #{full_model_vmd_forward.6} parent=15 // pred_check
          %p481 = pneg %p157
        $region30: #{full_model_vmd_forward.6} parent=15 // pred_check_branch
          %483 = sbr.rel (%p481) target = $region32
        $region31: #{full_model_vmd_forward.6} parent=15 // pred_region
          %s484 = sand.u32 %s147, 1
          %s485 = sand.u32 %s147, 1
          %s486 = smul.addr %s485, 12
          %s487 = scalar_lea.vmem [#allocation4], %s486
          %s488 = smul.addr %s31, 6
          %s489 = sadd.s32 %s33, %s488
          %s490 = smul.addr %s32, 30
          %s491 = sadd.s32 %s489, %s490
          %s492 = smul.addr %s491, 4
          %s493 = scalar_lea.vmem %s3, %s492
          // Predicated region
          $region33: #{full_model_vmd_forward.6} parent=31 // pred_check
            _
          $region34: #{full_model_vmd_forward.6} parent=31 // pred_check_branch
            %495 = sbr.rel (0) target = $region36
          $region35: #{full_model_vmd_forward.6} parent=31 // pred_region
            // Predicated region
            $region37: #{full_model_vmd_forward.6} parent=35 // pred_check
              _
            $region38: #{full_model_vmd_forward.6} parent=35 // pred_check_branch
              %497 = sbr.rel target = $region40
            $region39: #{full_model_vmd_forward.6} parent=35 // pred_region
              // Predicated region
              $region52: #{full_model_vmd_forward.6} parent=39 // pred_check
                _
              $region53: #{full_model_vmd_forward.6} parent=39 // pred_check_branch
                %516 = sbr.rel (0) target = $region55
              $region54: #{full_model_vmd_forward.6} parent=39 // pred_region
                loop: start=0, step=1, limit=1
                $region56: #{full_model_vmd_forward.6} parent=54 // loop_pre_header
                  _
                $region57: #{full_model_vmd_forward.6} parent=54 // loop_header
                  %s518 = sphi 0, %s522
                  %p519 = scmp.ge.s32.totalorder %s518, 1
                  %s523 = sphi %s493, %s493
                  %s524 = sphi %s487, %s487
                $region58: #{full_model_vmd_forward.6} parent=54 // loop_header_branch
                  %521 = sbr.rel (%p519) target = $region62
                $region59: #{full_model_vmd_forward.6} parent=54 // loop_body
                  _
                $region60: #{full_model_vmd_forward.6} parent=54 // loop_footer
                  %s522 = sadd.s32 1, %s518
                $region61: #{full_model_vmd_forward.6} parent=54 // loop_footer_branch
                  %517 = sbr.rel target = $region57
                $region62: #{full_model_vmd_forward.6} parent=54 // loop_exit
                  _
                loop: start=0, step=1, limit=1
                $region63: #{full_model_vmd_forward.6} parent=54 // loop_pre_header
                  _
                $region64: #{full_model_vmd_forward.6} parent=54 // loop_header
                  %s527 = sphi 0, %s531
                  %p528 = scmp.ge.s32.totalorder %s527, 1
                  %s532 = sphi %s493, %s493
                  %s533 = sphi %s487, %s487
                $region65: #{full_model_vmd_forward.6} parent=54 // loop_header_branch
                  %530 = sbr.rel (%p528) target = $region69
                $region66: #{full_model_vmd_forward.6} parent=54 // loop_body
                  %v534 = vld [vmem:[%s532] sm:$0xf]
                  %535 = vst [vmem:[%s533] sm:$0xf] %v534
                  %v536 = vld [vmem:[%s532 + $0x8] sm:$0xf]
                  %537 = vst [vmem:[%s533 + $0x4] sm:$0xf] %v536
                  %v538 = vld [vmem:[%s532 + $0x10] sm:$0xf]
                  %539 = vst [vmem:[%s533 + $0x8] sm:$0xf] %v538
                $region67: #{full_model_vmd_forward.6} parent=54 // loop_footer
                  %s531 = sadd.s32 1, %s527
                $region68: #{full_model_vmd_forward.6} parent=54 // loop_footer_branch
                  %526 = sbr.rel target = $region64
                $region69: #{full_model_vmd_forward.6} parent=54 // loop_exit
                  _
              $region55: #{full_model_vmd_forward.6} parent=39 // pred_fallthru
                _
            $region40: #{full_model_vmd_forward.6} parent=35 // pred_fallthru
              _
            // Predicated region
            $region41: #{full_model_vmd_forward.6} parent=35 // pred_check
              _
            $region42: #{full_model_vmd_forward.6} parent=35 // pred_check_branch
              %499 = sbr.rel (0) target = $region44
            $region43: #{full_model_vmd_forward.6} parent=35 // pred_region
              loop: start=0, step=1, limit=1
              $region45: #{full_model_vmd_forward.6} parent=43 // loop_pre_header
                _
              $region46: #{full_model_vmd_forward.6} parent=43 // loop_header
                %s502 = sphi 0, %s506
                %p503 = scmp.ge.s32.totalorder %s502, 1
                %s507 = sphi %s493, %s493
                %s508 = sphi %s487, %s487
              $region47: #{full_model_vmd_forward.6} parent=43 // loop_header_branch
                %505 = sbr.rel (%p503) target = $region51
              $region48: #{full_model_vmd_forward.6} parent=43 // loop_body
                %v509 = vld [vmem:[%s507] sm:$0xf]
                %510 = vst [vmem:[%s508] sm:$0xf] %v509
                %v511 = vld [vmem:[%s507 + $0x8] sm:$0xf]
                %512 = vst [vmem:[%s508 + $0x4] sm:$0xf] %v511
                %v513 = vld [vmem:[%s507 + $0x10] sm:$0xf]
                %514 = vst [vmem:[%s508 + $0x8] sm:$0xf] %v513
              $region49: #{full_model_vmd_forward.6} parent=43 // loop_footer
                %s506 = sadd.s32 1, %s502
              $region50: #{full_model_vmd_forward.6} parent=43 // loop_footer_branch
                %501 = sbr.rel target = $region46
              $region51: #{full_model_vmd_forward.6} parent=43 // loop_exit
                _
            $region44: #{full_model_vmd_forward.6} parent=35 // pred_fallthru
              _
          $region36: #{full_model_vmd_forward.6} parent=31 // pred_fallthru
            _
          %540 = vnop
        $region32: #{full_model_vmd_forward.6} parent=15 // pred_fallthru
          _
        // Predicated region
        $region70: #{full_model_vmd_forward.6} parent=15 // pred_check
          %p541 = pneg %p187
        $region71: #{full_model_vmd_forward.6} parent=15 // pred_check_branch
          %543 = sbr.rel (%p541) target = $region73
        $region72: #{full_model_vmd_forward.6} parent=15 // pred_region
          %s544 = sand.u32 %s177, 1
          %s545 = sand.u32 %s177, 1
          %s546 = smul.addr %s545, 12
          %s547 = scalar_lea.vmem [#allocation5], %s546
          %s548 = smul.addr %s31, 6
          %s549 = sadd.s32 %s33, %s548
          %s550 = smul.addr %s32, 30
          %s551 = sadd.s32 %s549, %s550
          %s552 = smul.addr %s551, 4
          %s553 = scalar_lea.vmem %s4, %s552
          // Predicated region
          $region74: #{full_model_vmd_forward.6} parent=72 // pred_check
            _
          $region75: #{full_model_vmd_forward.6} parent=72 // pred_check_branch
            %555 = sbr.rel (0) target = $region77
          $region76: #{full_model_vmd_forward.6} parent=72 // pred_region
            // Predicated region
            $region78: #{full_model_vmd_forward.6} parent=76 // pred_check
              _
            $region79: #{full_model_vmd_forward.6} parent=76 // pred_check_branch
              %557 = sbr.rel target = $region81
            $region80: #{full_model_vmd_forward.6} parent=76 // pred_region
              // Predicated region
              $region93: #{full_model_vmd_forward.6} parent=80 // pred_check
                _
              $region94: #{full_model_vmd_forward.6} parent=80 // pred_check_branch
                %576 = sbr.rel (0) target = $region96
              $region95: #{full_model_vmd_forward.6} parent=80 // pred_region
                loop: start=0, step=1, limit=1
                $region97: #{full_model_vmd_forward.6} parent=95 // loop_pre_header
                  _
                $region98: #{full_model_vmd_forward.6} parent=95 // loop_header
                  %s578 = sphi 0, %s582
                  %p579 = scmp.ge.s32.totalorder %s578, 1
                  %s583 = sphi %s553, %s553
                  %s584 = sphi %s547, %s547
                $region99: #{full_model_vmd_forward.6} parent=95 // loop_header_branch
                  %581 = sbr.rel (%p579) target = $region103
                $region100: #{full_model_vmd_forward.6} parent=95 // loop_body
                  _
                $region101: #{full_model_vmd_forward.6} parent=95 // loop_footer
                  %s582 = sadd.s32 1, %s578
                $region102: #{full_model_vmd_forward.6} parent=95 // loop_footer_branch
                  %577 = sbr.rel target = $region98
                $region103: #{full_model_vmd_forward.6} parent=95 // loop_exit
                  _
                loop: start=0, step=1, limit=1
                $region104: #{full_model_vmd_forward.6} parent=95 // loop_pre_header
                  _
                $region105: #{full_model_vmd_forward.6} parent=95 // loop_header
                  %s587 = sphi 0, %s591
                  %p588 = scmp.ge.s32.totalorder %s587, 1
                  %s592 = sphi %s553, %s553
                  %s593 = sphi %s547, %s547
                $region106: #{full_model_vmd_forward.6} parent=95 // loop_header_branch
                  %590 = sbr.rel (%p588) target = $region110
                $region107: #{full_model_vmd_forward.6} parent=95 // loop_body
                  %v594 = vld [vmem:[%s592] sm:$0xf]
                  %595 = vst [vmem:[%s593] sm:$0xf] %v594
                  %v596 = vld [vmem:[%s592 + $0x8] sm:$0xf]
                  %597 = vst [vmem:[%s593 + $0x4] sm:$0xf] %v596
                  %v598 = vld [vmem:[%s592 + $0x10] sm:$0xf]
                  %599 = vst [vmem:[%s593 + $0x8] sm:$0xf] %v598
                $region108: #{full_model_vmd_forward.6} parent=95 // loop_footer
                  %s591 = sadd.s32 1, %s587
                $region109: #{full_model_vmd_forward.6} parent=95 // loop_footer_branch
                  %586 = sbr.rel target = $region105
                $region110: #{full_model_vmd_forward.6} parent=95 // loop_exit
                  _
              $region96: #{full_model_vmd_forward.6} parent=80 // pred_fallthru
                _
            $region81: #{full_model_vmd_forward.6} parent=76 // pred_fallthru
              _
            // Predicated region
            $region82: #{full_model_vmd_forward.6} parent=76 // pred_check
              _
            $region83: #{full_model_vmd_forward.6} parent=76 // pred_check_branch
              %559 = sbr.rel (0) target = $region85
            $region84: #{full_model_vmd_forward.6} parent=76 // pred_region
              loop: start=0, step=1, limit=1
              $region86: #{full_model_vmd_forward.6} parent=84 // loop_pre_header
                _
              $region87: #{full_model_vmd_forward.6} parent=84 // loop_header
                %s562 = sphi 0, %s566
                %p563 = scmp.ge.s32.totalorder %s562, 1
                %s567 = sphi %s553, %s553
                %s568 = sphi %s547, %s547
              $region88: #{full_model_vmd_forward.6} parent=84 // loop_header_branch
                %565 = sbr.rel (%p563) target = $region92
              $region89: #{full_model_vmd_forward.6} parent=84 // loop_body
                %v569 = vld [vmem:[%s567] sm:$0xf]
                %570 = vst [vmem:[%s568] sm:$0xf] %v569
                %v571 = vld [vmem:[%s567 + $0x8] sm:$0xf]
                %572 = vst [vmem:[%s568 + $0x4] sm:$0xf] %v571
                %v573 = vld [vmem:[%s567 + $0x10] sm:$0xf]
                %574 = vst [vmem:[%s568 + $0x8] sm:$0xf] %v573
              $region90: #{full_model_vmd_forward.6} parent=84 // loop_footer
                %s566 = sadd.s32 1, %s562
              $region91: #{full_model_vmd_forward.6} parent=84 // loop_footer_branch
                %561 = sbr.rel target = $region87
              $region92: #{full_model_vmd_forward.6} parent=84 // loop_exit
                _
            $region85: #{full_model_vmd_forward.6} parent=76 // pred_fallthru
              _
          $region77: #{full_model_vmd_forward.6} parent=72 // pred_fallthru
            _
          %600 = vnop
        $region73: #{full_model_vmd_forward.6} parent=15 // pred_fallthru
          _
        // Predicated region
        $region111: #{full_model_vmd_forward.6} parent=15 // pred_check
          %p601 = pneg %p217
        $region112: #{full_model_vmd_forward.6} parent=15 // pred_check_branch
          %603 = sbr.rel (%p601) target = $region114
        $region113: #{full_model_vmd_forward.6} parent=15 // pred_region
          %s604 = sand.u32 %s207, 1
          %s605 = sand.u32 %s207, 1
          %s606 = smul.addr %s605, 12
          %s607 = scalar_lea.vmem [#allocation6], %s606
          %s608 = smul.addr %s31, 6
          %s609 = sadd.s32 %s33, %s608
          %s610 = smul.addr %s32, 30
          %s611 = sadd.s32 %s609, %s610
          %s612 = smul.addr %s611, 4
          %s613 = scalar_lea.vmem %s5, %s612
          // Predicated region
          $region115: #{full_model_vmd_forward.6} parent=113 // pred_check
            _
          $region116: #{full_model_vmd_forward.6} parent=113 // pred_check_branch
            %615 = sbr.rel (0) target = $region118
          $region117: #{full_model_vmd_forward.6} parent=113 // pred_region
            // Predicated region
            $region119: #{full_model_vmd_forward.6} parent=117 // pred_check
              _
            $region120: #{full_model_vmd_forward.6} parent=117 // pred_check_branch
              %617 = sbr.rel target = $region122
            $region121: #{full_model_vmd_forward.6} parent=117 // pred_region
              // Predicated region
              $region134: #{full_model_vmd_forward.6} parent=121 // pred_check
                _
              $region135: #{full_model_vmd_forward.6} parent=121 // pred_check_branch
                %636 = sbr.rel (0) target = $region137
              $region136: #{full_model_vmd_forward.6} parent=121 // pred_region
                loop: start=0, step=1, limit=1
                $region138: #{full_model_vmd_forward.6} parent=136 // loop_pre_header
                  _
                $region139: #{full_model_vmd_forward.6} parent=136 // loop_header
                  %s638 = sphi 0, %s642
                  %p639 = scmp.ge.s32.totalorder %s638, 1
                  %s643 = sphi %s613, %s613
                  %s644 = sphi %s607, %s607
                $region140: #{full_model_vmd_forward.6} parent=136 // loop_header_branch
                  %641 = sbr.rel (%p639) target = $region144
                $region141: #{full_model_vmd_forward.6} parent=136 // loop_body
                  _
                $region142: #{full_model_vmd_forward.6} parent=136 // loop_footer
                  %s642 = sadd.s32 1, %s638
                $region143: #{full_model_vmd_forward.6} parent=136 // loop_footer_branch
                  %637 = sbr.rel target = $region139
                $region144: #{full_model_vmd_forward.6} parent=136 // loop_exit
                  _
                loop: start=0, step=1, limit=1
                $region145: #{full_model_vmd_forward.6} parent=136 // loop_pre_header
                  _
                $region146: #{full_model_vmd_forward.6} parent=136 // loop_header
                  %s647 = sphi 0, %s651
                  %p648 = scmp.ge.s32.totalorder %s647, 1
                  %s652 = sphi %s613, %s613
                  %s653 = sphi %s607, %s607
                $region147: #{full_model_vmd_forward.6} parent=136 // loop_header_branch
                  %650 = sbr.rel (%p648) target = $region151
                $region148: #{full_model_vmd_forward.6} parent=136 // loop_body
                  %v654 = vld [vmem:[%s652] sm:$0xf]
                  %655 = vst [vmem:[%s653] sm:$0xf] %v654
                  %v656 = vld [vmem:[%s652 + $0x8] sm:$0xf]
                  %657 = vst [vmem:[%s653 + $0x4] sm:$0xf] %v656
                  %v658 = vld [vmem:[%s652 + $0x10] sm:$0xf]
                  %659 = vst [vmem:[%s653 + $0x8] sm:$0xf] %v658
                $region149: #{full_model_vmd_forward.6} parent=136 // loop_footer
                  %s651 = sadd.s32 1, %s647
                $region150: #{full_model_vmd_forward.6} parent=136 // loop_footer_branch
                  %646 = sbr.rel target = $region146
                $region151: #{full_model_vmd_forward.6} parent=136 // loop_exit
                  _
              $region137: #{full_model_vmd_forward.6} parent=121 // pred_fallthru
                _
            $region122: #{full_model_vmd_forward.6} parent=117 // pred_fallthru
              _
            // Predicated region
            $region123: #{full_model_vmd_forward.6} parent=117 // pred_check
              _
            $region124: #{full_model_vmd_forward.6} parent=117 // pred_check_branch
              %619 = sbr.rel (0) target = $region126
            $region125: #{full_model_vmd_forward.6} parent=117 // pred_region
              loop: start=0, step=1, limit=1
              $region127: #{full_model_vmd_forward.6} parent=125 // loop_pre_header
                _
              $region128: #{full_model_vmd_forward.6} parent=125 // loop_header
                %s622 = sphi 0, %s626
                %p623 = scmp.ge.s32.totalorder %s622, 1
                %s627 = sphi %s613, %s613
                %s628 = sphi %s607, %s607
              $region129: #{full_model_vmd_forward.6} parent=125 // loop_header_branch
                %625 = sbr.rel (%p623) target = $region133
              $region130: #{full_model_vmd_forward.6} parent=125 // loop_body
                %v629 = vld [vmem:[%s627] sm:$0xf]
                %630 = vst [vmem:[%s628] sm:$0xf] %v629
                %v631 = vld [vmem:[%s627 + $0x8] sm:$0xf]
                %632 = vst [vmem:[%s628 + $0x4] sm:$0xf] %v631
                %v633 = vld [vmem:[%s627 + $0x10] sm:$0xf]
                %634 = vst [vmem:[%s628 + $0x8] sm:$0xf] %v633
              $region131: #{full_model_vmd_forward.6} parent=125 // loop_footer
                %s626 = sadd.s32 1, %s622
              $region132: #{full_model_vmd_forward.6} parent=125 // loop_footer_branch
                %621 = sbr.rel target = $region128
              $region133: #{full_model_vmd_forward.6} parent=125 // loop_exit
                _
            $region126: #{full_model_vmd_forward.6} parent=117 // pred_fallthru
              _
          $region118: #{full_model_vmd_forward.6} parent=113 // pred_fallthru
            _
          %660 = vnop
        $region114: #{full_model_vmd_forward.6} parent=15 // pred_fallthru
          _
        // Predicated region
        $region152: #{full_model_vmd_forward.6} parent=15 // pred_check
          %p661 = pneg %p253
        $region153: #{full_model_vmd_forward.6} parent=15 // pred_check_branch
          %663 = sbr.rel (%p661) target = $region155
        $region154: #{full_model_vmd_forward.6} parent=15 // pred_region
          %s664 = sadd.s32 %s31, 1
          %p665 = scmp.lt.s32.totalorder %s664, 4
          %s666 = scalar_select %p665, %s664, 4
          %p667 = scmp.lt.s32.totalorder %s32, 1
          %s668 = scalar_select %p667, %s32, 1
          %p669 = scmp.lt.s32.totalorder %s666, 4
          %s670 = scalar_select %p669, %s666, 4
          %p671 = scmp.lt.s32.totalorder %s33, 1
          %s672 = scalar_select %p671, %s33, 1
          %s673 = smul.addr %s670, 2
          %s674 = sadd.s32 %s672, %s673
          %s675 = smul.addr %s668, 10
          %s676 = sadd.s32 %s674, %s675
          %s677 = smul.addr %s676, 8
          %s678 = scalar_lea.vmem %s6, %s677
          %s679 = sadd.s32 %s31, 1
          %p680 = scmp.lt.s32.totalorder %s679, 4
          %s681 = scalar_select %p680, %s679, 4
        $region155: #{full_model_vmd_forward.6} parent=15 // pred_fallthru
          _
        // Predicated region
        $region156: #{full_model_vmd_forward.6} parent=15 // pred_check
          %p682 = pneg %p289
        $region157: #{full_model_vmd_forward.6} parent=15 // pred_check_branch
          %684 = sbr.rel (%p682) target = $region159
        $region158: #{full_model_vmd_forward.6} parent=15 // pred_region
          %s685 = sadd.s32 %s31, 1
          %p686 = scmp.lt.s32.totalorder %s685, 4
          %s687 = scalar_select %p686, %s685, 4
          %p688 = scmp.lt.s32.totalorder %s32, 1
          %s689 = scalar_select %p688, %s32, 1
          %p690 = scmp.lt.s32.totalorder %s687, 4
          %s691 = scalar_select %p690, %s687, 4
          %p692 = scmp.lt.s32.totalorder %s33, 1
          %s693 = scalar_select %p692, %s33, 1
          %s694 = smul.addr %s691, 2
          %s695 = sadd.s32 %s693, %s694
          %s696 = smul.addr %s689, 10
          %s697 = sadd.s32 %s695, %s696
          %s698 = smul.addr %s697, 8
          %s699 = scalar_lea.vmem %s7, %s698
          %s700 = sadd.s32 %s31, 1
          %p701 = scmp.lt.s32.totalorder %s700, 4
          %s702 = scalar_select %p701, %s700, 4
        $region159: #{full_model_vmd_forward.6} parent=15 // pred_fallthru
          _
        // Predicated region
        $region160: #{full_model_vmd_forward.6} parent=15 // pred_check
          %p703 = pneg %p325
        $region161: #{full_model_vmd_forward.6} parent=15 // pred_check_branch
          %705 = sbr.rel (%p703) target = $region163
        $region162: #{full_model_vmd_forward.6} parent=15 // pred_region
          %s706 = sadd.s32 %s31, 1
          %p707 = scmp.lt.s32.totalorder %s706, 4
          %s708 = scalar_select %p707, %s706, 4
          %p709 = scmp.lt.s32.totalorder %s32, 1
          %s710 = scalar_select %p709, %s32, 1
          %p711 = scmp.lt.s32.totalorder %s708, 4
          %s712 = scalar_select %p711, %s708, 4
          %p713 = scmp.lt.s32.totalorder %s33, 1
          %s714 = scalar_select %p713, %s33, 1
          %s715 = smul.addr %s712, 2
          %s716 = sadd.s32 %s714, %s715
          %s717 = smul.addr %s710, 10
          %s718 = sadd.s32 %s716, %s717
          %s719 = smul.addr %s718, 8
          %s720 = scalar_lea.vmem %s8, %s719
          %s721 = sadd.s32 %s31, 1
          %p722 = scmp.lt.s32.totalorder %s721, 4
          %s723 = scalar_select %p722, %s721, 4
        $region163: #{full_model_vmd_forward.6} parent=15 // pred_fallthru
          _
      $region16: #{full_model_vmd_forward.6} parent=5 // pred_fallthru
        _
      %p724 = scmp.le.s32.totalorder 1, %s24
      %p725 = scmp.lt.s32.totalorder %s24, 21
      %p726 = pnand %p724, %p725
      %p727 = pneg %p726
      // Predicated region
      $region164: #{full_model_vmd_forward.6} parent=5 // pred_check
        _
      $region165: #{full_model_vmd_forward.6} parent=5 // pred_check_branch
        %729 = sbr.rel (%p726) target = $region167
      $region166: #{full_model_vmd_forward.6} parent=5 // pred_region
        %s730 = ssub.s32 %s24, 1
        %s731 = sand.u32 %s150, 1
        %s732 = sand.u32 %s150, 1
        %s733 = smul.addr %s732, 12
        %s734 = scalar_lea.vmem [#allocation4], %s733
        // Predicated region
        $region168: #{full_model_vmd_forward.6} parent=166 // pred_check
          %p735 = pneg %p163
        $region169: #{full_model_vmd_forward.6} parent=166 // pred_check_branch
          %737 = sbr.rel (%p735) target = $region171
        $region170: #{full_model_vmd_forward.6} parent=166 // pred_region
          _
        $region171: #{full_model_vmd_forward.6} parent=166 // pred_fallthru
          _
        %s738 = sand.u32 %s180, 1
        %s739 = sand.u32 %s180, 1
        %s740 = smul.addr %s739, 12
        %s741 = scalar_lea.vmem [#allocation5], %s740
        // Predicated region
        $region172: #{full_model_vmd_forward.6} parent=166 // pred_check
          %p742 = pneg %p193
        $region173: #{full_model_vmd_forward.6} parent=166 // pred_check_branch
          %744 = sbr.rel (%p742) target = $region175
        $region174: #{full_model_vmd_forward.6} parent=166 // pred_region
          _
        $region175: #{full_model_vmd_forward.6} parent=166 // pred_fallthru
          _
        %s745 = sand.u32 %s210, 1
        %s746 = sand.u32 %s210, 1
        %s747 = smul.addr %s746, 12
        %s748 = scalar_lea.vmem [#allocation6], %s747
        // Predicated region
        $region176: #{full_model_vmd_forward.6} parent=166 // pred_check
          %p749 = pneg %p223
        $region177: #{full_model_vmd_forward.6} parent=166 // pred_check_branch
          %751 = sbr.rel (%p749) target = $region179
        $region178: #{full_model_vmd_forward.6} parent=166 // pred_region
          _
        $region179: #{full_model_vmd_forward.6} parent=166 // pred_fallthru
          _
        %p752 = scmp.lt.s32.totalorder %s35, 1
        %s753 = scalar_select %p752, %s35, 1
        %p754 = scmp.lt.s32.totalorder %s34, 4
        %s755 = scalar_select %p754, %s34, 4
        %p756 = scmp.lt.s32.totalorder %s36, 1
        %s757 = scalar_select %p756, %s36, 1
        %s758 = smul.addr %s755, 2
        %s759 = sadd.s32 %s757, %s758
        %s760 = smul.addr %s753, 10
        %s761 = sadd.s32 %s759, %s760
        %s762 = smul.addr %s761, 8
        %s763 = scalar_lea.vmem %s0, %s762
        %p764 = pneg %p73
        %p765 = pneg %p70
        %p766 = scmp.lt.s32.totalorder %s35, 1
        %s767 = scalar_select %p766, %s35, 1
        %p768 = scmp.lt.s32.totalorder %s34, 4
        %s769 = scalar_select %p768, %s34, 4
        %p770 = scmp.lt.s32.totalorder %s36, 1
        %s771 = scalar_select %p770, %s36, 1
        %s772 = smul.addr %s769, 2
        %s773 = sadd.s32 %s771, %s772
        %s774 = smul.addr %s767, 10
        %s775 = sadd.s32 %s773, %s774
        %s776 = smul.addr %s775, 8
        %s777 = scalar_lea.vmem %s1, %s776
        %p778 = pneg %p103
        %p779 = pneg %p100
        %p780 = scmp.lt.s32.totalorder %s35, 1
        %s781 = scalar_select %p780, %s35, 1
        %p782 = scmp.lt.s32.totalorder %s34, 4
        %s783 = scalar_select %p782, %s34, 4
        %p784 = scmp.lt.s32.totalorder %s36, 1
        %s785 = scalar_select %p784, %s36, 1
        %s786 = smul.addr %s783, 2
        %s787 = sadd.s32 %s785, %s786
        %s788 = smul.addr %s781, 10
        %s789 = sadd.s32 %s787, %s788
        %s790 = smul.addr %s789, 8
        %s791 = scalar_lea.vmem %s2, %s790
        %p792 = pneg %p133
        %p793 = pneg %p130
        %s794 = sand.u32 %s150, 1
        %s795 = sand.u32 %s150, 1
        %s796 = smul.addr %s795, 12
        %s797 = scalar_lea.vmem [#allocation4], %s796
        %p798 = pneg %p163
        %p799 = pneg %p160
        %s800 = sand.u32 %s180, 1
        %s801 = sand.u32 %s180, 1
        %s802 = smul.addr %s801, 12
        %s803 = scalar_lea.vmem [#allocation5], %s802
        %p804 = pneg %p193
        %p805 = pneg %p190
        %s806 = sand.u32 %s210, 1
        %s807 = sand.u32 %s210, 1
        %s808 = smul.addr %s807, 12
        %s809 = scalar_lea.vmem [#allocation6], %s808
        %p810 = pneg %p223
        %p811 = pneg %p220
        %s812 = sadd.s32 %s34, 1
        %p813 = scmp.lt.s32.totalorder %s812, 4
        %s814 = scalar_select %p813, %s812, 4
        %p815 = scmp.lt.s32.totalorder %s35, 1
        %s816 = scalar_select %p815, %s35, 1
        %p817 = scmp.lt.s32.totalorder %s814, 4
        %s818 = scalar_select %p817, %s814, 4
        %p819 = scmp.lt.s32.totalorder %s36, 1
        %s820 = scalar_select %p819, %s36, 1
        %s821 = smul.addr %s818, 2
        %s822 = sadd.s32 %s820, %s821
        %s823 = smul.addr %s816, 10
        %s824 = sadd.s32 %s822, %s823
        %s825 = smul.addr %s824, 8
        %s826 = scalar_lea.vmem %s6, %s825
        %p827 = pneg %p259
        %p828 = pneg %p256
        %s829 = sadd.s32 %s34, 1
        %p830 = scmp.lt.s32.totalorder %s829, 4
        %s831 = scalar_select %p830, %s829, 4
        %p832 = scmp.lt.s32.totalorder %s35, 1
        %s833 = scalar_select %p832, %s35, 1
        %p834 = scmp.lt.s32.totalorder %s831, 4
        %s835 = scalar_select %p834, %s831, 4
        %p836 = scmp.lt.s32.totalorder %s36, 1
        %s837 = scalar_select %p836, %s36, 1
        %s838 = smul.addr %s835, 2
        %s839 = sadd.s32 %s837, %s838
        %s840 = smul.addr %s833, 10
        %s841 = sadd.s32 %s839, %s840
        %s842 = smul.addr %s841, 8
        %s843 = scalar_lea.vmem %s7, %s842
        %p844 = pneg %p295
        %p845 = pneg %p292
        %s846 = sadd.s32 %s34, 1
        %p847 = scmp.lt.s32.totalorder %s846, 4
        %s848 = scalar_select %p847, %s846, 4
        %p849 = scmp.lt.s32.totalorder %s35, 1
        %s850 = scalar_select %p849, %s35, 1
        %p851 = scmp.lt.s32.totalorder %s848, 4
        %s852 = scalar_select %p851, %s848, 4
        %p853 = scmp.lt.s32.totalorder %s36, 1
        %s854 = scalar_select %p853, %s36, 1
        %s855 = smul.addr %s852, 2
        %s856 = sadd.s32 %s854, %s855
        %s857 = smul.addr %s850, 10
        %s858 = sadd.s32 %s856, %s857
        %s859 = smul.addr %s858, 8
        %s860 = scalar_lea.vmem %s8, %s859
        %p861 = pneg %p331
        %p862 = pneg %p328
        %p863 = pneg %p361
        %p864 = pneg %p358
        %s865 = sand.u32 %s348, 1
        %s866 = scalar_lea.sflag [#allocation8], %s865
        %s867 = sand.u32 %s348, 1
        %s868 = smul.addr %s867, 8
        %s869 = scalar_lea.vmem [#allocation7], %s868
        %p870 = pneg %p391
        %p871 = pneg %p388
        %s872 = sand.u32 %s378, 1
        %s873 = scalar_lea.sflag [#allocation10], %s872
        %s874 = sand.u32 %s378, 1
        %s875 = smul.addr %s874, 12
        %s876 = scalar_lea.vmem [#allocation9], %s875
        %p877 = pneg %p417
        %p878 = pneg %p414
        %p879 = scmp.lt.s32.totalorder %s34, 4
        %s880 = scalar_select %p879, %s34, 4
        %s881 = smul.addr %s880, 8
        %s882 = scalar_lea.vmem %s11, %s881
        %p883 = scmp.lt.s32.totalorder %s35, 1
        %s884 = scalar_select %p883, %s35, 1
        %p885 = scmp.lt.s32.totalorder %s34, 4
        %s886 = scalar_select %p885, %s34, 4
        %p887 = scmp.lt.s32.totalorder %s36, 1
        %s888 = scalar_select %p887, %s36, 1
        %s889 = smul.addr %s886, 2
        %s890 = sadd.s32 %s888, %s889
        %s891 = smul.addr %s884, 10
        %s892 = sadd.s32 %s890, %s891
        %s893 = smul.addr %s892, 8
        %s894 = scalar_lea.vmem %s0, %s893
        %p895 = scmp.lt.s32.totalorder %s35, 1
        %s896 = scalar_select %p895, %s35, 1
        %p897 = scmp.lt.s32.totalorder %s34, 4
        %s898 = scalar_select %p897, %s34, 4
        %p899 = scmp.lt.s32.totalorder %s36, 1
        %s900 = scalar_select %p899, %s36, 1
        %s901 = smul.addr %s898, 2
        %s902 = sadd.s32 %s900, %s901
        %s903 = smul.addr %s896, 10
        %s904 = sadd.s32 %s902, %s903
        %s905 = smul.addr %s904, 8
        %s906 = scalar_lea.vmem %s1, %s905
        %p907 = scmp.lt.s32.totalorder %s35, 1
        %s908 = scalar_select %p907, %s35, 1
        %p909 = scmp.lt.s32.totalorder %s34, 4
        %s910 = scalar_select %p909, %s34, 4
        %p911 = scmp.lt.s32.totalorder %s36, 1
        %s912 = scalar_select %p911, %s36, 1
        %s913 = smul.addr %s910, 2
        %s914 = sadd.s32 %s912, %s913
        %s915 = smul.addr %s908, 10
        %s916 = sadd.s32 %s914, %s915
        %s917 = smul.addr %s916, 8
        %s918 = scalar_lea.vmem %s2, %s917
        %s919 = sadd.s32 %s34, 1
        %p920 = scmp.lt.s32.totalorder %s919, 4
        %s921 = scalar_select %p920, %s919, 4
        %p922 = scmp.lt.s32.totalorder %s35, 1
        %s923 = scalar_select %p922, %s35, 1
        %p924 = scmp.lt.s32.totalorder %s921, 4
        %s925 = scalar_select %p924, %s921, 4
        %p926 = scmp.lt.s32.totalorder %s36, 1
        %s927 = scalar_select %p926, %s36, 1
        %s928 = smul.addr %s925, 2
        %s929 = sadd.s32 %s927, %s928
        %s930 = smul.addr %s923, 10
        %s931 = sadd.s32 %s929, %s930
        %s932 = smul.addr %s931, 8
        %s933 = scalar_lea.vmem %s6, %s932
        %s934 = sadd.s32 %s34, 1
        %p935 = scmp.lt.s32.totalorder %s934, 4
        %s936 = scalar_select %p935, %s934, 4
        %s937 = sadd.s32 %s34, 1
        %p938 = scmp.lt.s32.totalorder %s937, 4
        %s939 = scalar_select %p938, %s937, 4
        %p940 = scmp.lt.s32.totalorder %s35, 1
        %s941 = scalar_select %p940, %s35, 1
        %p942 = scmp.lt.s32.totalorder %s939, 4
        %s943 = scalar_select %p942, %s939, 4
        %p944 = scmp.lt.s32.totalorder %s36, 1
        %s945 = scalar_select %p944, %s36, 1
        %s946 = smul.addr %s943, 2
        %s947 = sadd.s32 %s945, %s946
        %s948 = smul.addr %s941, 10
        %s949 = sadd.s32 %s947, %s948
        %s950 = smul.addr %s949, 8
        %s951 = scalar_lea.vmem %s7, %s950
        %s952 = sadd.s32 %s34, 1
        %p953 = scmp.lt.s32.totalorder %s952, 4
        %s954 = scalar_select %p953, %s952, 4
        %s955 = sadd.s32 %s34, 1
        %p956 = scmp.lt.s32.totalorder %s955, 4
        %s957 = scalar_select %p956, %s955, 4
        %p958 = scmp.lt.s32.totalorder %s35, 1
        %s959 = scalar_select %p958, %s35, 1
        %p960 = scmp.lt.s32.totalorder %s957, 4
        %s961 = scalar_select %p960, %s957, 4
        %p962 = scmp.lt.s32.totalorder %s36, 1
        %s963 = scalar_select %p962, %s36, 1
        %s964 = smul.addr %s961, 2
        %s965 = sadd.s32 %s963, %s964
        %s966 = smul.addr %s959, 10
        %s967 = sadd.s32 %s965, %s966
        %s968 = smul.addr %s967, 8
        %s969 = scalar_lea.vmem %s8, %s968
        %s970 = sadd.s32 %s34, 1
        %p971 = scmp.lt.s32.totalorder %s970, 4
        %s972 = scalar_select %p971, %s970, 4
        %p973 = scmp.lt.s32.totalorder %s34, 4
        %s974 = scalar_select %p973, %s34, 4
        %s975 = smul.addr %s974, 8
        %s976 = scalar_lea.vmem %s11, %s975
        %p977 = scmp.eq.s32.totalorder %s35, 0
        %p978 = scmp.eq.s32.totalorder %s36, 0
        %p979 = pnand %p977, %p978
        %p980 = pneg %p979
        %p981 = scmp.eq.s32.totalorder %s35, 1
        %p982 = scmp.eq.s32.totalorder %s36, 1
        %p983 = pnand %p981, %p982
        %p984 = pneg %p983
        %p985 = scmp.ge.s32.totalorder %s34, 1
        %p986 = scmp.le.s32.totalorder %s34, 3
        %p987 = pnand %p985, %p986
        %p988 = pneg %p987
        %s989 = scalar_select %p988, 1, 0
        %s990 = scvt.s32.f32 %s989
        %p991 = scmp.le.s32.totalorder %s34, 2
        %p992 = pnand %p985, %p991
        %p993 = pneg %p992
        %s994 = scalar_select %p993, 1, 0
        %s995 = scvt.s32.f32 %s994
        // Predicated region
        $region180: #{full_model_vmd_forward.6} parent=166 // pred_check
          _
        $region181: #{full_model_vmd_forward.6} parent=166 // pred_check_branch
          %997 = sbr.rel (%p979) target = $region183
        $region182: #{full_model_vmd_forward.6} parent=166 // pred_region
          %s998 = scalar_lea.smem [#allocation2], 0
          %999 = sst [smem:[%s998]] 0.0
          %s1000 = scalar_lea.smem [#allocation2], 1
          %1001 = sst [smem:[%s1000]] 0.0
          %s1002 = scalar_lea.smem [#allocation2], 2
          %1003 = sst [smem:[%s1002]] 0.0
          %s1004 = scalar_lea.smem [#allocation2], 3
          %1005 = sst [smem:[%s1004]] 0.0
          %s1006 = scalar_lea.smem [#allocation2], 4
          %1007 = sst [smem:[%s1006]] 0.0
        $region183: #{full_model_vmd_forward.6} parent=166 // pred_fallthru
          _
        %v1008 = vld [vmem:[%s906] sm:$0xff]
        %v1009 = vld [vmem:[%s918] sm:$0xff]
        %vm1010 = vcmp.gt.f32.partialorder %v1009, 0.5
        %v1011 = vld [vmem:[%s894] sm:$0xff]
        %v1012 = vsel %vm1010, %v1011, %v1008
        %v1013 = vld [vmem:[%s734] sm:$0xf]
        %v1014 = vld [vmem:[%s734 + $0x4] sm:$0xf]
        %v1015 = vld [vmem:[%s734 + $0x8] sm:$0xf]
        %v1016 = vunpack.c.l.bf16 %v1013
        %v1017 = vunpack.c.l.bf16 %v1014
        %v1018 = vunpack.c.l.bf16 %v1015
        %v1019 = vld [vmem:[%s741] sm:$0xf]
        %v1020 = vld [vmem:[%s741 + $0x4] sm:$0xf]
        %v1021 = vld [vmem:[%s741 + $0x8] sm:$0xf]
        %v1022 = vunpack.c.l.bf16 %v1019
        %v1023 = vunpack.c.l.bf16 %v1020
        %v1024 = vunpack.c.l.bf16 %v1021
        %v1025 = vld [vmem:[%s748] sm:$0xf]
        %v1026 = vld [vmem:[%s748 + $0x4] sm:$0xf]
        %v1027 = vld [vmem:[%s748 + $0x8] sm:$0xf]
        %v1028 = vunpack.c.l.bf16 %v1025
        %v1029 = vunpack.c.l.bf16 %v1026
        %v1030 = vunpack.c.l.bf16 %v1027
        %v1031 = vmul.f32 %v1016, %v1012
        %v1032 = vmul.f32 %v1017, %v1012
        %v1033 = vmul.f32 %v1018, %v1012
        %v1034 = vsub.f32 1.0, %v1012
        %v1035 = vmul.f32 %v1022, %v1034
        %v1036 = vmul.f32 %v1023, %v1034
        %v1037 = vmul.f32 %v1024, %v1034
        %v1038 = vadd.f32 %v1031, %v1035
        %v1039 = vadd.f32 %v1032, %v1036
        %v1040 = vadd.f32 %v1033, %v1037
        %v1041 = vmax.f32 %v1012, 0.0
        %v1042 = vmin.f32 %v1041, 1.0
        %v1043 = vstv %s990
        %v1044 = vmul.f32 %v1042, %v1043
        %vm1045 = vcmask 130048
        %1046 = vst.msk [vmem:[%s869] sm:$0xff] %vm1045, %v1044
        %v1047 = vmax.f32 %v1038, 0.0
        %v1048 = vmax.f32 %v1039, 0.0
        %v1049 = vmax.f32 %v1040, 0.0
        %v1050 = vmin.f32 %v1047, 1.0
        %v1051 = vmin.f32 %v1048, 1.0
        %v1052 = vmin.f32 %v1049, 1.0
        %v1053 = vmul.f32 %v1050, %v1043
        %v1054 = vmul.f32 %v1051, %v1043
        %v1055 = vmul.f32 %v1052, %v1043
        %v1056 = vpack.c.bf16 %v1053, %v1053
        %v1057 = vpack.c.bf16 %v1054, %v1054
        %v1058 = vpack.c.bf16 %v1055, %v1055
        %vm1059 = vcmask 125952
        %1060 = vst.msk [vmem:[%s876] sm:$0xf] %vm1059, %v1056
        %1061 = vst.msk [vmem:[%s876 + $0x4] sm:$0xf] %vm1059, %v1057
        %1062 = vst.msk [vmem:[%s876 + $0x8] sm:$0xf] %vm1059, %v1058
        %v1063 = vsub.f32 %v1012, %v1008
        %v1064 = vand.u32 2147483647, %v1063
        %v1065 = vmul.f32 %v1064, %v1009
        %v1066 = vsel %vm1045, %v1065, 0.0
        %1067 = vadd.xlane.f32.xlu0 %v1066
        %v1068 = vpop.xlane.xlu0 %1067
        %v1069 = vrot.slane %v1068, 4
        %v1070 = vadd.f32 %v1068, %v1069
        %v1071 = vrot.slane %v1070, 2
        %v1072 = vadd.f32 %v1070, %v1071
        %v1073 = vrot.slane %v1072, 1
        %v1074 = vadd.f32 %v1072, %v1073
        %s1075 = vtos %v1074
        %v1076 = vsub.f32 %v1038, %v1028
        %v1077 = vsub.f32 %v1039, %v1029
        %v1078 = vsub.f32 %v1040, %v1030
        %v1079 = vand.u32 2147483647, %v1076
        %v1080 = vand.u32 2147483647, %v1077
        %v1081 = vand.u32 2147483647, %v1078
        %v1082 = vmul.f32 %v1079, %v1009
        %v1083 = vmul.f32 %v1080, %v1009
        %v1084 = vmul.f32 %v1081, %v1009
        %v1085 = vsel %vm1045, %v1082, 0.0
        %v1086 = vsel %vm1045, %v1083, 0.0
        %v1087 = vadd.f32 %v1085, %v1086
        %v1088 = vsel %vm1045, %v1084, 0.0
        %v1089 = vadd.f32 %v1087, %v1088
        %1090 = vadd.xlane.f32.xlu0 %v1089
        %v1091 = vpop.xlane.xlu0 %1090
        %v1092 = vrot.slane %v1091, 4
        %v1093 = vadd.f32 %v1091, %v1092
        %v1094 = vrot.slane %v1093, 2
        %v1095 = vadd.f32 %v1093, %v1094
        %v1096 = vrot.slane %v1095, 1
        %v1097 = vadd.f32 %v1095, %v1096
        %s1098 = vtos %v1097
        %v1099 = vlaneseq
        %v1100 = vshrl.u32 %v1099, 7
        %v1101 = vlaneseq
        %v1102 = vand.u32 %v1101, 127
        %vm1103 = vcmp.lt.s32.totalorder %v1102, 15
        %v1104 = vsel %vm1103, 1, 0
        %v1105 = vcvt.s32.f32 %v1104
        %vm1106 = vcmp.lt.s32.totalorder %v1100, 7
        %v1107 = vsel %vm1106, 1, 0
        %v1108 = vcvt.s32.f32 %v1107
        %vm1109 = vcmask 1047680
        %1110 = vrot.lane.b32.xlu0 %v1012, 16
        %v1111 = vpop.permute.xlu0 %1110
        %v1112 = vsel %vm1109, %v1111, %v1012
        %1113 = vrot.lane.b32.xlu0 %v1112, 16
        %v1114 = vpop.permute.xlu0 %1113
        %v1115 = vsel %vm1109, %v1114, %v1012
        %1117 = vrot.lane.b32.xlu0 %v1012, 1
        %v1118 = vpop.permute.xlu0 %1117
        %v1120 = vsub.f32 %v1115, %v1118
        %1121 = vrot.lane.b32.xlu0 %v1008, 16
        %v1122 = vpop.permute.xlu0 %1121
        %v1123 = vsel %vm1109, %v1122, %v1008
        %1124 = vrot.lane.b32.xlu0 %v1123, 16
        %v1125 = vpop.permute.xlu0 %1124
        %v1126 = vsel %vm1109, %v1125, %v1008
        %1128 = vrot.lane.b32.xlu0 %v1008, 1
        %v1129 = vpop.permute.xlu0 %1128
        %v1131 = vsub.f32 %v1126, %v1129
        %v1132 = vrot.slane %v1012, 1
        %v1133 = vsub.f32 %v1132, %v1012
        %v1134 = vrot.slane %v1008, 1
        %v1135 = vsub.f32 %v1134, %v1008
        %v1136 = vsub.f32 %v1120, %v1131
        %v1137 = vand.u32 2147483647, %v1136
        %1139 = vrot.lane.b32.xlu0 %v1009, 1
        %v1140 = vpop.permute.xlu0 %1139
        %v1142 = vmul.f32 %v1137, %v1140
        %1144 = vrot.lane.b32.xlu0 %v1105, 1
        %v1145 = vpop.permute.xlu0 %1144
        %v1147 = vmul.f32 %v1142, %v1145
        %1149 = vrot.lane.b32.xlu0 %v1147, 127
        %v1150 = vpop.permute.xlu0 %1149
        %v1152 = vsel %vm1045, %v1150, 0.0
        %1153 = vadd.xlane.f32.xlu0 %v1152
        %v1154 = vpop.xlane.xlu0 %1153
        %v1155 = vrot.slane %v1154, 4
        %v1156 = vadd.f32 %v1154, %v1155
        %v1157 = vrot.slane %v1156, 2
        %v1158 = vadd.f32 %v1156, %v1157
        %v1159 = vrot.slane %v1158, 1
        %v1160 = vadd.f32 %v1158, %v1159
        %s1161 = vtos %v1160
        %v1162 = vsub.f32 %v1133, %v1135
        %v1163 = vand.u32 2147483647, %v1162
        %v1164 = vmul.f32 %v1163, %v1009
        %v1165 = vmul.f32 %v1164, %v1108
        %v1166 = vsel %vm1045, %v1165, 0.0
        %1167 = vadd.xlane.f32.xlu0 %v1166
        %v1168 = vpop.xlane.xlu0 %1167
        %v1169 = vrot.slane %v1168, 4
        %v1170 = vadd.f32 %v1168, %v1169
        %v1171 = vrot.slane %v1170, 2
        %v1172 = vadd.f32 %v1170, %v1171
        %v1173 = vrot.slane %v1172, 1
        %v1174 = vadd.f32 %v1172, %v1173
        %s1175 = vtos %v1174
        %s1176 = sadd.f32 %s1161, %s1175
        %v1177 = vsel %vm1045, %v1009, 0.0
        %1178 = vadd.xlane.f32.xlu0 %v1177
        %v1179 = vpop.xlane.xlu0 %1178
        %v1180 = vrot.slane %v1179, 4
        %v1181 = vadd.f32 %v1179, %v1180
        %v1182 = vrot.slane %v1181, 2
        %v1183 = vadd.f32 %v1181, %v1182
        %v1184 = vrot.slane %v1183, 1
        %v1185 = vadd.f32 %v1183, %v1184
        %s1186 = vtos %v1185
        %v1187 = vld [vmem:[%s951] sm:$0xff]
        %v1188 = vld [vmem:[%s969] sm:$0xff]
        %vm1189 = vcmp.gt.f32.partialorder %v1188, 0.5
        %v1190 = vld [vmem:[%s933] sm:$0xff]
        %v1191 = vsel %vm1189, %v1190, %v1187
        %v1192 = vmax.f32 %v1191, 0.0
        %v1193 = vmin.f32 %v1192, 1.0
        %v1194 = vsub.f32 %v1042, %v1193
        %v1195 = vsub.f32 %v1008, %v1187
        %v1196 = vsub.f32 %v1194, %v1195
        %v1197 = vand.u32 2147483647, %v1196
        %v1198 = vmul.f32 %v1197, %v1009
        %v1199 = vsel %vm1045, %v1198, 0.0
        %1200 = vadd.xlane.f32.xlu0 %v1199
        %v1201 = vpop.xlane.xlu0 %1200
        %v1202 = vrot.slane %v1201, 4
        %v1203 = vadd.f32 %v1201, %v1202
        %v1204 = vrot.slane %v1203, 2
        %v1205 = vadd.f32 %v1203, %v1204
        %v1206 = vrot.slane %v1205, 1
        %v1207 = vadd.f32 %v1205, %v1206
        %s1208 = vtos %v1207
        %s1209 = sld [smem:[#allocation2]]
        %s1210 = smul.f32 %s1075, %s990
        %s1211 = sadd.f32 %s1209, %s1210
        %s1212 = scalar_lea.smem [#allocation2], 0
        %1213 = sst [smem:[%s1212]] %s1211
        %s1214 = sld [smem:[#allocation2 + $0x1]]
        %s1215 = smul.f32 %s1098, %s990
        %s1216 = sadd.f32 %s1214, %s1215
        %s1217 = scalar_lea.smem [#allocation2], 1
        %1218 = sst [smem:[%s1217]] %s1216
        %s1219 = sld [smem:[#allocation2 + $0x2]]
        %s1220 = smul.f32 %s1176, %s990
        %s1221 = sadd.f32 %s1219, %s1220
        %s1222 = scalar_lea.smem [#allocation2], 2
        %1223 = sst [smem:[%s1222]] %s1221
        %s1224 = sld [smem:[#allocation2 + $0x3]]
        %s1225 = smul.f32 %s1186, %s990
        %s1226 = sadd.f32 %s1224, %s1225
        %s1227 = scalar_lea.smem [#allocation2], 3
        %1228 = sst [smem:[%s1227]] %s1226
        %s1229 = sld [smem:[#allocation2 + $0x4]]
        %s1230 = smul.f32 %s1208, %s995
        %s1231 = sadd.f32 %s1229, %s1230
        %s1232 = scalar_lea.smem [#allocation2], 4
        %1233 = sst [smem:[%s1232]] %s1231
        %p1234 = scmp.gt.s32.totalorder %s36, 0
        // Predicated region
        $region184: #{full_model_vmd_forward.6} parent=166 // pred_check
          %p1235 = pneg %p1234
        $region185: #{full_model_vmd_forward.6} parent=166 // pred_check_branch
          %1237 = sbr.rel (%p1235) target = $region187
        $region186: #{full_model_vmd_forward.6} parent=166 // pred_region
          %v1238 = vld [vmem:[#allocation3] sm:$0x1]
          %v1239 = vsub.f32 %v1012, %v1238
          %v1240 = vld [vmem:[#allocation3 + $0x1] sm:$0x1]
          %v1241 = vsub.f32 %v1008, %v1240
          %v1242 = vsub.f32 %v1239, %v1241
          %v1243 = vand.u32 2147483647, %v1242
          %v1244 = vld [vmem:[#allocation3 + $0x2] sm:$0x1]
          %v1245 = vmul.f32 %v1243, %v1244
          %vm1246 = vcmask 122880
          %v1247 = vsel %vm1246, %v1245, 0.0
          %1248 = vadd.xlane.f32.xlu0 %v1247
          %v1249 = vpop.xlane.xlu0 %1248
          %v1250 = vrot.slane %v1249, 4
          %v1251 = vadd.f32 %v1249, %v1250
          %v1252 = vrot.slane %v1251, 2
          %v1253 = vadd.f32 %v1251, %v1252
          %v1254 = vrot.slane %v1253, 1
          %v1255 = vadd.f32 %v1253, %v1254
          %s1256 = vtos %v1255
          %s1257 = sld [smem:[#allocation2 + $0x2]]
          %s1258 = smul.f32 %s1256, %s990
          %s1259 = sadd.f32 %s1257, %s1258
          %1260 = sst [smem:[%s1222]] %s1259
        $region187: #{full_model_vmd_forward.6} parent=166 // pred_fallthru
          _
        %vm1261 = vcmask 130055
        %1262 = vst.msk [vmem:[#allocation3 - $0x7] sm:$0x80] %vm1261, %v1012
        %1263 = vst.msk [vmem:[#allocation3 - $0x6] sm:$0x80] %vm1261, %v1008
        %1264 = vst.msk [vmem:[#allocation3 - $0x5] sm:$0x80] %vm1261, %v1009
        // Predicated region
        $region188: #{full_model_vmd_forward.6} parent=166 // pred_check
          _
        $region189: #{full_model_vmd_forward.6} parent=166 // pred_check_branch
          %1266 = sbr.rel (%p983) target = $region191
        $region190: #{full_model_vmd_forward.6} parent=166 // pred_region
          %vm1267 = vcmp.eq.s32.totalorder %v1100, 0
          %s1268 = sld [smem:[#allocation2]]
          %v1269 = vstv %s1268
          %v1270 = vsel %vm1267, %v1269, 0.0
          %vm1271 = vcmp.eq.s32.totalorder %v1100, 1
          %s1272 = sld [smem:[#allocation2 + $0x1]]
          %v1273 = vstv %s1272
          %v1274 = vsel %vm1271, %v1273, %v1270
          %vm1275 = vcmp.eq.s32.totalorder %v1100, 2
          %s1276 = sld [smem:[#allocation2 + $0x2]]
          %v1277 = vstv %s1276
          %v1278 = vsel %vm1275, %v1277, %v1274
          %vm1279 = vcmp.eq.s32.totalorder %v1100, 3
          %s1280 = sld [smem:[#allocation2 + $0x3]]
          %v1281 = vstv %s1280
          %v1282 = vsel %vm1279, %v1281, %v1278
          %vm1283 = vcmp.eq.s32.totalorder %v1100, 4
          %s1284 = sld [smem:[#allocation2 + $0x4]]
          %v1285 = vstv %s1284
          %v1286 = vsel %vm1283, %v1285, %v1282
          %1287 = vst [vmem:[%s976] sm:$0xff] %v1286
        $region191: #{full_model_vmd_forward.6} parent=166 // pred_fallthru
          _
        %s1288 = sand.u32 %s348, 1
        %s1289 = scalar_lea.sflag [#allocation8], %s1288
        %s1290 = sand.u32 %s348, 1
        %s1291 = smul.addr %s1290, 8
        %s1292 = scalar_lea.vmem [#allocation7], %s1291
        %s1293 = sand.u32 %s378, 1
        %s1294 = scalar_lea.sflag [#allocation10], %s1293
        %s1295 = sand.u32 %s378, 1
        %s1296 = smul.addr %s1295, 12
        %s1297 = scalar_lea.vmem [#allocation9], %s1296
        %p1298 = scmp.lt.s32.totalorder %s34, 4
        %s1299 = scalar_select %p1298, %s34, 4
        %s1300 = smul.addr %s1299, 8
        %s1301 = scalar_lea.vmem %s11, %s1300
        // Predicated region
        $region192: #{full_model_vmd_forward.6} parent=166 // pred_check
          %p1302 = pneg %p358
        $region193: #{full_model_vmd_forward.6} parent=166 // pred_check_branch
          %1304 = sbr.rel (%p1302) target = $region195
        $region194: #{full_model_vmd_forward.6} parent=166 // pred_region
          %s1306 = ssub.s32 128, 128
          %1307 = vsyncadd %s1289, %s1306
          %s1308 = smul.addr %s34, 2
          %s1309 = sadd.s32 %s36, %s1308
          %s1310 = smul.addr %s35, 10
          %s1311 = sadd.s32 %s1309, %s1310
          %s1312 = smul.addr %s1311, 128
          %s1313 = scalar_lea.hbm %s9, %s1312
          %s1315 = sshll.u32 %s1292, 4
          %s1316 = int_to_ptr.vmem [resolvable:$true] %s1315
          %1318 = dma.vmem_to_hbm [thread:$0]  %s1316, 128, %s1313, %s1289
        $region195: #{full_model_vmd_forward.6} parent=166 // pred_fallthru
          _
        // Predicated region
        $region196: #{full_model_vmd_forward.6} parent=166 // pred_check
          %p1319 = pneg %p388
        $region197: #{full_model_vmd_forward.6} parent=166 // pred_check_branch
          %1321 = sbr.rel (%p1319) target = $region199
        $region198: #{full_model_vmd_forward.6} parent=166 // pred_region
          %s1323 = ssub.s32 192, 192
          %1324 = vsyncadd %s1294, %s1323
          %s1325 = smul.addr %s34, 6
          %s1326 = sadd.s32 %s36, %s1325
          %s1327 = smul.addr %s35, 30
          %s1328 = sadd.s32 %s1326, %s1327
          %s1329 = smul.addr %s1328, 64
          %s1330 = scalar_lea.hbm %s10, %s1329
          %s1331 = sshll.u32 %s1297, 4
          %s1332 = int_to_ptr.vmem [resolvable:$true] %s1331
          %1337 = dma.vmem_to_hbm [thread:$0]  %s1332, 192, %s1330, %s1294, 64, 128, 4
        $region199: #{full_model_vmd_forward.6} parent=166 // pred_fallthru
          _
        // Predicated region
        $region200: #{full_model_vmd_forward.6} parent=166 // pred_check
          %p1338 = pneg %p414
        $region201: #{full_model_vmd_forward.6} parent=166 // pred_check_branch
          %1340 = sbr.rel (%p1338) target = $region203
        $region202: #{full_model_vmd_forward.6} parent=166 // pred_region
          _
        $region203: #{full_model_vmd_forward.6} parent=166 // pred_fallthru
          _
      $region167: #{full_model_vmd_forward.6} parent=5 // pred_fallthru
        _
      %p1341 = scmp.le.s32.totalorder 2, %s24
      // Predicated region
      $region204: #{full_model_vmd_forward.6} parent=5 // pred_check
        %p1342 = pneg %p1341
      $region205: #{full_model_vmd_forward.6} parent=5 // pred_check_branch
        %1344 = sbr.rel (%p1342) target = $region207
      $region206: #{full_model_vmd_forward.6} parent=5 // pred_region
        %s1345 = ssub.s32 %s24, 2
        // Predicated region
        $region208: #{full_model_vmd_forward.6} parent=206 // pred_check
          %p1346 = pneg %p364
        $region209: #{full_model_vmd_forward.6} parent=206 // pred_check_branch
          %1348 = sbr.rel (%p1346) target = $region211
        $region210: #{full_model_vmd_forward.6} parent=206 // pred_region
          %s1349 = sand.u32 %s349, 1
          %s1350 = scalar_lea.sflag [#allocation8], %s1349
          %s1351 = sand.u32 %s349, 1
          %s1352 = smul.addr %s1351, 8
          %s1353 = scalar_lea.vmem [#allocation7], %s1352
          %1354 = dma.done %s1350, 128
        $region211: #{full_model_vmd_forward.6} parent=206 // pred_fallthru
          _
        // Predicated region
        $region212: #{full_model_vmd_forward.6} parent=206 // pred_check
          %p1355 = pneg %p394
        $region213: #{full_model_vmd_forward.6} parent=206 // pred_check_branch
          %1357 = sbr.rel (%p1355) target = $region215
        $region214: #{full_model_vmd_forward.6} parent=206 // pred_region
          %s1358 = sand.u32 %s379, 1
          %s1359 = scalar_lea.sflag [#allocation10], %s1358
          %s1360 = sand.u32 %s379, 1
          %s1361 = smul.addr %s1360, 12
          %s1362 = scalar_lea.vmem [#allocation9], %s1361
          %1363 = dma.done %s1359, 192
        $region215: #{full_model_vmd_forward.6} parent=206 // pred_fallthru
          _
        // Predicated region
        $region216: #{full_model_vmd_forward.6} parent=206 // pred_check
          %p1364 = pneg %p420
        $region217: #{full_model_vmd_forward.6} parent=206 // pred_check_branch
          %1366 = sbr.rel (%p1364) target = $region219
        $region218: #{full_model_vmd_forward.6} parent=206 // pred_region
          %p1367 = scmp.lt.s32.totalorder %s37, 4
          %s1368 = scalar_select %p1367, %s37, 4
          %s1369 = smul.addr %s1368, 8
          %s1370 = scalar_lea.vmem %s11, %s1369
        $region219: #{full_model_vmd_forward.6} parent=206 // pred_fallthru
          _
      $region207: #{full_model_vmd_forward.6} parent=5 // pred_fallthru
        _
    $region6: #{full_model_vmd_forward.6} parent=1 // loop_footer
      %s28 = sadd.s32 1, %s24
    $region7: #{full_model_vmd_forward.6} parent=1 // loop_footer_branch
      %23 = sbr.rel target = $region3
    $region8: #{full_model_vmd_forward.6} parent=1 // loop_exit
      _
    %1371 = vsyncpa [#allocation8], 1
    %s1372 = scalar_lea.sflag [#allocation8], 1
    %1373 = vsyncpa %s1372, 1
    %1374 = vsyncpa [#allocation10], 1
    %s1375 = scalar_lea.sflag [#allocation10], 1
    %1376 = vsyncpa %s1375, 1

// kernel: full_model_vmd_forward.5
$region0: #{full_model_vmd_forward.5}
  #allocation0 [shape = 'u32[]', space=smem, size = 0x4, offset = 0x4, fixed_abs, tag = 'smem constant byte address 0x4 - core index']
  #allocation1 [shape = 'u32[144,128]{1,0:T(1,128)}', space=vmem, size = 0x12000, scoped, tag = 'internal scratch']
  #allocation2 [shape = 'f32[1]{0:T(128)S(6)}', space=smem, size = 0x200, scoped, tag = 'scoped memory for full_model_vmd_forward.5']
  %s0 = inlined_call_operand.hbm [shape: f32[10,1,16,16], index: 0, kind: input, shape index: {}]
  %s1 = inlined_call_operand.hbm [shape: f32[10,3,16,16], index: 1, kind: input, shape index: {}]
  %s2 = inlined_call_operand.hbm [shape: f32[10,3,16,16], index: 2, kind: input, shape index: {}]
  %s3 = inlined_call_operand.vmem [shape: f32[3], index: 3, kind: input, shape index: {}]
  %s4 = inlined_call_operand.vmem [shape: f32[3], index: 4, kind: input, shape index: {}]
  %s5 = inlined_call_operand.vmem [shape: f32[4], index: 5, kind: input, shape index: {}]
  %s6 = inlined_call_operand.<no memory space> [shape: f32[1], index: 6, kind: input, shape index: {}]
  %s7 = inlined_call_operand.vmem [shape: f32[10,1,16,16], index: 7, kind: output, shape index: {0}]
  %s8 = inlined_call_operand.vmem [shape: f32[10,1,16,16], index: 8, kind: output, shape index: {1}]
  %s9 = inlined_call_operand.hbm [shape: f32[10,1,16,16], index: 9, kind: output, shape index: {2}]
  %s10 = inlined_call_operand.vmem [shape: f32[10,1,16,16], index: 10, kind: output, shape index: {3}]
  %s11 = inlined_call_operand.vmem [shape: bf16[10,3,16,16], index: 11, kind: output, shape index: {4}]
  %s12 = inlined_call_operand.vmem [shape: bf16[10,3,16,16], index: 12, kind: output, shape index: {5}]
  %s13 = inlined_call_operand.vmem [shape: bf16[10,3,16,16], index: 13, kind: output, shape index: {6}]
  %14 = xla_tuple %s7, %s8, %s9, %s10, %s11, %s12, %s13
  %s15 = sld [smem:[#allocation0]]
  $region133: #{full_model_vmd_forward.5} parent=0
    _
  %s17 = ssub.s32 1, %s15
  %s18 = scalar_select 0, %s17, %s15
  %19 = sst [smem:[#allocation2]] %s6
  $region1: #{full_model_vmd_forward.5} parent=0
    #allocation3 [shape = 'u8[16384]{0}', space=vmem, size = 0x4000, scoped, tag = 'input window, operand 0']
    #allocation4 [shape = 's32[2]{0}', space=sflag, size = 0x8, scoped, tag = 'scoped memory for full_model_vmd_forward.5']
    #allocation5 [shape = 's32[2]{0}', space=sflag, size = 0x8, scoped, tag = 'scoped memory for full_model_vmd_forward.5']
    #allocation6 [shape = 's32[2]{0}', space=sflag, size = 0x8, scoped, tag = 'scoped memory for full_model_vmd_forward.5']
    #allocation7 [shape = 'u8[49152]{0}', space=vmem, size = 0xc000, scoped, tag = 'input window, operand 1']
    #allocation8 [shape = 's32[2]{0}', space=sflag, size = 0x8, scoped, tag = 'scoped memory for full_model_vmd_forward.5']
    #allocation9 [shape = 'u8[49152]{0}', space=vmem, size = 0xc000, scoped, tag = 'input window, operand 2']
    #allocation10 [shape = 'u8[512]{0}', space=smem, size = 0x200, scoped, tag = 'input window, operand 3, single buffered']
    #allocation11 [shape = 'u8[512]{0}', space=smem, size = 0x200, scoped, tag = 'input window, operand 4, single buffered']
    #allocation12 [shape = 's32[1]{0}', space=sflag, size = 0x4, scoped, tag = 'scoped memory for full_model_vmd_forward.5']
    #allocation13 [shape = 'u8[512]{0}', space=smem, size = 0x200, scoped, tag = 'input window, operand 5, single buffered']
    #allocation14 [shape = 'u8[16384]{0}', space=vmem, size = 0x4000, scoped, tag = 'output window, operand 2']
    %20 = vsyncpa [#allocation4], 0
    %s21 = scalar_lea.sflag [#allocation4], 1
    %22 = vsyncpa %s21, 0
    %23 = vsyncpa [#allocation8], 0
    %s24 = scalar_lea.sflag [#allocation8], 1
    %25 = vsyncpa %s24, 0
    %26 = vsyncpa [#allocation6], 0
    %27 = vsyncpa [#allocation12], 0
    %28 = vsyncpa [#allocation5], 0
    %s29 = scalar_lea.sflag [#allocation5], 1
    %30 = vsyncpa %s29, 0
    loop: start=0, step=1, limit=12
    $region2: #{full_model_vmd_forward.5} parent=1 // loop_pre_header
      _
    $region3: #{full_model_vmd_forward.5} parent=1 // loop_header
      %s32 = sphi 0, %s36
      %p33 = scmp.ge.s32.totalorder %s32, 12
      %s42 = sphi 0, %s44
      %s45 = sphi 0, %s42
      %s46 = sphi 0, %s45
      %s62 = sphi 0, %s46
      %s68 = sphi 0, %s70
      %s71 = sphi 0, %s68
      %s72 = sphi 0, %s71
      %s88 = sphi 0, %s72
      %s94 = sphi 0, %s96
      %s97 = sphi 0, %s94
      %s98 = sphi 0, %s97
      %s114 = sphi 0, %s98
      %s118 = sphi 0, %s118
      %s120 = sphi 0, %s118
      %s121 = sphi 0, %s120
      %s135 = sphi 0, %s121
      %s139 = sphi 0, %s139
      %s141 = sphi 0, %s139
      %s142 = sphi 0, %s141
      %s156 = sphi 0, %s142
      %s160 = sphi 0, %s160
      %s162 = sphi 0, %s160
      %s163 = sphi 0, %s162
      %s177 = sphi 0, %s163
      %s181 = sphi 0, %s181
      %s183 = sphi 0, %s181
      %s184 = sphi 0, %s183
      %s198 = sphi 0, %s184
      %s204 = sphi 0, %s206
      %s207 = sphi 0, %s204
      %s208 = sphi 0, %s207
      %s224 = sphi 0, %s208
      %s230 = sphi 0, %s232
      %s233 = sphi 0, %s230
      %s234 = sphi 0, %s233
      %s250 = sphi 0, %s234
      %s256 = sphi 0, %s258
      %s259 = sphi 0, %s256
      %s260 = sphi 0, %s259
      %s276 = sphi 0, %s260
      %s282 = sphi 0, %s284
      %s285 = sphi 0, %s282
      %s286 = sphi 0, %s285
      %s302 = sphi 0, %s286
      %s308 = sphi 0, %s310
      %s311 = sphi 0, %s308
      %s312 = sphi 0, %s311
      %s328 = sphi 0, %s312
      %s334 = sphi 0, %s336
      %s337 = sphi 0, %s334
      %s338 = sphi 0, %s337
      %s354 = sphi 0, %s338
      %s360 = sphi 0, %s362
      %s363 = sphi 0, %s360
      %s364 = sphi 0, %s363
      %s380 = sphi 0, %s364
    $region4: #{full_model_vmd_forward.5} parent=1 // loop_header_branch
      %35 = sbr.rel (%p33) target = $region8
    $region5: #{full_model_vmd_forward.5} parent=1 // loop_body
      %s37 = ssub.s32 %s32, 1
      %s38 = ssub.s32 %s32, 2
      %s39 = sadd.s32 %s32, 1
      %s40 = ssub.s32 %s32, %s39
      %p41 = scmp.eq.s32.totalorder %s40, 0
      %s43 = sadd.s32 %s42, 1
      %s44 = scalar_select %p41, %s42, %s43
      %p47 = pneg %p41
      %p48 = scmp.eq.s32.totalorder %s32, 9
      %p49 = por %p47, %p48
      %p50 = scmp.ne.s32.totalorder %s42, %s45
      %p51 = scmp.eq.s32.totalorder %s32, 0
      %p52 = por %p50, %p51
      %p53 = scmp.ne.s32.totalorder %s42, %s45
      %p54 = scmp.eq.s32.totalorder %s37, 9
      %p55 = por %p53, %p54
      %p56 = scmp.ne.s32.totalorder %s45, %s46
      %p57 = scmp.eq.s32.totalorder %s37, 0
      %p58 = por %p56, %p57
      %p59 = scmp.ne.s32.totalorder %s45, %s46
      %p60 = scmp.eq.s32.totalorder %s38, 9
      %p61 = por %p59, %p60
      %p63 = scmp.ne.s32.totalorder %s46, %s62
      %p64 = scmp.eq.s32.totalorder %s38, 0
      %p65 = por %p63, %p64
      %s66 = ssub.s32 %s32, %s39
      %p67 = scmp.eq.s32.totalorder %s66, 0
      %s69 = sadd.s32 %s68, 1
      %s70 = scalar_select %p67, %s68, %s69
      %p73 = pneg %p67
      %p74 = scmp.eq.s32.totalorder %s32, 9
      %p75 = por %p73, %p74
      %p76 = scmp.ne.s32.totalorder %s68, %s71
      %p77 = scmp.eq.s32.totalorder %s32, 0
      %p78 = por %p76, %p77
      %p79 = scmp.ne.s32.totalorder %s68, %s71
      %p80 = scmp.eq.s32.totalorder %s37, 9
      %p81 = por %p79, %p80
      %p82 = scmp.ne.s32.totalorder %s71, %s72
      %p83 = scmp.eq.s32.totalorder %s37, 0
      %p84 = por %p82, %p83
      %p85 = scmp.ne.s32.totalorder %s71, %s72
      %p86 = scmp.eq.s32.totalorder %s38, 9
      %p87 = por %p85, %p86
      %p89 = scmp.ne.s32.totalorder %s72, %s88
      %p90 = scmp.eq.s32.totalorder %s38, 0
      %p91 = por %p89, %p90
      %s92 = ssub.s32 %s32, %s39
      %p93 = scmp.eq.s32.totalorder %s92, 0
      %s95 = sadd.s32 %s94, 1
      %s96 = scalar_select %p93, %s94, %s95
      %p99 = pneg %p93
      %p100 = scmp.eq.s32.totalorder %s32, 9
      %p101 = por %p99, %p100
      %p102 = scmp.ne.s32.totalorder %s94, %s97
      %p103 = scmp.eq.s32.totalorder %s32, 0
      %p104 = por %p102, %p103
      %p105 = scmp.ne.s32.totalorder %s94, %s97
      %p106 = scmp.eq.s32.totalorder %s37, 9
      %p107 = por %p105, %p106
      %p108 = scmp.ne.s32.totalorder %s97, %s98
      %p109 = scmp.eq.s32.totalorder %s37, 0
      %p110 = por %p108, %p109
      %p111 = scmp.ne.s32.totalorder %s97, %s98
      %p112 = scmp.eq.s32.totalorder %s38, 9
      %p113 = por %p111, %p112
      %p115 = scmp.ne.s32.totalorder %s98, %s114
      %p116 = scmp.eq.s32.totalorder %s38, 0
      %p117 = por %p115, %p116
      %s119 = sadd.s32 %s118, 1
      %p122 = scmp.eq.s32.totalorder %s32, 9
      %p123 = scmp.ne.s32.totalorder %s118, %s120
      %p124 = scmp.eq.s32.totalorder %s32, 0
      %p125 = por %p123, %p124
      %p126 = scmp.ne.s32.totalorder %s118, %s120
      %p127 = scmp.eq.s32.totalorder %s37, 9
      %p128 = por %p126, %p127
      %p129 = scmp.ne.s32.totalorder %s120, %s121
      %p130 = scmp.eq.s32.totalorder %s37, 0
      %p131 = por %p129, %p130
      %p132 = scmp.ne.s32.totalorder %s120, %s121
      %p133 = scmp.eq.s32.totalorder %s38, 9
      %p134 = por %p132, %p133
      %p136 = scmp.ne.s32.totalorder %s121, %s135
      %p137 = scmp.eq.s32.totalorder %s38, 0
      %p138 = por %p136, %p137
      %s140 = sadd.s32 %s139, 1
      %p143 = scmp.eq.s32.totalorder %s32, 9
      %p144 = scmp.ne.s32.totalorder %s139, %s141
      %p145 = scmp.eq.s32.totalorder %s32, 0
      %p146 = por %p144, %p145
      %p147 = scmp.ne.s32.totalorder %s139, %s141
      %p148 = scmp.eq.s32.totalorder %s37, 9
      %p149 = por %p147, %p148
      %p150 = scmp.ne.s32.totalorder %s141, %s142
      %p151 = scmp.eq.s32.totalorder %s37, 0
      %p152 = por %p150, %p151
      %p153 = scmp.ne.s32.totalorder %s141, %s142
      %p154 = scmp.eq.s32.totalorder %s38, 9
      %p155 = por %p153, %p154
      %p157 = scmp.ne.s32.totalorder %s142, %s156
      %p158 = scmp.eq.s32.totalorder %s38, 0
      %p159 = por %p157, %p158
      %s161 = sadd.s32 %s160, 1
      %p164 = scmp.eq.s32.totalorder %s32, 9
      %p165 = scmp.ne.s32.totalorder %s160, %s162
      %p166 = scmp.eq.s32.totalorder %s32, 0
      %p167 = por %p165, %p166
      %p168 = scmp.ne.s32.totalorder %s160, %s162
      %p169 = scmp.eq.s32.totalorder %s37, 9
      %p170 = por %p168, %p169
      %p171 = scmp.ne.s32.totalorder %s162, %s163
      %p172 = scmp.eq.s32.totalorder %s37, 0
      %p173 = por %p171, %p172
      %p174 = scmp.ne.s32.totalorder %s162, %s163
      %p175 = scmp.eq.s32.totalorder %s38, 9
      %p176 = por %p174, %p175
      %p178 = scmp.ne.s32.totalorder %s163, %s177
      %p179 = scmp.eq.s32.totalorder %s38, 0
      %p180 = por %p178, %p179
      %s182 = sadd.s32 %s181, 1
      %p185 = scmp.eq.s32.totalorder %s32, 9
      %p186 = scmp.ne.s32.totalorder %s181, %s183
      %p187 = scmp.eq.s32.totalorder %s32, 0
      %p188 = por %p186, %p187
      %p189 = scmp.ne.s32.totalorder %s181, %s183
      %p190 = scmp.eq.s32.totalorder %s37, 9
      %p191 = por %p189, %p190
      %p192 = scmp.ne.s32.totalorder %s183, %s184
      %p193 = scmp.eq.s32.totalorder %s37, 0
      %p194 = por %p192, %p193
      %p195 = scmp.ne.s32.totalorder %s183, %s184
      %p196 = scmp.eq.s32.totalorder %s38, 9
      %p197 = por %p195, %p196
      %p199 = scmp.ne.s32.totalorder %s184, %s198
      %p200 = scmp.eq.s32.totalorder %s38, 0
      %p201 = por %p199, %p200
      %s202 = ssub.s32 %s32, %s39
      %p203 = scmp.eq.s32.totalorder %s202, 0
      %s205 = sadd.s32 %s204, 1
      %s206 = scalar_select %p203, %s204, %s205
      %p209 = pneg %p203
      %p210 = scmp.eq.s32.totalorder %s32, 9
      %p211 = por %p209, %p210
      %p212 = scmp.ne.s32.totalorder %s204, %s207
      %p213 = scmp.eq.s32.totalorder %s32, 0
      %p214 = por %p212, %p213
      %p215 = scmp.ne.s32.totalorder %s204, %s207
      %p216 = scmp.eq.s32.totalorder %s37, 9
      %p217 = por %p215, %p216
      %p218 = scmp.ne.s32.totalorder %s207, %s208
      %p219 = scmp.eq.s32.totalorder %s37, 0
      %p220 = por %p218, %p219
      %p221 = scmp.ne.s32.totalorder %s207, %s208
      %p222 = scmp.eq.s32.totalorder %s38, 9
      %p223 = por %p221, %p222
      %p225 = scmp.ne.s32.totalorder %s208, %s224
      %p226 = scmp.eq.s32.totalorder %s38, 0
      %p227 = por %p225, %p226
      %s228 = ssub.s32 %s32, %s39
      %p229 = scmp.eq.s32.totalorder %s228, 0
      %s231 = sadd.s32 %s230, 1
      %s232 = scalar_select %p229, %s230, %s231
      %p235 = pneg %p229
      %p236 = scmp.eq.s32.totalorder %s32, 9
      %p237 = por %p235, %p236
      %p238 = scmp.ne.s32.totalorder %s230, %s233
      %p239 = scmp.eq.s32.totalorder %s32, 0
      %p240 = por %p238, %p239
      %p241 = scmp.ne.s32.totalorder %s230, %s233
      %p242 = scmp.eq.s32.totalorder %s37, 9
      %p243 = por %p241, %p242
      %p244 = scmp.ne.s32.totalorder %s233, %s234
      %p245 = scmp.eq.s32.totalorder %s37, 0
      %p246 = por %p244, %p245
      %p247 = scmp.ne.s32.totalorder %s233, %s234
      %p248 = scmp.eq.s32.totalorder %s38, 9
      %p249 = por %p247, %p248
      %p251 = scmp.ne.s32.totalorder %s234, %s250
      %p252 = scmp.eq.s32.totalorder %s38, 0
      %p253 = por %p251, %p252
      %s254 = ssub.s32 %s32, %s39
      %p255 = scmp.eq.s32.totalorder %s254, 0
      %s257 = sadd.s32 %s256, 1
      %s258 = scalar_select %p255, %s256, %s257
      %p261 = pneg %p255
      %p262 = scmp.eq.s32.totalorder %s32, 9
      %p263 = por %p261, %p262
      %p264 = scmp.ne.s32.totalorder %s256, %s259
      %p265 = scmp.eq.s32.totalorder %s32, 0
      %p266 = por %p264, %p265
      %p267 = scmp.ne.s32.totalorder %s256, %s259
      %p268 = scmp.eq.s32.totalorder %s37, 9
      %p269 = por %p267, %p268
      %p270 = scmp.ne.s32.totalorder %s259, %s260
      %p271 = scmp.eq.s32.totalorder %s37, 0
      %p272 = por %p270, %p271
      %p273 = scmp.ne.s32.totalorder %s259, %s260
      %p274 = scmp.eq.s32.totalorder %s38, 9
      %p275 = por %p273, %p274
      %p277 = scmp.ne.s32.totalorder %s260, %s276
      %p278 = scmp.eq.s32.totalorder %s38, 0
      %p279 = por %p277, %p278
      %s280 = ssub.s32 %s32, %s39
      %p281 = scmp.eq.s32.totalorder %s280, 0
      %s283 = sadd.s32 %s282, 1
      %s284 = scalar_select %p281, %s282, %s283
      %p287 = pneg %p281
      %p288 = scmp.eq.s32.totalorder %s32, 9
      %p289 = por %p287, %p288
      %p290 = scmp.ne.s32.totalorder %s282, %s285
      %p291 = scmp.eq.s32.totalorder %s32, 0
      %p292 = por %p290, %p291
      %p293 = scmp.ne.s32.totalorder %s282, %s285
      %p294 = scmp.eq.s32.totalorder %s37, 9
      %p295 = por %p293, %p294
      %p296 = scmp.ne.s32.totalorder %s285, %s286
      %p297 = scmp.eq.s32.totalorder %s37, 0
      %p298 = por %p296, %p297
      %p299 = scmp.ne.s32.totalorder %s285, %s286
      %p300 = scmp.eq.s32.totalorder %s38, 9
      %p301 = por %p299, %p300
      %p303 = scmp.ne.s32.totalorder %s286, %s302
      %p304 = scmp.eq.s32.totalorder %s38, 0
      %p305 = por %p303, %p304
      %s306 = ssub.s32 %s32, %s39
      %p307 = scmp.eq.s32.totalorder %s306, 0
      %s309 = sadd.s32 %s308, 1
      %s310 = scalar_select %p307, %s308, %s309
      %p313 = pneg %p307
      %p314 = scmp.eq.s32.totalorder %s32, 9
      %p315 = por %p313, %p314
      %p316 = scmp.ne.s32.totalorder %s308, %s311
      %p317 = scmp.eq.s32.totalorder %s32, 0
      %p318 = por %p316, %p317
      %p319 = scmp.ne.s32.totalorder %s308, %s311
      %p320 = scmp.eq.s32.totalorder %s37, 9
      %p321 = por %p319, %p320
      %p322 = scmp.ne.s32.totalorder %s311, %s312
      %p323 = scmp.eq.s32.totalorder %s37, 0
      %p324 = por %p322, %p323
      %p325 = scmp.ne.s32.totalorder %s311, %s312
      %p326 = scmp.eq.s32.totalorder %s38, 9
      %p327 = por %p325, %p326
      %p329 = scmp.ne.s32.totalorder %s312, %s328
      %p330 = scmp.eq.s32.totalorder %s38, 0
      %p331 = por %p329, %p330
      %s332 = ssub.s32 %s32, %s39
      %p333 = scmp.eq.s32.totalorder %s332, 0
      %s335 = sadd.s32 %s334, 1
      %s336 = scalar_select %p333, %s334, %s335
      %p339 = pneg %p333
      %p340 = scmp.eq.s32.totalorder %s32, 9
      %p341 = por %p339, %p340
      %p342 = scmp.ne.s32.totalorder %s334, %s337
      %p343 = scmp.eq.s32.totalorder %s32, 0
      %p344 = por %p342, %p343
      %p345 = scmp.ne.s32.totalorder %s334, %s337
      %p346 = scmp.eq.s32.totalorder %s37, 9
      %p347 = por %p345, %p346
      %p348 = scmp.ne.s32.totalorder %s337, %s338
      %p349 = scmp.eq.s32.totalorder %s37, 0
      %p350 = por %p348, %p349
      %p351 = scmp.ne.s32.totalorder %s337, %s338
      %p352 = scmp.eq.s32.totalorder %s38, 9
      %p353 = por %p351, %p352
      %p355 = scmp.ne.s32.totalorder %s338, %s354
      %p356 = scmp.eq.s32.totalorder %s38, 0
      %p357 = por %p355, %p356
      %s358 = ssub.s32 %s32, %s39
      %p359 = scmp.eq.s32.totalorder %s358, 0
      %s361 = sadd.s32 %s360, 1
      %s362 = scalar_select %p359, %s360, %s361
      %p365 = pneg %p359
      %p366 = scmp.eq.s32.totalorder %s32, 9
      %p367 = por %p365, %p366
      %p368 = scmp.ne.s32.totalorder %s360, %s363
      %p369 = scmp.eq.s32.totalorder %s32, 0
      %p370 = por %p368, %p369
      %p371 = scmp.ne.s32.totalorder %s360, %s363
      %p372 = scmp.eq.s32.totalorder %s37, 9
      %p373 = por %p371, %p372
      %p374 = scmp.ne.s32.totalorder %s363, %s364
      %p375 = scmp.eq.s32.totalorder %s37, 0
      %p376 = por %p374, %p375
      %p377 = scmp.ne.s32.totalorder %s363, %s364
      %p378 = scmp.eq.s32.totalorder %s38, 9
      %p379 = por %p377, %p378
      %p381 = scmp.ne.s32.totalorder %s364, %s380
      %p382 = scmp.eq.s32.totalorder %s38, 0
      %p383 = por %p381, %p382
      %p384 = scmp.le.s32.totalorder 1, %s32
      %p385 = scmp.lt.s32.totalorder %s32, 11
      %p386 = pnand %p384, %p385
      %p387 = pneg %p386
      // Predicated region
      $region9: #{full_model_vmd_forward.5} parent=5 // pred_check
        _
      $region10: #{full_model_vmd_forward.5} parent=5 // pred_check_branch
        %389 = sbr.rel (%p386) target = $region12
      $region11: #{full_model_vmd_forward.5} parent=5 // pred_region
        %s390 = ssub.s32 %s32, 1
        // Predicated region
        $region13: #{full_model_vmd_forward.5} parent=11 // pred_check
          %p391 = pneg %p131
        $region14: #{full_model_vmd_forward.5} parent=11 // pred_check_branch
          %393 = sbr.rel (%p391) target = $region16
        $region15: #{full_model_vmd_forward.5} parent=11 // pred_region
          %s395 = ssub.s32 16, 16
          %396 = vsyncadd [#allocation6], %s395
          %s398 = sshll.u32 %s3, 4
          %s399 = int_to_ptr.vmem [resolvable:$true] %s398
          %401 = dma.vmem_to_smem %s399, 16, [#allocation10], [#allocation6]
        $region16: #{full_model_vmd_forward.5} parent=11 // pred_fallthru
          _
        // Predicated region
        $region17: #{full_model_vmd_forward.5} parent=11 // pred_check
          %p402 = pneg %p152
        $region18: #{full_model_vmd_forward.5} parent=11 // pred_check_branch
          %404 = sbr.rel (%p402) target = $region20
        $region19: #{full_model_vmd_forward.5} parent=11 // pred_region
          %s406 = ssub.s32 16, 16
          %407 = vsyncadd [#allocation12], %s406
          %s409 = sshll.u32 %s4, 4
          %s410 = int_to_ptr.vmem [resolvable:$true] %s409
          %412 = dma.vmem_to_smem %s410, 16, [#allocation11], [#allocation12]
        $region20: #{full_model_vmd_forward.5} parent=11 // pred_fallthru
          _
        // Predicated region
        $region21: #{full_model_vmd_forward.5} parent=11 // pred_check
          %p413 = pneg %p173
        $region22: #{full_model_vmd_forward.5} parent=11 // pred_check_branch
          %415 = sbr.rel (%p413) target = $region24
        $region23: #{full_model_vmd_forward.5} parent=11 // pred_region
          %s417 = ssub.s32 16, 16
          %418 = vsyncadd [#allocation12], %s417
          %s420 = sshll.u32 %s5, 4
          %s421 = int_to_ptr.vmem [resolvable:$true] %s420
          %423 = dma.vmem_to_smem %s421, 16, [#allocation13], [#allocation12]
        $region24: #{full_model_vmd_forward.5} parent=11 // pred_fallthru
          _
        // Predicated region
        $region25: #{full_model_vmd_forward.5} parent=11 // pred_check
          %p424 = pneg %p194
        $region26: #{full_model_vmd_forward.5} parent=11 // pred_check_branch
          %426 = sbr.rel (%p424) target = $region28
        $region27: #{full_model_vmd_forward.5} parent=11 // pred_region
          _
        $region28: #{full_model_vmd_forward.5} parent=11 // pred_fallthru
          _
      $region12: #{full_model_vmd_forward.5} parent=5 // pred_fallthru
        _
      %p427 = scmp.lt.s32.totalorder %s32, 10
      // Predicated region
      $region29: #{full_model_vmd_forward.5} parent=5 // pred_check
        %p428 = pneg %p427
      $region30: #{full_model_vmd_forward.5} parent=5 // pred_check_branch
        %430 = sbr.rel (%p428) target = $region32
      $region31: #{full_model_vmd_forward.5} parent=5 // pred_region
        // Predicated region
        $region33: #{full_model_vmd_forward.5} parent=31 // pred_check
          %p431 = pneg %p52
        $region34: #{full_model_vmd_forward.5} parent=31 // pred_check_branch
          %433 = sbr.rel (%p431) target = $region36
        $region35: #{full_model_vmd_forward.5} parent=31 // pred_region
          %s434 = sand.u32 %s42, 1
          %s435 = scalar_lea.sflag [#allocation4], %s434
          %s436 = sand.u32 %s42, 1
          %s437 = smul.addr %s436, 16
          %s438 = scalar_lea.vmem [#allocation3], %s437
          %s440 = ssub.s32 256, 256
          %441 = vsyncadd %s435, %s440
          %s442 = smul.addr %s32, 2
          %s443 = smul.addr %s442, 128
          %s444 = scalar_lea.hbm %s0, %s443
          %s445 = sshll.u32 %s438, 4
          %s446 = int_to_ptr.vmem [resolvable:$true] %s445
          %451 = dma.hbm_to_vmem [thread:$0]  %s444, 256, %s446, %s435, 128, 128, 8
        $region36: #{full_model_vmd_forward.5} parent=31 // pred_fallthru
          _
        // Predicated region
        $region37: #{full_model_vmd_forward.5} parent=31 // pred_check
          %p452 = pneg %p78
        $region38: #{full_model_vmd_forward.5} parent=31 // pred_check_branch
          %454 = sbr.rel (%p452) target = $region40
        $region39: #{full_model_vmd_forward.5} parent=31 // pred_region
          %s455 = sand.u32 %s32, 1
          %s456 = scalar_lea.sflag [#allocation8], %s455
          %s457 = sand.u32 %s68, 1
          %s458 = smul.addr %s457, 48
          %s459 = scalar_lea.vmem [#allocation7], %s458
          %s461 = ssub.s32 768, 768
          %462 = vsyncadd %s456, %s461
          %s463 = smul.addr %s32, 6
          %s464 = smul.addr %s463, 128
          %s465 = scalar_lea.hbm %s1, %s464
          %s466 = sshll.u32 %s459, 4
          %s467 = int_to_ptr.vmem [resolvable:$true] %s466
          %472 = dma.hbm_to_vmem [thread:$0]  %s465, 768, %s467, %s456, 128, 128, 8
        $region40: #{full_model_vmd_forward.5} parent=31 // pred_fallthru
          _
        // Predicated region
        $region41: #{full_model_vmd_forward.5} parent=31 // pred_check
          %p473 = pneg %p104
        $region42: #{full_model_vmd_forward.5} parent=31 // pred_check_branch
          %475 = sbr.rel (%p473) target = $region44
        $region43: #{full_model_vmd_forward.5} parent=31 // pred_region
          %s476 = sand.u32 %s32, 1
          %s477 = scalar_lea.sflag [#allocation8], %s476
          %s478 = sand.u32 %s94, 1
          %s479 = smul.addr %s478, 48
          %s480 = scalar_lea.vmem [#allocation9], %s479
          %s482 = ssub.s32 768, 768
          %483 = vsyncadd %s477, %s482
          %s484 = smul.addr %s32, 6
          %s485 = smul.addr %s484, 128
          %s486 = scalar_lea.hbm %s2, %s485
          %s487 = sshll.u32 %s480, 4
          %s488 = int_to_ptr.vmem [resolvable:$true] %s487
          %493 = dma.hbm_to_vmem [thread:$0]  %s486, 768, %s488, %s477, 128, 128, 8
        $region44: #{full_model_vmd_forward.5} parent=31 // pred_fallthru
          _
      $region32: #{full_model_vmd_forward.5} parent=5 // pred_fallthru
        _
      %p494 = scmp.le.s32.totalorder 1, %s32
      %p495 = scmp.lt.s32.totalorder %s32, 11
      %p496 = pnand %p494, %p495
      %p497 = pneg %p496
      // Predicated region
      $region45: #{full_model_vmd_forward.5} parent=5 // pred_check
        _
      $region46: #{full_model_vmd_forward.5} parent=5 // pred_check_branch
        %499 = sbr.rel (%p496) target = $region48
      $region47: #{full_model_vmd_forward.5} parent=5 // pred_region
        %s500 = ssub.s32 %s32, 1
        %s501 = sand.u32 %s45, 1
        %s502 = scalar_lea.sflag [#allocation4], %s501
        %s503 = sand.u32 %s45, 1
        %s504 = smul.addr %s503, 16
        %s505 = scalar_lea.vmem [#allocation3], %s504
        // Predicated region
        $region49: #{full_model_vmd_forward.5} parent=47 // pred_check
          %p506 = pneg %p58
        $region50: #{full_model_vmd_forward.5} parent=47 // pred_check_branch
          %508 = sbr.rel (%p506) target = $region52
        $region51: #{full_model_vmd_forward.5} parent=47 // pred_region
          %509 = dma.done %s502, 256
        $region52: #{full_model_vmd_forward.5} parent=47 // pred_fallthru
          _
        %s510 = sand.u32 %s37, 1
        %s511 = scalar_lea.sflag [#allocation8], %s510
        %s512 = sand.u32 %s71, 1
        %s513 = smul.addr %s512, 48
        %s514 = scalar_lea.vmem [#allocation7], %s513
        // Predicated region
        $region53: #{full_model_vmd_forward.5} parent=47 // pred_check
          %p515 = pneg %p84
        $region54: #{full_model_vmd_forward.5} parent=47 // pred_check_branch
          %517 = sbr.rel (%p515) target = $region56
        $region55: #{full_model_vmd_forward.5} parent=47 // pred_region
          %518 = dma.done %s511, 768
        $region56: #{full_model_vmd_forward.5} parent=47 // pred_fallthru
          _
        %s519 = sand.u32 %s37, 1
        %s520 = scalar_lea.sflag [#allocation8], %s519
        %s521 = sand.u32 %s97, 1
        %s522 = smul.addr %s521, 48
        %s523 = scalar_lea.vmem [#allocation9], %s522
        // Predicated region
        $region57: #{full_model_vmd_forward.5} parent=47 // pred_check
          %p524 = pneg %p110
        $region58: #{full_model_vmd_forward.5} parent=47 // pred_check_branch
          %526 = sbr.rel (%p524) target = $region60
        $region59: #{full_model_vmd_forward.5} parent=47 // pred_region
          %527 = dma.done %s520, 768
        $region60: #{full_model_vmd_forward.5} parent=47 // pred_fallthru
          _
        // Predicated region
        $region61: #{full_model_vmd_forward.5} parent=47 // pred_check
          %p528 = pneg %p131
        $region62: #{full_model_vmd_forward.5} parent=47 // pred_check_branch
          %530 = sbr.rel (%p528) target = $region64
        $region63: #{full_model_vmd_forward.5} parent=47 // pred_region
          %531 = dma.done [#allocation6], 16
        $region64: #{full_model_vmd_forward.5} parent=47 // pred_fallthru
          _
        // Predicated region
        $region65: #{full_model_vmd_forward.5} parent=47 // pred_check
          %p532 = pneg %p152
        $region66: #{full_model_vmd_forward.5} parent=47 // pred_check_branch
          %534 = sbr.rel (%p532) target = $region68
        $region67: #{full_model_vmd_forward.5} parent=47 // pred_region
          %535 = dma.done [#allocation12], 16
        $region68: #{full_model_vmd_forward.5} parent=47 // pred_fallthru
          _
        // Predicated region
        $region69: #{full_model_vmd_forward.5} parent=47 // pred_check
          %p536 = pneg %p173
        $region70: #{full_model_vmd_forward.5} parent=47 // pred_check_branch
          %538 = sbr.rel (%p536) target = $region72
        $region71: #{full_model_vmd_forward.5} parent=47 // pred_region
          %539 = dma.done [#allocation12], 16
        $region72: #{full_model_vmd_forward.5} parent=47 // pred_fallthru
          _
        %540 = sfence
        %s541 = sand.u32 %s45, 1
        %s542 = scalar_lea.sflag [#allocation4], %s541
        %s543 = sand.u32 %s45, 1
        %s544 = smul.addr %s543, 16
        %s545 = scalar_lea.vmem [#allocation3], %s544
        %p546 = pneg %p58
        %p547 = pneg %p55
        %s548 = sand.u32 %s37, 1
        %s549 = scalar_lea.sflag [#allocation8], %s548
        %s550 = sand.u32 %s71, 1
        %s551 = smul.addr %s550, 48
        %s552 = scalar_lea.vmem [#allocation7], %s551
        %p553 = pneg %p84
        %p554 = pneg %p81
        %s555 = sand.u32 %s37, 1
        %s556 = scalar_lea.sflag [#allocation8], %s555
        %s557 = sand.u32 %s97, 1
        %s558 = smul.addr %s557, 48
        %s559 = scalar_lea.vmem [#allocation9], %s558
        %p560 = pneg %p110
        %p561 = pneg %p107
        %p562 = pneg %p131
        %p563 = pneg %p128
        %p564 = pneg %p152
        %p565 = pneg %p149
        %p566 = pneg %p173
        %p567 = pneg %p170
        %p568 = pneg %p194
        %p569 = pneg %p191
        %p570 = pneg %p220
        %p571 = pneg %p217
        %p572 = scmp.lt.s32.totalorder %s37, 9
        %s573 = scalar_select %p572, %s37, 9
        %s574 = smul.addr %s573, 2
        %s575 = smul.addr %s574, 8
        %s576 = scalar_lea.vmem %s7, %s575
        %p577 = pneg %p246
        %p578 = pneg %p243
        %p579 = scmp.lt.s32.totalorder %s37, 9
        %s580 = scalar_select %p579, %s37, 9
        %s581 = smul.addr %s580, 2
        %s582 = smul.addr %s581, 8
        %s583 = scalar_lea.vmem %s8, %s582
        %p584 = pneg %p272
        %p585 = pneg %p269
        %s586 = sand.u32 %s259, 1
        %s587 = scalar_lea.sflag [#allocation5], %s586
        %s588 = sand.u32 %s259, 1
        %s589 = smul.addr %s588, 16
        %s590 = scalar_lea.vmem [#allocation14], %s589
        %p591 = pneg %p298
        %p592 = pneg %p295
        %p593 = scmp.lt.s32.totalorder %s37, 9
        %s594 = scalar_select %p593, %s37, 9
        %s595 = smul.addr %s594, 2
        %s596 = smul.addr %s595, 8
        %s597 = scalar_lea.vmem %s10, %s596
        %p598 = pneg %p324
        %p599 = pneg %p321
        %p600 = scmp.lt.s32.totalorder %s37, 9
        %s601 = scalar_select %p600, %s37, 9
        %s602 = smul.addr %s601, 6
        %s603 = smul.addr %s602, 4
        %s604 = scalar_lea.vmem %s11, %s603
        %p605 = pneg %p350
        %p606 = pneg %p347
        %p607 = scmp.lt.s32.totalorder %s37, 9
        %s608 = scalar_select %p607, %s37, 9
        %s609 = smul.addr %s608, 6
        %s610 = smul.addr %s609, 4
        %s611 = scalar_lea.vmem %s12, %s610
        %p612 = pneg %p376
        %p613 = pneg %p373
        %p614 = scmp.lt.s32.totalorder %s37, 9
        %s615 = scalar_select %p614, %s37, 9
        %s616 = smul.addr %s615, 6
        %s617 = smul.addr %s616, 4
        %s618 = scalar_lea.vmem %s13, %s617
        %p619 = scmp.lt.s32.totalorder %s37, 9
        %s620 = scalar_select %p619, %s37, 9
        %s621 = smul.addr %s620, 2
        %s622 = smul.addr %s621, 8
        %s623 = scalar_lea.vmem %s7, %s622
        %p624 = scmp.lt.s32.totalorder %s37, 9
        %s625 = scalar_select %p624, %s37, 9
        %s626 = smul.addr %s625, 2
        %s627 = smul.addr %s626, 8
        %s628 = scalar_lea.vmem %s8, %s627
        %p629 = scmp.lt.s32.totalorder %s37, 9
        %s630 = scalar_select %p629, %s37, 9
        %s631 = smul.addr %s630, 2
        %s632 = smul.addr %s631, 8
        %s633 = scalar_lea.vmem %s10, %s632
        %p634 = scmp.lt.s32.totalorder %s37, 9
        %s635 = scalar_select %p634, %s37, 9
        %s636 = smul.addr %s635, 6
        %s637 = smul.addr %s636, 4
        %s638 = scalar_lea.vmem %s11, %s637
        %p639 = scmp.lt.s32.totalorder %s37, 9
        %s640 = scalar_select %p639, %s37, 9
        %s641 = smul.addr %s640, 6
        %s642 = smul.addr %s641, 4
        %s643 = scalar_lea.vmem %s12, %s642
        %p644 = scmp.lt.s32.totalorder %s37, 9
        %s645 = scalar_select %p644, %s37, 9
        %s646 = smul.addr %s645, 6
        %s647 = smul.addr %s646, 4
        %s648 = scalar_lea.vmem %s13, %s647
        %v649 = vld [vmem:[%s505] sm:$0xff]
        %v650 = vld [vmem:[%s505 + $0x8] sm:$0xff]
        %v651 = vmul.f32 %v649, 0.003921569
        %v652 = vmul.f32 %v650, 0.003921569
        %vm653 = vcmask 130048
        %654 = vst.msk [vmem:[%s623] sm:$0xff] %vm653, %v651
        %655 = vst.msk [vmem:[%s623 + $0x8] sm:$0xff] %vm653, %v652
        %v656 = vmax.f32 %v651, 0.0
        %v657 = vmax.f32 %v652, 0.0
        %v658 = vmin.f32 %v656, 1.0
        %v659 = vmin.f32 %v657, 1.0
        %vm660 = vcmp.gt.f32.partialorder %v658, 0.0
        %vm661 = vcmp.gt.f32.partialorder %v659, 0.0
        %vm662 = vcmp.lt.f32.partialorder %v658, 1.0
        %vm663 = vcmp.lt.f32.partialorder %v659, 1.0
        %vm664 = vmand %vm660, %vm662
        %vm665 = vmand %vm661, %vm663
        %v666 = vsel %vm664, 1, 0
        %v667 = vsel %vm665, 1, 0
        %v668 = vcvt.s32.f32 %v666
        %v669 = vcvt.s32.f32 %v667
        %v670 = vlaneseq
        %v671 = vshrl.u32 %v670, 7
        %v672 = vadd.s32 %v671, 8
        %v673 = vlaneseq
        %v674 = vand.u32 %v673, 127
        %v675 = vrot.slane %v668, 7
        %v676 = vrot.slane %v669, 7
        %vm677 = vcmp.lt.s32.totalorder %v671, 1
        %v678 = vsel %vm677, %v675, %v676
        %v679 = vsel %vm677, %v676, %v675
        %v680 = vadd.s32 %v671, 4294967295
        %v681 = vadd.s32 %v672, 4294967295
        %vm682 = vcmp.ge.s32.totalorder %v680, 0
        %vm683 = vcmp.ge.s32.totalorder %v681, 0
        %vm684 = vcmp.le.s32.totalorder %v680, 15
        %vm685 = vcmp.le.s32.totalorder %v681, 15
        %vm686 = vmand %vm682, %vm684
        %vm687 = vmand %vm683, %vm685
        %v688 = vsel %vm686, %v679, 0.0
        %v689 = vsel %vm687, %v678, 0.0
        %vm690 = vcmask 1047680
        %691 = vrot.lane.b32.xlu0 %v688, 16
        %v692 = vpop.permute.xlu0 %691
        %v693 = vsel %vm690, %v692, %v688
        %694 = vrot.lane.b32.xlu0 %v689, 16
        %v695 = vpop.permute.xlu0 %694
        %v696 = vsel %vm690, %v695, %v689
        %697 = vrot.lane.b32.xlu0 %v693, 16
        %v698 = vpop.permute.xlu0 %697
        %699 = vrot.lane.b32.xlu0 %v696, 16
        %v700 = vpop.permute.xlu0 %699
        %v701 = vsel %vm690, %v698, %v688
        %v702 = vsel %vm690, %v700, %v689
        %v703 = vadd.s32 %v674, 4294967295
        %vm704 = vcmp.ge.s32.totalorder %v703, 0
        %vm705 = vcmp.le.s32.totalorder %v703, 15
        %vm706 = vmand %vm704, %vm705
        %709 = vrot.lane.b32.xlu0 %v701, 113
        %v710 = vpop.permute.xlu0 %709
        %711 = vrot.lane.b32.xlu0 %v702, 113
        %v712 = vpop.permute.xlu0 %711
        %v715 = vsel %vm706, %v710, 0.0
        %v716 = vsel %vm706, %v712, 0.0
        %v717 = vmax.f32 %v668, %v715
        %v718 = vmax.f32 %v669, %v716
        %v719 = vmax.f32 %v717, %v688
        %v720 = vmax.f32 %v718, %v689
        %v721 = vadd.s32 %v674, 1
        %vm722 = vcmp.ge.s32.totalorder %v721, 0
        %vm723 = vcmp.le.s32.totalorder %v721, 15
        %vm724 = vmand %vm722, %vm723
        %725 = vrot.lane.b32.xlu0 %v701, 127
        %v726 = vpop.permute.xlu0 %725
        %727 = vrot.lane.b32.xlu0 %v702, 127
        %v728 = vpop.permute.xlu0 %727
        %v731 = vsel %vm724, %v726, 0.0
        %v732 = vsel %vm724, %v728, 0.0
        %v733 = vmax.f32 %v719, %v731
        %v734 = vmax.f32 %v720, %v732
        %735 = vrot.lane.b32.xlu0 %v668, 16
        %v736 = vpop.permute.xlu0 %735
        %v737 = vsel %vm690, %v736, %v668
        %738 = vrot.lane.b32.xlu0 %v669, 16
        %v739 = vpop.permute.xlu0 %738
        %v740 = vsel %vm690, %v739, %v669
        %741 = vrot.lane.b32.xlu0 %v737, 16
        %v742 = vpop.permute.xlu0 %741
        %743 = vrot.lane.b32.xlu0 %v740, 16
        %v744 = vpop.permute.xlu0 %743
        %v745 = vsel %vm690, %v742, %v668
        %v746 = vsel %vm690, %v744, %v669
        %749 = vrot.lane.b32.xlu0 %v745, 113
        %v750 = vpop.permute.xlu0 %749
        %751 = vrot.lane.b32.xlu0 %v746, 113
        %v752 = vpop.permute.xlu0 %751
        %v755 = vsel %vm706, %v750, 0.0
        %v756 = vsel %vm706, %v752, 0.0
        %v757 = vmax.f32 %v733, %v755
        %v758 = vmax.f32 %v734, %v756
        %759 = vrot.lane.b32.xlu0 %v745, 127
        %v760 = vpop.permute.xlu0 %759
        %761 = vrot.lane.b32.xlu0 %v746, 127
        %v762 = vpop.permute.xlu0 %761
        %v765 = vsel %vm724, %v760, 0.0
        %v766 = vsel %vm724, %v762, 0.0
        %v767 = vmax.f32 %v757, %v765
        %v768 = vmax.f32 %v758, %v766
        %v769 = vrot.slane %v668, 1
        %v770 = vrot.slane %v669, 1
        %vm771 = vcmp.lt.s32.totalorder %v671, 7
        %v772 = vsel %vm771, %v769, %v770
        %v773 = vsel %vm771, %v770, %v769
        %v774 = vadd.s32 %v671, 1
        %v775 = vadd.s32 %v672, 1
        %vm776 = vcmp.ge.s32.totalorder %v774, 0
        %vm777 = vcmp.ge.s32.totalorder %v775, 0
        %vm778 = vcmp.le.s32.totalorder %v774, 15
        %vm779 = vcmp.le.s32.totalorder %v775, 15
        %vm780 = vmand %vm776, %vm778
        %vm781 = vmand %vm777, %vm779
        %v782 = vsel %vm780, %v772, 0.0
        %v783 = vsel %vm781, %v773, 0.0
        %784 = vrot.lane.b32.xlu0 %v782, 16
        %v785 = vpop.permute.xlu0 %784
        %v786 = vsel %vm690, %v785, %v782
        %787 = vrot.lane.b32.xlu0 %v783, 16
        %v788 = vpop.permute.xlu0 %787
        %v789 = vsel %vm690, %v788, %v783
        %790 = vrot.lane.b32.xlu0 %v786, 16
        %v791 = vpop.permute.xlu0 %790
        %792 = vrot.lane.b32.xlu0 %v789, 16
        %v793 = vpop.permute.xlu0 %792
        %v794 = vsel %vm690, %v791, %v782
        %v795 = vsel %vm690, %v793, %v783
        %798 = vrot.lane.b32.xlu0 %v794, 113
        %v799 = vpop.permute.xlu0 %798
        %800 = vrot.lane.b32.xlu0 %v795, 113
        %v801 = vpop.permute.xlu0 %800
        %v804 = vsel %vm706, %v799, 0.0
        %v805 = vsel %vm706, %v801, 0.0
        %v806 = vmax.f32 %v767, %v804
        %v807 = vmax.f32 %v768, %v805
        %v808 = vmax.f32 %v806, %v782
        %v809 = vmax.f32 %v807, %v783
        %810 = vrot.lane.b32.xlu0 %v794, 127
        %v811 = vpop.permute.xlu0 %810
        %812 = vrot.lane.b32.xlu0 %v795, 127
        %v813 = vpop.permute.xlu0 %812
        %v816 = vsel %vm724, %v811, 0.0
        %v817 = vsel %vm724, %v813, 0.0
        %v818 = vmax.f32 %v808, %v816
        %v819 = vmax.f32 %v809, %v817
        %820 = vst.msk [vmem:[%s628] sm:$0xff] %vm653, %v818
        %821 = vst.msk [vmem:[%s628 + $0x8] sm:$0xff] %vm653, %v819
        %vm822 = vcmp.gt.f32.partialorder %v818, 0.5
        %vm823 = vcmp.gt.f32.partialorder %v819, 0.5
        %v824 = vsel %vm822, 0.5019608, %v658
        %v825 = vsel %vm823, 0.5019608, %v659
        %826 = vst.msk [vmem:[%s590] sm:$0xff] %vm653, %v824
        %827 = vst.msk [vmem:[%s590 + $0x8] sm:$0xff] %vm653, %v825
        %s828 = sld [smem:[#allocation13 + $0x3]]
        %v829 = vstv %s828
        %v830 = vmul.f32 %v824, %v829
        %v831 = vmul.f32 %v825, %v829
        %s832 = sld [smem:[#allocation2]]
        %v833 = vstv %s832
        %v834 = vadd.f32 %v830, %v833
        %v835 = vadd.f32 %v831, %v833
        %s836 = scalar_lea.vmem %s514, 32 [#allocation7]
        %v837 = vld [vmem:[%s836] sm:$0xff]
        %v838 = vld [vmem:[%s836 + $0x8] sm:$0xff]
        %v839 = vmul.f32 %v837, 0.003921569
        %v840 = vmul.f32 %v838, 0.003921569
        %s841 = scalar_lea.vmem %s523, 32 [#allocation9]
        %v842 = vld [vmem:[%s841] sm:$0xff]
        %v843 = vld [vmem:[%s841 + $0x8] sm:$0xff]
        %v844 = vmul.f32 %v842, 0.003921569
        %v845 = vmul.f32 %v843, 0.003921569
        %v846 = vmul.f32 %v839, %v651
        %v847 = vmul.f32 %v840, %v652
        %v848 = vsub.f32 1.0, %v651
        %v849 = vsub.f32 1.0, %v652
        %v850 = vmul.f32 %v844, %v848
        %v851 = vmul.f32 %v845, %v849
        %v852 = vadd.f32 %v846, %v850
        %v853 = vadd.f32 %v847, %v851
        %v854 = vpack.c.bf16 %v840, %v839
        %v856 = vunpack.c.l.b16 %v854
        %v857 = vunpack.c.h.b16 %v854
        %v858 = vpack.c.b16 %v856, %v856
        %v859 = vpack.c.b16 %v857, %v857
        %vm862 = vcmask 125952
        %863 = vst.msk [vmem:[%s638] sm:$0xf] %vm862, %v858
        %864 = vst.msk [vmem:[%s638 + $0x4] sm:$0xf] %vm862, %v859
        %v865 = vpack.c.bf16 %v845, %v844
        %v867 = vunpack.c.l.b16 %v865
        %v868 = vunpack.c.h.b16 %v865
        %v869 = vpack.c.b16 %v867, %v867
        %v870 = vpack.c.b16 %v868, %v868
        %873 = vst.msk [vmem:[%s643] sm:$0xf] %vm862, %v869
        %874 = vst.msk [vmem:[%s643 + $0x4] sm:$0xf] %vm862, %v870
        %v875 = vpack.c.bf16 %v853, %v852
        %v877 = vunpack.c.l.b16 %v875
        %v878 = vunpack.c.h.b16 %v875
        %v879 = vpack.c.b16 %v877, %v877
        %v880 = vpack.c.b16 %v878, %v878
        %883 = vst.msk [vmem:[%s648] sm:$0xf] %vm862, %v879
        %884 = vst.msk [vmem:[%s648 + $0x4] sm:$0xf] %vm862, %v880
        %s885 = sld [smem:[#allocation10]]
        %v886 = vstv %s885
        %v887 = vsub.f32 %v852, %v886
        %v888 = vsub.f32 %v853, %v886
        %s889 = sld [smem:[#allocation11]]
        %v890 = vstv %s889
        %v891 = vmul.f32 %v887, %v890
        %v892 = vmul.f32 %v888, %v890
        %s893 = sld [smem:[#allocation13]]
        %v894 = vstv %s893
        %v895 = vmul.f32 %v891, %v894
        %v896 = vmul.f32 %v892, %v894
        %v897 = vadd.f32 %v834, %v895
        %v898 = vadd.f32 %v835, %v896
        %s899 = scalar_lea.vmem %s514, 16 [#allocation7]
        %v900 = vld [vmem:[%s899] sm:$0xff]
        %v901 = vld [vmem:[%s899 + $0x8] sm:$0xff]
        %v902 = vmul.f32 %v900, 0.003921569
        %v903 = vmul.f32 %v901, 0.003921569
        %s904 = scalar_lea.vmem %s523, 16 [#allocation9]
        %v905 = vld [vmem:[%s904] sm:$0xff]
        %v906 = vld [vmem:[%s904 + $0x8] sm:$0xff]
        %v907 = vmul.f32 %v905, 0.003921569
        %v908 = vmul.f32 %v906, 0.003921569
        %v909 = vmul.f32 %v902, %v651
        %v910 = vmul.f32 %v903, %v652
        %v911 = vmul.f32 %v907, %v848
        %v912 = vmul.f32 %v908, %v849
        %v913 = vadd.f32 %v909, %v911
        %v914 = vadd.f32 %v910, %v912
        %v915 = vpack.c.bf16 %v903, %v902
        %v917 = vunpack.c.l.b16 %v915
        %v918 = vunpack.c.h.b16 %v915
        %v919 = vpack.c.b16 %v917, %v917
        %v920 = vpack.c.b16 %v918, %v918
        %s923 = scalar_lea.vmem %s638, 8
        %924 = vst.msk [vmem:[%s923] sm:$0xf] %vm862, %v919
        %925 = vst.msk [vmem:[%s923 + $0x4] sm:$0xf] %vm862, %v920
        %v926 = vpack.c.bf16 %v908, %v907
        %v928 = vunpack.c.l.b16 %v926
        %v929 = vunpack.c.h.b16 %v926
        %v930 = vpack.c.b16 %v928, %v928
        %v931 = vpack.c.b16 %v929, %v929
        %s934 = scalar_lea.vmem %s643, 8
        %935 = vst.msk [vmem:[%s934] sm:$0xf] %vm862, %v930
        %936 = vst.msk [vmem:[%s934 + $0x4] sm:$0xf] %vm862, %v931
        %v937 = vpack.c.bf16 %v914, %v913
        %v939 = vunpack.c.l.b16 %v937
        %v940 = vunpack.c.h.b16 %v937
        %v941 = vpack.c.b16 %v939, %v939
        %v942 = vpack.c.b16 %v940, %v940
        %s945 = scalar_lea.vmem %s648, 8
        %946 = vst.msk [vmem:[%s945] sm:$0xf] %vm862, %v941
        %947 = vst.msk [vmem:[%s945 + $0x4] sm:$0xf] %vm862, %v942
        %s948 = sld [smem:[#allocation10 + $0x1]]
        %v949 = vstv %s948
        %v950 = vsub.f32 %v913, %v949
        %v951 = vsub.f32 %v914, %v949
        %s952 = sld [smem:[#allocation11 + $0x1]]
        %v953 = vstv %s952
        %v954 = vmul.f32 %v950, %v953
        %v955 = vmul.f32 %v951, %v953
        %s956 = sld [smem:[#allocation13 + $0x1]]
        %v957 = vstv %s956
        %v958 = vmul.f32 %v954, %v957
        %v959 = vmul.f32 %v955, %v957
        %v960 = vadd.f32 %v897, %v958
        %v961 = vadd.f32 %v898, %v959
        %v962 = vld [vmem:[%s514] sm:$0xff]
        %v963 = vld [vmem:[%s514 + $0x8] sm:$0xff]
        %v964 = vmul.f32 %v962, 0.003921569
        %v965 = vmul.f32 %v963, 0.003921569
        %v966 = vld [vmem:[%s523] sm:$0xff]
        %v967 = vld [vmem:[%s523 + $0x8] sm:$0xff]
        %v968 = vmul.f32 %v966, 0.003921569
        %v969 = vmul.f32 %v967, 0.003921569
        %v970 = vmul.f32 %v964, %v651
        %v971 = vmul.f32 %v965, %v652
        %v972 = vmul.f32 %v968, %v848
        %v973 = vmul.f32 %v969, %v849
        %v974 = vadd.f32 %v970, %v972
        %v975 = vadd.f32 %v971, %v973
        %v976 = vpack.c.bf16 %v965, %v964
        %v978 = vunpack.c.l.b16 %v976
        %v979 = vunpack.c.h.b16 %v976
        %v980 = vpack.c.b16 %v978, %v978
        %v981 = vpack.c.b16 %v979, %v979
        %s984 = scalar_lea.vmem %s638, 16
        %985 = vst.msk [vmem:[%s984] sm:$0xf] %vm862, %v980
        %986 = vst.msk [vmem:[%s984 + $0x4] sm:$0xf] %vm862, %v981
        %v987 = vpack.c.bf16 %v969, %v968
        %v989 = vunpack.c.l.b16 %v987
        %v990 = vunpack.c.h.b16 %v987
        %v991 = vpack.c.b16 %v989, %v989
        %v992 = vpack.c.b16 %v990, %v990
        %s995 = scalar_lea.vmem %s643, 16
        %996 = vst.msk [vmem:[%s995] sm:$0xf] %vm862, %v991
        %997 = vst.msk [vmem:[%s995 + $0x4] sm:$0xf] %vm862, %v992
        %v998 = vpack.c.bf16 %v975, %v974
        %v1000 = vunpack.c.l.b16 %v998
        %v1001 = vunpack.c.h.b16 %v998
        %v1002 = vpack.c.b16 %v1000, %v1000
        %v1003 = vpack.c.b16 %v1001, %v1001
        %s1006 = scalar_lea.vmem %s648, 16
        %1007 = vst.msk [vmem:[%s1006] sm:$0xf] %vm862, %v1002
        %1008 = vst.msk [vmem:[%s1006 + $0x4] sm:$0xf] %vm862, %v1003
        %s1009 = sld [smem:[#allocation10 + $0x2]]
        %v1010 = vstv %s1009
        %v1011 = vsub.f32 %v974, %v1010
        %v1012 = vsub.f32 %v975, %v1010
        %s1013 = sld [smem:[#allocation11 + $0x2]]
        %v1014 = vstv %s1013
        %v1015 = vmul.f32 %v1011, %v1014
        %v1016 = vmul.f32 %v1012, %v1014
        %s1017 = sld [smem:[#allocation13 + $0x2]]
        %v1018 = vstv %s1017
        %v1019 = vmul.f32 %v1015, %v1018
        %v1020 = vmul.f32 %v1016, %v1018
        %v1021 = vadd.f32 %v960, %v1019
        %v1022 = vadd.f32 %v961, %v1020
        %v1023 = vxor.u32 %v1021, 2147483648
        %v1024 = vxor.u32 %v1022, 2147483648
        %v1025 = vmul.f32 %v1023, 1.442695
        %v1026 = vpow.pop %v1025
        %v1027 = vmul.f32 %v1024, 1.442695
        %v1028 = vpow.pop %v1027
        %v1029 = vadd.f32 %v1026, 1.0
        %v1030 = vadd.f32 %v1028, 1.0
        %v1031 = vrcp.pop %v1029
        %v1032 = vmul.f32 1.0, %v1031
        %v1033 = vrcp.pop %v1030
        %v1034 = vmul.f32 1.0, %v1033
        %1035 = vst.msk [vmem:[%s633] sm:$0xff] %vm653, %v1032
        %1036 = vst.msk [vmem:[%s633 + $0x8] sm:$0xff] %vm653, %v1034
        %p1037 = scmp.lt.s32.totalorder %s37, 9
        %s1038 = scalar_select %p1037, %s37, 9
        %s1039 = smul.addr %s1038, 2
        %s1040 = smul.addr %s1039, 8
        %s1041 = scalar_lea.vmem %s7, %s1040
        %p1042 = scmp.lt.s32.totalorder %s37, 9
        %s1043 = scalar_select %p1042, %s37, 9
        %s1044 = smul.addr %s1043, 2
        %s1045 = smul.addr %s1044, 8
        %s1046 = scalar_lea.vmem %s8, %s1045
        %s1047 = sand.u32 %s259, 1
        %s1048 = scalar_lea.sflag [#allocation5], %s1047
        %s1049 = sand.u32 %s259, 1
        %s1050 = smul.addr %s1049, 16
        %s1051 = scalar_lea.vmem [#allocation14], %s1050
        %p1052 = scmp.lt.s32.totalorder %s37, 9
        %s1053 = scalar_select %p1052, %s37, 9
        %s1054 = smul.addr %s1053, 2
        %s1055 = smul.addr %s1054, 8
        %s1056 = scalar_lea.vmem %s10, %s1055
        %p1057 = scmp.lt.s32.totalorder %s37, 9
        %s1058 = scalar_select %p1057, %s37, 9
        %s1059 = smul.addr %s1058, 6
        %s1060 = smul.addr %s1059, 4
        %s1061 = scalar_lea.vmem %s11, %s1060
        %p1062 = scmp.lt.s32.totalorder %s37, 9
        %s1063 = scalar_select %p1062, %s37, 9
        %s1064 = smul.addr %s1063, 6
        %s1065 = smul.addr %s1064, 4
        %s1066 = scalar_lea.vmem %s12, %s1065
        %p1067 = scmp.lt.s32.totalorder %s37, 9
        %s1068 = scalar_select %p1067, %s37, 9
        %s1069 = smul.addr %s1068, 6
        %s1070 = smul.addr %s1069, 4
        %s1071 = scalar_lea.vmem %s13, %s1070
        // Predicated region
        $region73: #{full_model_vmd_forward.5} parent=47 // pred_check
          %p1072 = pneg %p217
        $region74: #{full_model_vmd_forward.5} parent=47 // pred_check_branch
          %1074 = sbr.rel (%p1072) target = $region76
        $region75: #{full_model_vmd_forward.5} parent=47 // pred_region
          _
        $region76: #{full_model_vmd_forward.5} parent=47 // pred_fallthru
          _
        // Predicated region
        $region77: #{full_model_vmd_forward.5} parent=47 // pred_check
          %p1075 = pneg %p243
        $region78: #{full_model_vmd_forward.5} parent=47 // pred_check_branch
          %1077 = sbr.rel (%p1075) target = $region80
        $region79: #{full_model_vmd_forward.5} parent=47 // pred_region
          _
        $region80: #{full_model_vmd_forward.5} parent=47 // pred_fallthru
          _
        // Predicated region
        $region81: #{full_model_vmd_forward.5} parent=47 // pred_check
          %p1078 = pneg %p269
        $region82: #{full_model_vmd_forward.5} parent=47 // pred_check_branch
          %1080 = sbr.rel (%p1078) target = $region84
        $region83: #{full_model_vmd_forward.5} parent=47 // pred_region
          %s1082 = ssub.s32 256, 256
          %1083 = vsyncadd %s1048, %s1082
          %s1084 = smul.addr %s37, 2
          %s1085 = smul.addr %s1084, 128
          %s1086 = scalar_lea.hbm %s9, %s1085
          %s1087 = sshll.u32 %s1051, 4
          %s1088 = int_to_ptr.vmem [resolvable:$true] %s1087
          %1093 = dma.vmem_to_hbm [thread:$0]  %s1088, 256, %s1086, %s1048, 128, 128, 8
        $region84: #{full_model_vmd_forward.5} parent=47 // pred_fallthru
          _
        // Predicated region
        $region85: #{full_model_vmd_forward.5} parent=47 // pred_check
          %p1094 = pneg %p295
        $region86: #{full_model_vmd_forward.5} parent=47 // pred_check_branch
          %1096 = sbr.rel (%p1094) target = $region88
        $region87: #{full_model_vmd_forward.5} parent=47 // pred_region
          _
        $region88: #{full_model_vmd_forward.5} parent=47 // pred_fallthru
          _
        // Predicated region
        $region89: #{full_model_vmd_forward.5} parent=47 // pred_check
          %p1097 = pneg %p321
        $region90: #{full_model_vmd_forward.5} parent=47 // pred_check_branch
          %1099 = sbr.rel (%p1097) target = $region92
        $region91: #{full_model_vmd_forward.5} parent=47 // pred_region
          _
        $region92: #{full_model_vmd_forward.5} parent=47 // pred_fallthru
          _
        // Predicated region
        $region93: #{full_model_vmd_forward.5} parent=47 // pred_check
          %p1100 = pneg %p347
        $region94: #{full_model_vmd_forward.5} parent=47 // pred_check_branch
          %1102 = sbr.rel (%p1100) target = $region96
        $region95: #{full_model_vmd_forward.5} parent=47 // pred_region
          _
        $region96: #{full_model_vmd_forward.5} parent=47 // pred_fallthru
          _
        // Predicated region
        $region97: #{full_model_vmd_forward.5} parent=47 // pred_check
          %p1103 = pneg %p373
        $region98: #{full_model_vmd_forward.5} parent=47 // pred_check_branch
          %1105 = sbr.rel (%p1103) target = $region100
        $region99: #{full_model_vmd_forward.5} parent=47 // pred_region
          _
        $region100: #{full_model_vmd_forward.5} parent=47 // pred_fallthru
          _
      $region48: #{full_model_vmd_forward.5} parent=5 // pred_fallthru
        _
      %p1106 = scmp.le.s32.totalorder 2, %s32
      // Predicated region
      $region101: #{full_model_vmd_forward.5} parent=5 // pred_check
        %p1107 = pneg %p1106
      $region102: #{full_model_vmd_forward.5} parent=5 // pred_check_branch
        %1109 = sbr.rel (%p1107) target = $region104
      $region103: #{full_model_vmd_forward.5} parent=5 // pred_region
        %s1110 = ssub.s32 %s32, 2
        // Predicated region
        $region105: #{full_model_vmd_forward.5} parent=103 // pred_check
          %p1111 = pneg %p223
        $region106: #{full_model_vmd_forward.5} parent=103 // pred_check_branch
          %1113 = sbr.rel (%p1111) target = $region108
        $region107: #{full_model_vmd_forward.5} parent=103 // pred_region
          %p1114 = scmp.lt.s32.totalorder %s38, 9
          %s1115 = scalar_select %p1114, %s38, 9
          %s1116 = smul.addr %s1115, 2
          %s1117 = smul.addr %s1116, 8
          %s1118 = scalar_lea.vmem %s7, %s1117
        $region108: #{full_model_vmd_forward.5} parent=103 // pred_fallthru
          _
        // Predicated region
        $region109: #{full_model_vmd_forward.5} parent=103 // pred_check
          %p1119 = pneg %p249
        $region110: #{full_model_vmd_forward.5} parent=103 // pred_check_branch
          %1121 = sbr.rel (%p1119) target = $region112
        $region111: #{full_model_vmd_forward.5} parent=103 // pred_region
          %p1122 = scmp.lt.s32.totalorder %s38, 9
          %s1123 = scalar_select %p1122, %s38, 9
          %s1124 = smul.addr %s1123, 2
          %s1125 = smul.addr %s1124, 8
          %s1126 = scalar_lea.vmem %s8, %s1125
        $region112: #{full_model_vmd_forward.5} parent=103 // pred_fallthru
          _
        // Predicated region
        $region113: #{full_model_vmd_forward.5} parent=103 // pred_check
          %p1127 = pneg %p275
        $region114: #{full_model_vmd_forward.5} parent=103 // pred_check_branch
          %1129 = sbr.rel (%p1127) target = $region116
        $region115: #{full_model_vmd_forward.5} parent=103 // pred_region
          %s1130 = sand.u32 %s260, 1
          %s1131 = scalar_lea.sflag [#allocation5], %s1130
          %s1132 = sand.u32 %s260, 1
          %s1133 = smul.addr %s1132, 16
          %s1134 = scalar_lea.vmem [#allocation14], %s1133
          %1135 = dma.done %s1131, 256
        $region116: #{full_model_vmd_forward.5} parent=103 // pred_fallthru
          _
        // Predicated region
        $region117: #{full_model_vmd_forward.5} parent=103 // pred_check
          %p1136 = pneg %p301
        $region118: #{full_model_vmd_forward.5} parent=103 // pred_check_branch
          %1138 = sbr.rel (%p1136) target = $region120
        $region119: #{full_model_vmd_forward.5} parent=103 // pred_region
          %p1139 = scmp.lt.s32.totalorder %s38, 9
          %s1140 = scalar_select %p1139, %s38, 9
          %s1141 = smul.addr %s1140, 2
          %s1142 = smul.addr %s1141, 8
          %s1143 = scalar_lea.vmem %s10, %s1142
        $region120: #{full_model_vmd_forward.5} parent=103 // pred_fallthru
          _
        // Predicated region
        $region121: #{full_model_vmd_forward.5} parent=103 // pred_check
          %p1144 = pneg %p327
        $region122: #{full_model_vmd_forward.5} parent=103 // pred_check_branch
          %1146 = sbr.rel (%p1144) target = $region124
        $region123: #{full_model_vmd_forward.5} parent=103 // pred_region
          %p1147 = scmp.lt.s32.totalorder %s38, 9
          %s1148 = scalar_select %p1147, %s38, 9
          %s1149 = smul.addr %s1148, 6
          %s1150 = smul.addr %s1149, 4
          %s1151 = scalar_lea.vmem %s11, %s1150
        $region124: #{full_model_vmd_forward.5} parent=103 // pred_fallthru
          _
        // Predicated region
        $region125: #{full_model_vmd_forward.5} parent=103 // pred_check
          %p1152 = pneg %p353
        $region126: #{full_model_vmd_forward.5} parent=103 // pred_check_branch
          %1154 = sbr.rel (%p1152) target = $region128
        $region127: #{full_model_vmd_forward.5} parent=103 // pred_region
          %p1155 = scmp.lt.s32.totalorder %s38, 9
          %s1156 = scalar_select %p1155, %s38, 9
          %s1157 = smul.addr %s1156, 6
          %s1158 = smul.addr %s1157, 4
          %s1159 = scalar_lea.vmem %s12, %s1158
        $region128: #{full_model_vmd_forward.5} parent=103 // pred_fallthru
          _
        // Predicated region
        $region129: #{full_model_vmd_forward.5} parent=103 // pred_check
          %p1160 = pneg %p379
        $region130: #{full_model_vmd_forward.5} parent=103 // pred_check_branch
          %1162 = sbr.rel (%p1160) target = $region132
        $region131: #{full_model_vmd_forward.5} parent=103 // pred_region
          %p1163 = scmp.lt.s32.totalorder %s38, 9
          %s1164 = scalar_select %p1163, %s38, 9
          %s1165 = smul.addr %s1164, 6
          %s1166 = smul.addr %s1165, 4
          %s1167 = scalar_lea.vmem %s13, %s1166
        $region132: #{full_model_vmd_forward.5} parent=103 // pred_fallthru
          _
      $region104: #{full_model_vmd_forward.5} parent=5 // pred_fallthru
        _
    $region6: #{full_model_vmd_forward.5} parent=1 // loop_footer
      %s36 = sadd.s32 1, %s32
    $region7: #{full_model_vmd_forward.5} parent=1 // loop_footer_branch
      %31 = sbr.rel target = $region3
    $region8: #{full_model_vmd_forward.5} parent=1 // loop_exit
      _
    %1168 = vsyncpa [#allocation4], 1
    %s1169 = scalar_lea.sflag [#allocation4], 1
    %1170 = vsyncpa %s1169, 1
    %1171 = vsyncpa [#allocation8], 1
    %s1172 = scalar_lea.sflag [#allocation8], 1
    %1173 = vsyncpa %s1172, 1
    %1174 = vsyncpa [#allocation5], 1
    %s1175 = scalar_lea.sflag [#allocation5], 1
    %1176 = vsyncpa %s1175, 1
    %1177 = vsyncpa [#allocation6], 1
    %s1178 = scalar_lea.sflag [#allocation6], 1
    %1179 = vsyncpa %s1178, 1
    %1180 = vsyncpa [#allocation12], 1

// kernel: full_model_vmd_forward.7
$region0: #{full_model_vmd_forward.7}
  #allocation0 [shape = 'u32[]', space=smem, size = 0x4, offset = 0x4, fixed_abs, tag = 'smem constant byte address 0x4 - core index']
  #allocation1 [shape = 'u32[144,128]{1,0:T(1,128)}', space=vmem, size = 0x12000, scoped, tag = 'internal scratch']
  %s0 = inlined_call_operand.vmem [shape: f32[2,5,4,4], index: 0, kind: input, shape index: {}]
  %s1 = inlined_call_operand.vmem [shape: f32[2,5,2,2], index: 1, kind: input, shape index: {}]
  %s2 = inlined_call_operand.vmem [shape: f32[2,5,9,2,2], index: 2, kind: input, shape index: {}]
  %s3 = inlined_call_operand.vmem [shape: f32[2,5,9,2,2], index: 3, kind: input, shape index: {}]
  %s4 = inlined_call_operand.vmem [shape: f32[2,3,8,128], index: 4, kind: output, shape index: {}]
  %s5 = sld [smem:[#allocation0]]
  $region49: #{full_model_vmd_forward.7} parent=0
    _
  %s7 = ssub.s32 1, %s5
  %s8 = scalar_select 0, %s7, %s5
  loop: start=0, step=1, limit=8
  $region2: #{full_model_vmd_forward.7} parent=0 // loop_pre_header
    _
  $region3: #{full_model_vmd_forward.7} parent=0 // loop_header
    %s10 = sphi 0, %s14
    %p11 = scmp.ge.s32.totalorder %s10, 8
    %s17 = sphi 0, %s29
    %s18 = sphi 0, %s25
    %s19 = sphi 0, %s17
    %s20 = sphi 0, %s18
    %s21 = sphi 0, %s19
    %s22 = sphi 0, %s20
    %s32 = sphi 0, %s34
    %s35 = sphi 0, %s32
    %s36 = sphi 0, %s35
    %s52 = sphi 0, %s36
    %s62 = sphi 0, %s64
    %s65 = sphi 0, %s62
    %s66 = sphi 0, %s65
    %s82 = sphi 0, %s66
    %s92 = sphi 0, %s94
    %s95 = sphi 0, %s92
    %s96 = sphi 0, %s95
    %s112 = sphi 0, %s96
    %s122 = sphi 0, %s124
    %s125 = sphi 0, %s122
    %s126 = sphi 0, %s125
    %s142 = sphi 0, %s126
    %s150 = sphi 0, %s152
    %s153 = sphi 0, %s150
    %s154 = sphi 0, %s153
    %s170 = sphi 0, %s154
  $region4: #{full_model_vmd_forward.7} parent=0 // loop_header_branch
    %13 = sbr.rel (%p11) target = $region8
  $region5: #{full_model_vmd_forward.7} parent=0 // loop_body
    %s15 = ssub.s32 %s10, 1
    %s16 = ssub.s32 %s10, 2
    %s23 = sadd.s32 1, %s18
    %p24 = scmp.ge.s32.totalorder %s23, 3
    %s25 = scalar_select %p24, 0, %s23
    %s26 = sadd.s32 1, %s17
    %s27 = scalar_select %p24, %s26, %s17
    %p28 = scmp.ge.s32.totalorder %s27, 2
    %s29 = scalar_select %p28, 0, %s27
    %s30 = ssub.s32 %s17, %s29
    %p31 = scmp.eq.s32.totalorder %s30, 0
    %s33 = sadd.s32 %s32, 1
    %s34 = scalar_select %p31, %s32, %s33
    %p37 = pneg %p31
    %p38 = scmp.eq.s32.totalorder %s10, 5
    %p39 = por %p37, %p38
    %p40 = scmp.ne.s32.totalorder %s32, %s35
    %p41 = scmp.eq.s32.totalorder %s10, 0
    %p42 = por %p40, %p41
    %p43 = scmp.ne.s32.totalorder %s32, %s35
    %p44 = scmp.eq.s32.totalorder %s15, 5
    %p45 = por %p43, %p44
    %p46 = scmp.ne.s32.totalorder %s35, %s36
    %p47 = scmp.eq.s32.totalorder %s15, 0
    %p48 = por %p46, %p47
    %p49 = scmp.ne.s32.totalorder %s35, %s36
    %p50 = scmp.eq.s32.totalorder %s16, 5
    %p51 = por %p49, %p50
    %p53 = scmp.ne.s32.totalorder %s36, %s52
    %p54 = scmp.eq.s32.totalorder %s16, 0
    %p55 = por %p53, %p54
    %s56 = sadd.s32 %s18, 1
    %s57 = sadd.s32 %s25, 1
    %s58 = ssub.s32 %s17, %s29
    %s59 = ssub.s32 %s56, %s57
    %s60 = sor.u32 %s58, %s59
    %p61 = scmp.eq.s32.totalorder %s60, 0
    %s63 = sadd.s32 %s62, 1
    %s64 = scalar_select %p61, %s62, %s63
    %p67 = pneg %p61
    %p68 = scmp.eq.s32.totalorder %s10, 5
    %p69 = por %p67, %p68
    %p70 = scmp.ne.s32.totalorder %s62, %s65
    %p71 = scmp.eq.s32.totalorder %s10, 0
    %p72 = por %p70, %p71
    %p73 = scmp.ne.s32.totalorder %s62, %s65
    %p74 = scmp.eq.s32.totalorder %s15, 5
    %p75 = por %p73, %p74
    %p76 = scmp.ne.s32.totalorder %s65, %s66
    %p77 = scmp.eq.s32.totalorder %s15, 0
    %p78 = por %p76, %p77
    %p79 = scmp.ne.s32.totalorder %s65, %s66
    %p80 = scmp.eq.s32.totalorder %s16, 5
    %p81 = por %p79, %p80
    %p83 = scmp.ne.s32.totalorder %s66, %s82
    %p84 = scmp.eq.s32.totalorder %s16, 0
    %p85 = por %p83, %p84
    %s86 = sadd.s32 %s18, 1
    %s87 = sadd.s32 %s25, 1
    %s88 = ssub.s32 %s17, %s29
    %s89 = ssub.s32 %s86, %s87
    %s90 = sor.u32 %s88, %s89
    %p91 = scmp.eq.s32.totalorder %s90, 0
    %s93 = sadd.s32 %s92, 1
    %s94 = scalar_select %p91, %s92, %s93
    %p97 = pneg %p91
    %p98 = scmp.eq.s32.totalorder %s10, 5
    %p99 = por %p97, %p98
    %p100 = scmp.ne.s32.totalorder %s92, %s95
    %p101 = scmp.eq.s32.totalorder %s10, 0
    %p102 = por %p100, %p101
    %p103 = scmp.ne.s32.totalorder %s92, %s95
    %p104 = scmp.eq.s32.totalorder %s15, 5
    %p105 = por %p103, %p104
    %p106 = scmp.ne.s32.totalorder %s95, %s96
    %p107 = scmp.eq.s32.totalorder %s15, 0
    %p108 = por %p106, %p107
    %p109 = scmp.ne.s32.totalorder %s95, %s96
    %p110 = scmp.eq.s32.totalorder %s16, 5
    %p111 = por %p109, %p110
    %p113 = scmp.ne.s32.totalorder %s96, %s112
    %p114 = scmp.eq.s32.totalorder %s16, 0
    %p115 = por %p113, %p114
    %s116 = sadd.s32 %s18, 1
    %s117 = sadd.s32 %s25, 1
    %s118 = ssub.s32 %s17, %s29
    %s119 = ssub.s32 %s116, %s117
    %s120 = sor.u32 %s118, %s119
    %p121 = scmp.eq.s32.totalorder %s120, 0
    %s123 = sadd.s32 %s122, 1
    %s124 = scalar_select %p121, %s122, %s123
    %p127 = pneg %p121
    %p128 = scmp.eq.s32.totalorder %s10, 5
    %p129 = por %p127, %p128
    %p130 = scmp.ne.s32.totalorder %s122, %s125
    %p131 = scmp.eq.s32.totalorder %s10, 0
    %p132 = por %p130, %p131
    %p133 = scmp.ne.s32.totalorder %s122, %s125
    %p134 = scmp.eq.s32.totalorder %s15, 5
    %p135 = por %p133, %p134
    %p136 = scmp.ne.s32.totalorder %s125, %s126
    %p137 = scmp.eq.s32.totalorder %s15, 0
    %p138 = por %p136, %p137
    %p139 = scmp.ne.s32.totalorder %s125, %s126
    %p140 = scmp.eq.s32.totalorder %s16, 5
    %p141 = por %p139, %p140
    %p143 = scmp.ne.s32.totalorder %s126, %s142
    %p144 = scmp.eq.s32.totalorder %s16, 0
    %p145 = por %p143, %p144
    %s146 = ssub.s32 %s17, %s29
    %s147 = ssub.s32 %s18, %s25
    %s148 = sor.u32 %s146, %s147
    %p149 = scmp.eq.s32.totalorder %s148, 0
    %s151 = sadd.s32 %s150, 1
    %s152 = scalar_select %p149, %s150, %s151
    %p155 = pneg %p149
    %p156 = scmp.eq.s32.totalorder %s10, 5
    %p157 = por %p155, %p156
    %p158 = scmp.ne.s32.totalorder %s150, %s153
    %p159 = scmp.eq.s32.totalorder %s10, 0
    %p160 = por %p158, %p159
    %p161 = scmp.ne.s32.totalorder %s150, %s153
    %p162 = scmp.eq.s32.totalorder %s15, 5
    %p163 = por %p161, %p162
    %p164 = scmp.ne.s32.totalorder %s153, %s154
    %p165 = scmp.eq.s32.totalorder %s15, 0
    %p166 = por %p164, %p165
    %p167 = scmp.ne.s32.totalorder %s153, %s154
    %p168 = scmp.eq.s32.totalorder %s16, 5
    %p169 = por %p167, %p168
    %p171 = scmp.ne.s32.totalorder %s154, %s170
    %p172 = scmp.eq.s32.totalorder %s16, 0
    %p173 = por %p171, %p172
    %p174 = scmp.le.s32.totalorder 1, %s10
    %p175 = scmp.lt.s32.totalorder %s10, 7
    %p176 = pnand %p174, %p175
    %p177 = pneg %p176
    // Predicated region
    $region9: #{full_model_vmd_forward.7} parent=5 // pred_check
      _
    $region10: #{full_model_vmd_forward.7} parent=5 // pred_check_branch
      %179 = sbr.rel (%p176) target = $region12
    $region11: #{full_model_vmd_forward.7} parent=5 // pred_region
      %s180 = ssub.s32 %s10, 1
    $region12: #{full_model_vmd_forward.7} parent=5 // pred_fallthru
      _
    %p181 = scmp.lt.s32.totalorder %s10, 6
    // Predicated region
    $region13: #{full_model_vmd_forward.7} parent=5 // pred_check
      %p182 = pneg %p181
    $region14: #{full_model_vmd_forward.7} parent=5 // pred_check_branch
      %184 = sbr.rel (%p182) target = $region16
    $region15: #{full_model_vmd_forward.7} parent=5 // pred_region
      // Predicated region
      $region17: #{full_model_vmd_forward.7} parent=15 // pred_check
        %p185 = pneg %p42
      $region18: #{full_model_vmd_forward.7} parent=15 // pred_check_branch
        %187 = sbr.rel (%p185) target = $region20
      $region19: #{full_model_vmd_forward.7} parent=15 // pred_region
        %p188 = scmp.lt.s32.totalorder %s17, 1
        %s189 = scalar_select %p188, %s17, 1
        %s190 = smul.addr %s189, 5
        %s191 = smul.addr %s190, 4
        %s192 = scalar_lea.vmem %s0, %s191
      $region20: #{full_model_vmd_forward.7} parent=15 // pred_fallthru
        _
      // Predicated region
      $region21: #{full_model_vmd_forward.7} parent=15 // pred_check
        %p193 = pneg %p72
      $region22: #{full_model_vmd_forward.7} parent=15 // pred_check_branch
        %195 = sbr.rel (%p193) target = $region24
      $region23: #{full_model_vmd_forward.7} parent=15 // pred_region
        %s196 = sadd.s32 %s18, 1
        %p197 = scmp.lt.s32.totalorder %s17, 1
        %s198 = scalar_select %p197, %s17, 1
        %p199 = scmp.lt.s32.totalorder %s196, 4
        %s200 = scalar_select %p199, %s196, 4
        %s201 = smul.addr %s198, 5
        %s202 = sadd.s32 %s200, %s201
        %s203 = smul.addr %s202, 2
        %s204 = scalar_lea.vmem %s1, %s203
        %s205 = sadd.s32 %s18, 1
      $region24: #{full_model_vmd_forward.7} parent=15 // pred_fallthru
        _
      // Predicated region
      $region25: #{full_model_vmd_forward.7} parent=15 // pred_check
        %p206 = pneg %p102
      $region26: #{full_model_vmd_forward.7} parent=15 // pred_check_branch
        %208 = sbr.rel (%p206) target = $region28
      $region27: #{full_model_vmd_forward.7} parent=15 // pred_region
        %s209 = sadd.s32 %s18, 1
        %p210 = scmp.lt.s32.totalorder %s17, 1
        %s211 = scalar_select %p210, %s17, 1
        %p212 = scmp.lt.s32.totalorder %s209, 4
        %s213 = scalar_select %p212, %s209, 4
        %s214 = smul.addr %s213, 9
        %s215 = smul.addr %s211, 45
        %s216 = sadd.s32 %s214, %s215
        %s217 = smul.addr %s216, 2
        %s218 = scalar_lea.vmem %s2, %s217
        %s219 = sadd.s32 %s18, 1
      $region28: #{full_model_vmd_forward.7} parent=15 // pred_fallthru
        _
      // Predicated region
      $region29: #{full_model_vmd_forward.7} parent=15 // pred_check
        %p220 = pneg %p132
      $region30: #{full_model_vmd_forward.7} parent=15 // pred_check_branch
        %222 = sbr.rel (%p220) target = $region32
      $region31: #{full_model_vmd_forward.7} parent=15 // pred_region
        %s223 = sadd.s32 %s18, 1
        %p224 = scmp.lt.s32.totalorder %s17, 1
        %s225 = scalar_select %p224, %s17, 1
        %p226 = scmp.lt.s32.totalorder %s223, 4
        %s227 = scalar_select %p226, %s223, 4
        %s228 = smul.addr %s227, 9
        %s229 = smul.addr %s225, 45
        %s230 = sadd.s32 %s228, %s229
        %s231 = smul.addr %s230, 2
        %s232 = scalar_lea.vmem %s3, %s231
        %s233 = sadd.s32 %s18, 1
      $region32: #{full_model_vmd_forward.7} parent=15 // pred_fallthru
        _
    $region16: #{full_model_vmd_forward.7} parent=5 // pred_fallthru
      _
    %p234 = scmp.le.s32.totalorder 1, %s10
    %p235 = scmp.lt.s32.totalorder %s10, 7
    %p236 = pnand %p234, %p235
    %p237 = pneg %p236
    // Predicated region
    $region33: #{full_model_vmd_forward.7} parent=5 // pred_check
      _
    $region34: #{full_model_vmd_forward.7} parent=5 // pred_check_branch
      %239 = sbr.rel (%p236) target = $region36
    $region35: #{full_model_vmd_forward.7} parent=5 // pred_region
      %s240 = ssub.s32 %s10, 1
      %p241 = scmp.lt.s32.totalorder %s19, 1
      %s242 = scalar_select %p241, %s19, 1
      %s243 = smul.addr %s242, 5
      %s244 = smul.addr %s243, 4
      %s245 = scalar_lea.vmem %s0, %s244
      %p246 = pneg %p48
      %p247 = pneg %p45
      %s248 = sadd.s32 %s20, 1
      %p249 = scmp.lt.s32.totalorder %s19, 1
      %s250 = scalar_select %p249, %s19, 1
      %p251 = scmp.lt.s32.totalorder %s248, 4
      %s252 = scalar_select %p251, %s248, 4
      %s253 = smul.addr %s250, 5
      %s254 = sadd.s32 %s252, %s253
      %s255 = smul.addr %s254, 2
      %s256 = scalar_lea.vmem %s1, %s255
      %p257 = pneg %p78
      %p258 = pneg %p75
      %s259 = sadd.s32 %s20, 1
      %p260 = scmp.lt.s32.totalorder %s19, 1
      %s261 = scalar_select %p260, %s19, 1
      %p262 = scmp.lt.s32.totalorder %s259, 4
      %s263 = scalar_select %p262, %s259, 4
      %s264 = smul.addr %s263, 9
      %s265 = smul.addr %s261, 45
      %s266 = sadd.s32 %s264, %s265
      %s267 = smul.addr %s266, 2
      %s268 = scalar_lea.vmem %s2, %s267
      %p269 = pneg %p108
      %p270 = pneg %p105
      %s271 = sadd.s32 %s20, 1
      %p272 = scmp.lt.s32.totalorder %s19, 1
      %s273 = scalar_select %p272, %s19, 1
      %p274 = scmp.lt.s32.totalorder %s271, 4
      %s275 = scalar_select %p274, %s271, 4
      %s276 = smul.addr %s275, 9
      %s277 = smul.addr %s273, 45
      %s278 = sadd.s32 %s276, %s277
      %s279 = smul.addr %s278, 2
      %s280 = scalar_lea.vmem %s3, %s279
      %p281 = pneg %p138
      %p282 = pneg %p135
      %p283 = pneg %p166
      %p284 = pneg %p163
      %p285 = scmp.lt.s32.totalorder %s19, 1
      %s286 = scalar_select %p285, %s19, 1
      %p287 = scmp.lt.s32.totalorder %s20, 2
      %s288 = scalar_select %p287, %s20, 2
      %s289 = smul.addr %s286, 3
      %s290 = sadd.s32 %s288, %s289
      %s291 = smul.addr %s290, 8
      %s292 = scalar_lea.vmem %s4, %s291
      %p293 = scmp.lt.s32.totalorder %s19, 1
      %s294 = scalar_select %p293, %s19, 1
      %s295 = smul.addr %s294, 5
      %s296 = smul.addr %s295, 4
      %s297 = scalar_lea.vmem %s0, %s296
      %s298 = sadd.s32 %s20, 1
      %p299 = scmp.lt.s32.totalorder %s19, 1
      %s300 = scalar_select %p299, %s19, 1
      %p301 = scmp.lt.s32.totalorder %s298, 4
      %s302 = scalar_select %p301, %s298, 4
      %s303 = smul.addr %s300, 5
      %s304 = sadd.s32 %s302, %s303
      %s305 = smul.addr %s304, 2
      %s306 = scalar_lea.vmem %s1, %s305
      %s307 = sadd.s32 %s20, 1
      %s308 = sadd.s32 %s20, 1
      %p309 = scmp.lt.s32.totalorder %s19, 1
      %s310 = scalar_select %p309, %s19, 1
      %p311 = scmp.lt.s32.totalorder %s308, 4
      %s312 = scalar_select %p311, %s308, 4
      %s313 = smul.addr %s312, 9
      %s314 = smul.addr %s310, 45
      %s315 = sadd.s32 %s313, %s314
      %s316 = smul.addr %s315, 2
      %s317 = scalar_lea.vmem %s2, %s316
      %s318 = sadd.s32 %s20, 1
      %s319 = sadd.s32 %s20, 1
      %p320 = scmp.lt.s32.totalorder %s19, 1
      %s321 = scalar_select %p320, %s19, 1
      %p322 = scmp.lt.s32.totalorder %s319, 4
      %s323 = scalar_select %p322, %s319, 4
      %s324 = smul.addr %s323, 9
      %s325 = smul.addr %s321, 45
      %s326 = sadd.s32 %s324, %s325
      %s327 = smul.addr %s326, 2
      %s328 = scalar_lea.vmem %s3, %s327
      %s329 = sadd.s32 %s20, 1
      %p330 = scmp.lt.s32.totalorder %s19, 1
      %s331 = scalar_select %p330, %s19, 1
      %p332 = scmp.lt.s32.totalorder %s20, 2
      %s333 = scalar_select %p332, %s20, 2
      %s334 = smul.addr %s331, 3
      %s335 = sadd.s32 %s333, %s334
      %s336 = smul.addr %s335, 8
      %s337 = scalar_lea.vmem %s4, %s336
      %v338 = vld [vmem:[%s306] sm:$0x3]
      %s339 = smul.u32 %s20, 4
      %s340 = scalar_lea.vmem %s297, %s339
      %v341 = vld [vmem:[%s340] sm:$0xf]
      %s342 = sadd.s32 %s20, 1
      %s343 = smul.u32 %s342, 4
      %s344 = scalar_lea.vmem %s297, %s343
      %v345 = vld [vmem:[%s344] sm:$0xf]
      %s346 = sadd.s32 %s20, 2
      %s347 = smul.u32 %s346, 4
      %s348 = scalar_lea.vmem %s297, %s347
      %v349 = vld [vmem:[%s348] sm:$0xf]
      %v351 = vrot.slane %v341, 7
      %352 = vrot.lane.b32.xlu0 %v351, 1
      %v353 = vpop.permute.xlu0 %352
      %v355 = vsub.f32 %v345, %v353
      %v356 = vand.u32 2147483647, %v355
      %vm357 = vcmp.lt.f32.partialorder %v356, 0.3
      %v358 = vsel %vm357, 1, 0
      %v359 = vcvt.s32.f32 %v358
      %v360 = vmul.f32 %v359, 0.8
      %v362 = vrot.slane %v349, 7
      %363 = vrot.lane.b32.xlu0 %v362, 1
      %v364 = vpop.permute.xlu0 %363
      %v366 = vsub.f32 %v345, %v364
      %v367 = vand.u32 2147483647, %v366
      %vm368 = vcmp.lt.f32.partialorder %v367, 0.3
      %v369 = vsel %vm368, 1, 0
      %v370 = vcvt.s32.f32 %v369
      %v371 = vmul.f32 %v370, 0.8
      %v372 = vld [vmem:[%s317] sm:$0x3]
      %v373 = vld [vmem:[%s328] sm:$0x3]
      %v374 = vmax.f32 %v372, 0.0
      %v376 = vrot.slane %v360, 1
      %377 = vrot.lane.b32.xlu0 %v376, 127
      %v378 = vpop.permute.xlu0 %377
      %v380 = vmul.f32 %v372, %v378
      %v381 = vsub.f32 %v374, %v380
      %v382 = vand.u32 2147483647, %v372
      %v383 = vsub.f32 0.0, %v382
      %v384 = vmul.f32 %v383, 1.442695
      %v385 = vpow.pop %v384
      %v386 = vadd.f32 %v385, 1.0
      %v387 = vlog2.pop %v386
      %v388 = vmul.f32 %v387, 0.6931472
      %v389 = vmul.f32 -0.5, %v385
      %v390 = vadd.f32 %v389, 1.0
      %v391 = vmul.f32 %v390, %v385
      %v392 = vand.u32 2147483647, %v385
      %vm393 = vcmp.lt.f32.partialorder %v392, 0.0004427343
      %v394 = vsel %vm393, %v391, %v388
      %v395 = vadd.f32 %v381, %v394
      %v396 = vadd.f32 %v395, 0.0
      %v397 = vmax.f32 %v373, 0.0
      %v399 = vrot.slane %v371, 1
      %400 = vrot.lane.b32.xlu0 %v399, 127
      %v401 = vpop.permute.xlu0 %400
      %v403 = vmul.f32 %v373, %v401
      %v404 = vsub.f32 %v397, %v403
      %v405 = vand.u32 2147483647, %v373
      %v406 = vsub.f32 0.0, %v405
      %v407 = vmul.f32 %v406, 1.442695
      %v408 = vpow.pop %v407
      %v409 = vadd.f32 %v408, 1.0
      %v410 = vlog2.pop %v409
      %v411 = vmul.f32 %v410, 0.6931472
      %v412 = vmul.f32 -0.5, %v408
      %v413 = vadd.f32 %v412, 1.0
      %v414 = vmul.f32 %v413, %v408
      %v415 = vand.u32 2147483647, %v408
      %vm416 = vcmp.lt.f32.partialorder %v415, 0.0004427343
      %v417 = vsel %vm416, %v414, %v411
      %v418 = vadd.f32 %v404, %v417
      %v419 = vadd.f32 %v396, %v418
      %v421 = vsub.f32 %v345, %v351
      %v422 = vand.u32 2147483647, %v421
      %vm423 = vcmp.lt.f32.partialorder %v422, 0.3
      %v424 = vsel %vm423, 1, 0
      %v425 = vcvt.s32.f32 %v424
      %v426 = vmul.f32 %v425, 0.8
      %v428 = vsub.f32 %v345, %v362
      %v429 = vand.u32 2147483647, %v428
      %vm430 = vcmp.lt.f32.partialorder %v429, 0.3
      %v431 = vsel %vm430, 1, 0
      %v432 = vcvt.s32.f32 %v431
      %v433 = vmul.f32 %v432, 0.8
      %s434 = scalar_lea.vmem %s317, 2
      %v435 = vld [vmem:[%s434] sm:$0x3]
      %s436 = scalar_lea.vmem %s328, 2
      %v437 = vld [vmem:[%s436] sm:$0x3]
      %v438 = vmax.f32 %v435, 0.0
      %v440 = vrot.slane %v426, 1
      %441 = vrot.lane.b32.xlu0 %v440, 127
      %v442 = vpop.permute.xlu0 %441
      %v444 = vmul.f32 %v435, %v442
      %v445 = vsub.f32 %v438, %v444
      %v446 = vand.u32 2147483647, %v435
      %v447 = vsub.f32 0.0, %v446
      %v448 = vmul.f32 %v447, 1.442695
      %v449 = vpow.pop %v448
      %v450 = vadd.f32 %v449, 1.0
      %v451 = vlog2.pop %v450
      %v452 = vmul.f32 %v451, 0.6931472
      %v453 = vmul.f32 -0.5, %v449
      %v454 = vadd.f32 %v453, 1.0
      %v455 = vmul.f32 %v454, %v449
      %v456 = vand.u32 2147483647, %v449
      %vm457 = vcmp.lt.f32.partialorder %v456, 0.0004427343
      %v458 = vsel %vm457, %v455, %v452
      %v459 = vadd.f32 %v445, %v458
      %v460 = vadd.f32 %v419, %v459
      %v461 = vmax.f32 %v437, 0.0
      %v463 = vrot.slane %v433, 1
      %464 = vrot.lane.b32.xlu0 %v463, 127
      %v465 = vpop.permute.xlu0 %464
      %v467 = vmul.f32 %v437, %v465
      %v468 = vsub.f32 %v461, %v467
      %v469 = vand.u32 2147483647, %v437
      %v470 = vsub.f32 0.0, %v469
      %v471 = vmul.f32 %v470, 1.442695
      %v472 = vpow.pop %v471
      %v473 = vadd.f32 %v472, 1.0
      %v474 = vlog2.pop %v473
      %v475 = vmul.f32 %v474, 0.6931472
      %v476 = vmul.f32 -0.5, %v472
      %v477 = vadd.f32 %v476, 1.0
      %v478 = vmul.f32 %v477, %v472
      %v479 = vand.u32 2147483647, %v472
      %vm480 = vcmp.lt.f32.partialorder %v479, 0.0004427343
      %v481 = vsel %vm480, %v478, %v475
      %v482 = vadd.f32 %v468, %v481
      %v483 = vadd.f32 %v460, %v482
      %484 = vrot.lane.b32.xlu0 %v351, 127
      %v485 = vpop.permute.xlu0 %484
      %v487 = vsub.f32 %v345, %v485
      %v488 = vand.u32 2147483647, %v487
      %vm489 = vcmp.lt.f32.partialorder %v488, 0.3
      %v490 = vsel %vm489, 1, 0
      %v491 = vcvt.s32.f32 %v490
      %v492 = vmul.f32 %v491, 0.8
      %493 = vrot.lane.b32.xlu0 %v362, 127
      %v494 = vpop.permute.xlu0 %493
      %v496 = vsub.f32 %v345, %v494
      %v497 = vand.u32 2147483647, %v496
      %vm498 = vcmp.lt.f32.partialorder %v497, 0.3
      %v499 = vsel %vm498, 1, 0
      %v500 = vcvt.s32.f32 %v499
      %v501 = vmul.f32 %v500, 0.8
      %s502 = scalar_lea.vmem %s317, 4
      %v503 = vld [vmem:[%s502] sm:$0x3]
      %s504 = scalar_lea.vmem %s328, 4
      %v505 = vld [vmem:[%s504] sm:$0x3]
      %v506 = vmax.f32 %v503, 0.0
      %v508 = vrot.slane %v492, 1
      %509 = vrot.lane.b32.xlu0 %v508, 127
      %v510 = vpop.permute.xlu0 %509
      %v512 = vmul.f32 %v503, %v510
      %v513 = vsub.f32 %v506, %v512
      %v514 = vand.u32 2147483647, %v503
      %v515 = vsub.f32 0.0, %v514
      %v516 = vmul.f32 %v515, 1.442695
      %v517 = vpow.pop %v516
      %v518 = vadd.f32 %v517, 1.0
      %v519 = vlog2.pop %v518
      %v520 = vmul.f32 %v519, 0.6931472
      %v521 = vmul.f32 -0.5, %v517
      %v522 = vadd.f32 %v521, 1.0
      %v523 = vmul.f32 %v522, %v517
      %v524 = vand.u32 2147483647, %v517
      %vm525 = vcmp.lt.f32.partialorder %v524, 0.0004427343
      %v526 = vsel %vm525, %v523, %v520
      %v527 = vadd.f32 %v513, %v526
      %v528 = vadd.f32 %v483, %v527
      %v529 = vmax.f32 %v505, 0.0
      %v531 = vrot.slane %v501, 1
      %532 = vrot.lane.b32.xlu0 %v531, 127
      %v533 = vpop.permute.xlu0 %532
      %v535 = vmul.f32 %v505, %v533
      %v536 = vsub.f32 %v529, %v535
      %v537 = vand.u32 2147483647, %v505
      %v538 = vsub.f32 0.0, %v537
      %v539 = vmul.f32 %v538, 1.442695
      %v540 = vpow.pop %v539
      %v541 = vadd.f32 %v540, 1.0
      %v542 = vlog2.pop %v541
      %v543 = vmul.f32 %v542, 0.6931472
      %v544 = vmul.f32 -0.5, %v540
      %v545 = vadd.f32 %v544, 1.0
      %v546 = vmul.f32 %v545, %v540
      %v547 = vand.u32 2147483647, %v540
      %vm548 = vcmp.lt.f32.partialorder %v547, 0.0004427343
      %v549 = vsel %vm548, %v546, %v543
      %v550 = vadd.f32 %v536, %v549
      %v551 = vadd.f32 %v528, %v550
      %552 = vrot.lane.b32.xlu0 %v341, 1
      %v553 = vpop.permute.xlu0 %552
      %v555 = vsub.f32 %v345, %v553
      %v556 = vand.u32 2147483647, %v555
      %vm557 = vcmp.lt.f32.partialorder %v556, 0.3
      %v558 = vsel %vm557, 1, 0
      %v559 = vcvt.s32.f32 %v558
      %v560 = vmul.f32 %v559, 0.8
      %561 = vrot.lane.b32.xlu0 %v349, 1
      %v562 = vpop.permute.xlu0 %561
      %v564 = vsub.f32 %v345, %v562
      %v565 = vand.u32 2147483647, %v564
      %vm566 = vcmp.lt.f32.partialorder %v565, 0.3
      %v567 = vsel %vm566, 1, 0
      %v568 = vcvt.s32.f32 %v567
      %v569 = vmul.f32 %v568, 0.8
      %s570 = scalar_lea.vmem %s317, 6
      %v571 = vld [vmem:[%s570] sm:$0x3]
      %s572 = scalar_lea.vmem %s328, 6
      %v573 = vld [vmem:[%s572] sm:$0x3]
      %v574 = vmax.f32 %v571, 0.0
      %v576 = vrot.slane %v560, 1
      %577 = vrot.lane.b32.xlu0 %v576, 127
      %v578 = vpop.permute.xlu0 %577
      %v580 = vmul.f32 %v571, %v578
      %v581 = vsub.f32 %v574, %v580
      %v582 = vand.u32 2147483647, %v571
      %v583 = vsub.f32 0.0, %v582
      %v584 = vmul.f32 %v583, 1.442695
      %v585 = vpow.pop %v584
      %v586 = vadd.f32 %v585, 1.0
      %v587 = vlog2.pop %v586
      %v588 = vmul.f32 %v587, 0.6931472
      %v589 = vmul.f32 -0.5, %v585
      %v590 = vadd.f32 %v589, 1.0
      %v591 = vmul.f32 %v590, %v585
      %v592 = vand.u32 2147483647, %v585
      %vm593 = vcmp.lt.f32.partialorder %v592, 0.0004427343
      %v594 = vsel %vm593, %v591, %v588
      %v595 = vadd.f32 %v581, %v594
      %v596 = vadd.f32 %v551, %v595
      %v597 = vmax.f32 %v573, 0.0
      %v599 = vrot.slane %v569, 1
      %600 = vrot.lane.b32.xlu0 %v599, 127
      %v601 = vpop.permute.xlu0 %600
      %v603 = vmul.f32 %v573, %v601
      %v604 = vsub.f32 %v597, %v603
      %v605 = vand.u32 2147483647, %v573
      %v606 = vsub.f32 0.0, %v605
      %v607 = vmul.f32 %v606, 1.442695
      %v608 = vpow.pop %v607
      %v609 = vadd.f32 %v608, 1.0
      %v610 = vlog2.pop %v609
      %v611 = vmul.f32 %v610, 0.6931472
      %v612 = vmul.f32 -0.5, %v608
      %v613 = vadd.f32 %v612, 1.0
      %v614 = vmul.f32 %v613, %v608
      %v615 = vand.u32 2147483647, %v608
      %vm616 = vcmp.lt.f32.partialorder %v615, 0.0004427343
      %v617 = vsel %vm616, %v614, %v611
      %v618 = vadd.f32 %v604, %v617
      %v619 = vadd.f32 %v596, %v618
      %v620 = vsub.f32 %v345, %v341
      %v621 = vand.u32 2147483647, %v620
      %vm622 = vcmp.lt.f32.partialorder %v621, 0.3
      %v623 = vsel %vm622, 1, 0
      %v624 = vcvt.s32.f32 %v623
      %v625 = vmul.f32 %v624, 0.8
      %v626 = vsub.f32 %v345, %v349
      %v627 = vand.u32 2147483647, %v626
      %vm628 = vcmp.lt.f32.partialorder %v627, 0.3
      %v629 = vsel %vm628, 1, 0
      %v630 = vcvt.s32.f32 %v629
      %v631 = vmul.f32 %v630, 0.8
      %s632 = scalar_lea.vmem %s317, 8
      %v633 = vld [vmem:[%s632] sm:$0x3]
      %s634 = scalar_lea.vmem %s328, 8
      %v635 = vld [vmem:[%s634] sm:$0x3]
      %v636 = vmax.f32 %v633, 0.0
      %v638 = vrot.slane %v625, 1
      %639 = vrot.lane.b32.xlu0 %v638, 127
      %v640 = vpop.permute.xlu0 %639
      %v642 = vmul.f32 %v633, %v640
      %v643 = vsub.f32 %v636, %v642
      %v644 = vand.u32 2147483647, %v633
      %v645 = vsub.f32 0.0, %v644
      %v646 = vmul.f32 %v645, 1.442695
      %v647 = vpow.pop %v646
      %v648 = vadd.f32 %v647, 1.0
      %v649 = vlog2.pop %v648
      %v650 = vmul.f32 %v649, 0.6931472
      %v651 = vmul.f32 -0.5, %v647
      %v652 = vadd.f32 %v651, 1.0
      %v653 = vmul.f32 %v652, %v647
      %v654 = vand.u32 2147483647, %v647
      %vm655 = vcmp.lt.f32.partialorder %v654, 0.0004427343
      %v656 = vsel %vm655, %v653, %v650
      %v657 = vadd.f32 %v643, %v656
      %v658 = vadd.f32 %v619, %v657
      %v659 = vmax.f32 %v635, 0.0
      %v661 = vrot.slane %v631, 1
      %662 = vrot.lane.b32.xlu0 %v661, 127
      %v663 = vpop.permute.xlu0 %662
      %v665 = vmul.f32 %v635, %v663
      %v666 = vsub.f32 %v659, %v665
      %v667 = vand.u32 2147483647, %v635
      %v668 = vsub.f32 0.0, %v667
      %v669 = vmul.f32 %v668, 1.442695
      %v670 = vpow.pop %v669
      %v671 = vadd.f32 %v670, 1.0
      %v672 = vlog2.pop %v671
      %v673 = vmul.f32 %v672, 0.6931472
      %v674 = vmul.f32 -0.5, %v670
      %v675 = vadd.f32 %v674, 1.0
      %v676 = vmul.f32 %v675, %v670
      %v677 = vand.u32 2147483647, %v670
      %vm678 = vcmp.lt.f32.partialorder %v677, 0.0004427343
      %v679 = vsel %vm678, %v676, %v673
      %v680 = vadd.f32 %v666, %v679
      %v681 = vadd.f32 %v658, %v680
      %682 = vrot.lane.b32.xlu0 %v341, 127
      %v683 = vpop.permute.xlu0 %682
      %v685 = vsub.f32 %v345, %v683
      %v686 = vand.u32 2147483647, %v685
      %vm687 = vcmp.lt.f32.partialorder %v686, 0.3
      %v688 = vsel %vm687, 1, 0
      %v689 = vcvt.s32.f32 %v688
      %v690 = vmul.f32 %v689, 0.8
      %691 = vrot.lane.b32.xlu0 %v349, 127
      %v692 = vpop.permute.xlu0 %691
      %v694 = vsub.f32 %v345, %v692
      %v695 = vand.u32 2147483647, %v694
      %vm696 = vcmp.lt.f32.partialorder %v695, 0.3
      %v697 = vsel %vm696, 1, 0
      %v698 = vcvt.s32.f32 %v697
      %v699 = vmul.f32 %v698, 0.8
      %s700 = scalar_lea.vmem %s317, 10
      %v701 = vld [vmem:[%s700] sm:$0x3]
      %s702 = scalar_lea.vmem %s328, 10
      %v703 = vld [vmem:[%s702] sm:$0x3]
      %v704 = vmax.f32 %v701, 0.0
      %v706 = vrot.slane %v690, 1
      %707 = vrot.lane.b32.xlu0 %v706, 127
      %v708 = vpop.permute.xlu0 %707
      %v710 = vmul.f32 %v701, %v708
      %v711 = vsub.f32 %v704, %v710
      %v712 = vand.u32 2147483647, %v701
      %v713 = vsub.f32 0.0, %v712
      %v714 = vmul.f32 %v713, 1.442695
      %v715 = vpow.pop %v714
      %v716 = vadd.f32 %v715, 1.0
      %v717 = vlog2.pop %v716
      %v718 = vmul.f32 %v717, 0.6931472
      %v719 = vmul.f32 -0.5, %v715
      %v720 = vadd.f32 %v719, 1.0
      %v721 = vmul.f32 %v720, %v715
      %v722 = vand.u32 2147483647, %v715
      %vm723 = vcmp.lt.f32.partialorder %v722, 0.0004427343
      %v724 = vsel %vm723, %v721, %v718
      %v725 = vadd.f32 %v711, %v724
      %v726 = vadd.f32 %v681, %v725
      %v727 = vmax.f32 %v703, 0.0
      %v729 = vrot.slane %v699, 1
      %730 = vrot.lane.b32.xlu0 %v729, 127
      %v731 = vpop.permute.xlu0 %730
      %v733 = vmul.f32 %v703, %v731
      %v734 = vsub.f32 %v727, %v733
      %v735 = vand.u32 2147483647, %v703
      %v736 = vsub.f32 0.0, %v735
      %v737 = vmul.f32 %v736, 1.442695
      %v738 = vpow.pop %v737
      %v739 = vadd.f32 %v738, 1.0
      %v740 = vlog2.pop %v739
      %v741 = vmul.f32 %v740, 0.6931472
      %v742 = vmul.f32 -0.5, %v738
      %v743 = vadd.f32 %v742, 1.0
      %v744 = vmul.f32 %v743, %v738
      %v745 = vand.u32 2147483647, %v738
      %vm746 = vcmp.lt.f32.partialorder %v745, 0.0004427343
      %v747 = vsel %vm746, %v744, %v741
      %v748 = vadd.f32 %v734, %v747
      %v749 = vadd.f32 %v726, %v748
      %v750 = vrot.slane %v341, 1
      %751 = vrot.lane.b32.xlu0 %v750, 1
      %v752 = vpop.permute.xlu0 %751
      %v754 = vsub.f32 %v345, %v752
      %v755 = vand.u32 2147483647, %v754
      %vm756 = vcmp.lt.f32.partialorder %v755, 0.3
      %v757 = vsel %vm756, 1, 0
      %v758 = vcvt.s32.f32 %v757
      %v759 = vmul.f32 %v758, 0.8
      %v760 = vrot.slane %v349, 1
      %761 = vrot.lane.b32.xlu0 %v760, 1
      %v762 = vpop.permute.xlu0 %761
      %v764 = vsub.f32 %v345, %v762
      %v765 = vand.u32 2147483647, %v764
      %vm766 = vcmp.lt.f32.partialorder %v765, 0.3
      %v767 = vsel %vm766, 1, 0
      %v768 = vcvt.s32.f32 %v767
      %v769 = vmul.f32 %v768, 0.8
      %s770 = scalar_lea.vmem %s317, 12
      %v771 = vld [vmem:[%s770] sm:$0x3]
      %s772 = scalar_lea.vmem %s328, 12
      %v773 = vld [vmem:[%s772] sm:$0x3]
      %v774 = vmax.f32 %v771, 0.0
      %v776 = vrot.slane %v759, 1
      %777 = vrot.lane.b32.xlu0 %v776, 127
      %v778 = vpop.permute.xlu0 %777
      %v780 = vmul.f32 %v771, %v778
      %v781 = vsub.f32 %v774, %v780
      %v782 = vand.u32 2147483647, %v771
      %v783 = vsub.f32 0.0, %v782
      %v784 = vmul.f32 %v783, 1.442695
      %v785 = vpow.pop %v784
      %v786 = vadd.f32 %v785, 1.0
      %v787 = vlog2.pop %v786
      %v788 = vmul.f32 %v787, 0.6931472
      %v789 = vmul.f32 -0.5, %v785
      %v790 = vadd.f32 %v789, 1.0
      %v791 = vmul.f32 %v790, %v785
      %v792 = vand.u32 2147483647, %v785
      %vm793 = vcmp.lt.f32.partialorder %v792, 0.0004427343
      %v794 = vsel %vm793, %v791, %v788
      %v795 = vadd.f32 %v781, %v794
      %v796 = vadd.f32 %v749, %v795
      %v797 = vmax.f32 %v773, 0.0
      %v799 = vrot.slane %v769, 1
      %800 = vrot.lane.b32.xlu0 %v799, 127
      %v801 = vpop.permute.xlu0 %800
      %v803 = vmul.f32 %v773, %v801
      %v804 = vsub.f32 %v797, %v803
      %v805 = vand.u32 2147483647, %v773
      %v806 = vsub.f32 0.0, %v805
      %v807 = vmul.f32 %v806, 1.442695
      %v808 = vpow.pop %v807
      %v809 = vadd.f32 %v808, 1.0
      %v810 = vlog2.pop %v809
      %v811 = vmul.f32 %v810, 0.6931472
      %v812 = vmul.f32 -0.5, %v808
      %v813 = vadd.f32 %v812, 1.0
      %v814 = vmul.f32 %v813, %v808
      %v815 = vand.u32 2147483647, %v808
      %vm816 = vcmp.lt.f32.partialorder %v815, 0.0004427343
      %v817 = vsel %vm816, %v814, %v811
      %v818 = vadd.f32 %v804, %v817
      %v819 = vadd.f32 %v796, %v818
      %v821 = vsub.f32 %v345, %v750
      %v822 = vand.u32 2147483647, %v821
      %vm823 = vcmp.lt.f32.partialorder %v822, 0.3
      %v824 = vsel %vm823, 1, 0
      %v825 = vcvt.s32.f32 %v824
      %v826 = vmul.f32 %v825, 0.8
      %v828 = vsub.f32 %v345, %v760
      %v829 = vand.u32 2147483647, %v828
      %vm830 = vcmp.lt.f32.partialorder %v829, 0.3
      %v831 = vsel %vm830, 1, 0
      %v832 = vcvt.s32.f32 %v831
      %v833 = vmul.f32 %v832, 0.8
      %s834 = scalar_lea.vmem %s317, 14
      %v835 = vld [vmem:[%s834] sm:$0x3]
      %s836 = scalar_lea.vmem %s328, 14
      %v837 = vld [vmem:[%s836] sm:$0x3]
      %v838 = vmax.f32 %v835, 0.0
      %v840 = vrot.slane %v826, 1
      %841 = vrot.lane.b32.xlu0 %v840, 127
      %v842 = vpop.permute.xlu0 %841
      %v844 = vmul.f32 %v835, %v842
      %v845 = vsub.f32 %v838, %v844
      %v846 = vand.u32 2147483647, %v835
      %v847 = vsub.f32 0.0, %v846
      %v848 = vmul.f32 %v847, 1.442695
      %v849 = vpow.pop %v848
      %v850 = vadd.f32 %v849, 1.0
      %v851 = vlog2.pop %v850
      %v852 = vmul.f32 %v851, 0.6931472
      %v853 = vmul.f32 -0.5, %v849
      %v854 = vadd.f32 %v853, 1.0
      %v855 = vmul.f32 %v854, %v849
      %v856 = vand.u32 2147483647, %v849
      %vm857 = vcmp.lt.f32.partialorder %v856, 0.0004427343
      %v858 = vsel %vm857, %v855, %v852
      %v859 = vadd.f32 %v845, %v858
      %v860 = vadd.f32 %v819, %v859
      %v861 = vmax.f32 %v837, 0.0
      %v863 = vrot.slane %v833, 1
      %864 = vrot.lane.b32.xlu0 %v863, 127
      %v865 = vpop.permute.xlu0 %864
      %v867 = vmul.f32 %v837, %v865
      %v868 = vsub.f32 %v861, %v867
      %v869 = vand.u32 2147483647, %v837
      %v870 = vsub.f32 0.0, %v869
      %v871 = vmul.f32 %v870, 1.442695
      %v872 = vpow.pop %v871
      %v873 = vadd.f32 %v872, 1.0
      %v874 = vlog2.pop %v873
      %v875 = vmul.f32 %v874, 0.6931472
      %v876 = vmul.f32 -0.5, %v872
      %v877 = vadd.f32 %v876, 1.0
      %v878 = vmul.f32 %v877, %v872
      %v879 = vand.u32 2147483647, %v872
      %vm880 = vcmp.lt.f32.partialorder %v879, 0.0004427343
      %v881 = vsel %vm880, %v878, %v875
      %v882 = vadd.f32 %v868, %v881
      %v883 = vadd.f32 %v860, %v882
      %884 = vrot.lane.b32.xlu0 %v750, 127
      %v885 = vpop.permute.xlu0 %884
      %v887 = vsub.f32 %v345, %v885
      %v888 = vand.u32 2147483647, %v887
      %vm889 = vcmp.lt.f32.partialorder %v888, 0.3
      %v890 = vsel %vm889, 1, 0
      %v891 = vcvt.s32.f32 %v890
      %v892 = vmul.f32 %v891, 0.8
      %893 = vrot.lane.b32.xlu0 %v760, 127
      %v894 = vpop.permute.xlu0 %893
      %v896 = vsub.f32 %v345, %v894
      %v897 = vand.u32 2147483647, %v896
      %vm898 = vcmp.lt.f32.partialorder %v897, 0.3
      %v899 = vsel %vm898, 1, 0
      %v900 = vcvt.s32.f32 %v899
      %v901 = vmul.f32 %v900, 0.8
      %s902 = scalar_lea.vmem %s317, 16
      %v903 = vld [vmem:[%s902] sm:$0x3]
      %s904 = scalar_lea.vmem %s328, 16
      %v905 = vld [vmem:[%s904] sm:$0x3]
      %v906 = vmax.f32 %v903, 0.0
      %v908 = vrot.slane %v892, 1
      %909 = vrot.lane.b32.xlu0 %v908, 127
      %v910 = vpop.permute.xlu0 %909
      %v912 = vmul.f32 %v903, %v910
      %v913 = vsub.f32 %v906, %v912
      %v914 = vand.u32 2147483647, %v903
      %v915 = vsub.f32 0.0, %v914
      %v916 = vmul.f32 %v915, 1.442695
      %v917 = vpow.pop %v916
      %v918 = vadd.f32 %v917, 1.0
      %v919 = vlog2.pop %v918
      %v920 = vmul.f32 %v919, 0.6931472
      %v921 = vmul.f32 -0.5, %v917
      %v922 = vadd.f32 %v921, 1.0
      %v923 = vmul.f32 %v922, %v917
      %v924 = vand.u32 2147483647, %v917
      %vm925 = vcmp.lt.f32.partialorder %v924, 0.0004427343
      %v926 = vsel %vm925, %v923, %v920
      %v927 = vadd.f32 %v913, %v926
      %v928 = vadd.f32 %v883, %v927
      %v929 = vmax.f32 %v905, 0.0
      %v931 = vrot.slane %v901, 1
      %932 = vrot.lane.b32.xlu0 %v931, 127
      %v933 = vpop.permute.xlu0 %932
      %v935 = vmul.f32 %v905, %v933
      %v936 = vsub.f32 %v929, %v935
      %v937 = vand.u32 2147483647, %v905
      %v938 = vsub.f32 0.0, %v937
      %v939 = vmul.f32 %v938, 1.442695
      %v940 = vpow.pop %v939
      %v941 = vadd.f32 %v940, 1.0
      %v942 = vlog2.pop %v941
      %v943 = vmul.f32 %v942, 0.6931472
      %v944 = vmul.f32 -0.5, %v940
      %v945 = vadd.f32 %v944, 1.0
      %v946 = vmul.f32 %v945, %v940
      %v947 = vand.u32 2147483647, %v940
      %vm948 = vcmp.lt.f32.partialorder %v947, 0.0004427343
      %v949 = vsel %vm948, %v946, %v943
      %v950 = vadd.f32 %v936, %v949
      %v951 = vadd.f32 %v928, %v950
      %v952 = vmul.f32 %v951, %v338
      %vm953 = vcmask 9216
      %v954 = vsel %vm953, %v952, 0.0
      %955 = vadd.xlane.f32.xlu0 %v954
      %v956 = vpop.xlane.xlu0 %955
      %v957 = vrot.slane %v956, 4
      %v958 = vadd.f32 %v956, %v957
      %v959 = vrot.slane %v958, 2
      %v960 = vadd.f32 %v958, %v959
      %v961 = vrot.slane %v960, 1
      %v962 = vadd.f32 %v960, %v961
      %s963 = vtos %v962
      %v964 = vsel %vm953, %v338, 0.0
      %965 = vadd.xlane.f32.xlu0 %v964
      %v966 = vpop.xlane.xlu0 %965
      %v967 = vrot.slane %v966, 4
      %v968 = vadd.f32 %v966, %v967
      %v969 = vrot.slane %v968, 2
      %v970 = vadd.f32 %v968, %v969
      %v971 = vrot.slane %v970, 1
      %v972 = vadd.f32 %v970, %v971
      %s973 = vtos %v972
      %s974 = smul.f32 %s973, 9.0
      %v975 = vlaneseq
      %v976 = vshrl.u32 %v975, 7
      %vm977 = vcmp.eq.s32.totalorder %v976, 0
      %vm978 = vcmp.eq.s32.totalorder %v976, 1
      %v979 = vstv %s974
      %v980 = vsel %vm978, %v979, 0.0
      %v981 = vstv %s963
      %v982 = vsel %vm977, %v981, %v980
      %983 = vst [vmem:[%s337] sm:$0xff] %v982
      %p984 = scmp.lt.s32.totalorder %s19, 1
      %s985 = scalar_select %p984, %s19, 1
      %p986 = scmp.lt.s32.totalorder %s20, 2
      %s987 = scalar_select %p986, %s20, 2
      %s988 = smul.addr %s985, 3
      %s989 = sadd.s32 %s987, %s988
      %s990 = smul.addr %s989, 8
      %s991 = scalar_lea.vmem %s4, %s990
      // Predicated region
      $region37: #{full_model_vmd_forward.7} parent=35 // pred_check
        %p992 = pneg %p163
      $region38: #{full_model_vmd_forward.7} parent=35 // pred_check_branch
        %994 = sbr.rel (%p992) target = $region40
      $region39: #{full_model_vmd_forward.7} parent=35 // pred_region
        _
      $region40: #{full_model_vmd_forward.7} parent=35 // pred_fallthru
        _
    $region36: #{full_model_vmd_forward.7} parent=5 // pred_fallthru
      _
    %p995 = scmp.le.s32.totalorder 2, %s10
    // Predicated region
    $region41: #{full_model_vmd_forward.7} parent=5 // pred_check
      %p996 = pneg %p995
    $region42: #{full_model_vmd_forward.7} parent=5 // pred_check_branch
      %998 = sbr.rel (%p996) target = $region44
    $region43: #{full_model_vmd_forward.7} parent=5 // pred_region
      %s999 = ssub.s32 %s10, 2
      // Predicated region
      $region45: #{full_model_vmd_forward.7} parent=43 // pred_check
        %p1000 = pneg %p169
      $region46: #{full_model_vmd_forward.7} parent=43 // pred_check_branch
        %1002 = sbr.rel (%p1000) target = $region48
      $region47: #{full_model_vmd_forward.7} parent=43 // pred_region
        %p1003 = scmp.lt.s32.totalorder %s21, 1
        %s1004 = scalar_select %p1003, %s21, 1
        %p1005 = scmp.lt.s32.totalorder %s22, 2
        %s1006 = scalar_select %p1005, %s22, 2
        %s1007 = smul.addr %s1004, 3
        %s1008 = sadd.s32 %s1006, %s1007
        %s1009 = smul.addr %s1008, 8
        %s1010 = scalar_lea.vmem %s4, %s1009
      $region48: #{full_model_vmd_forward.7} parent=43 // pred_fallthru
        _
    $region44: #{full_model_vmd_forward.7} parent=5 // pred_fallthru
      _
  $region6: #{full_model_vmd_forward.7} parent=0 // loop_footer
    %s14 = sadd.s32 1, %s10
  $region7: #{full_model_vmd_forward.7} parent=0 // loop_footer_branch
    %9 = sbr.rel target = $region3
  $region8: #{full_model_vmd_forward.7} parent=0 // loop_exit
    _

</llo_original>
